<compile_context>
chip_gen: v5e
topology: v5e:2x2
jax: 0.10.0
libtpu: 0.0.40
codegen_flags: <defaults>
</compile_context>

<pallas_src>
import functools

import jax
import jax.numpy as jnp
from jax.experimental import pallas as pl
from jax.experimental.pallas import tpu as pltpu


_VMEM_LIMIT = 48 * 1024 * 1024           # explicit budget, fits v7x's 64 MiB VMEM
_F32_MAX = float(jnp.finfo(jnp.float32).max)


# --------------------------------- helpers ----------------------------------

def _round_up(x, m):
    return ((x + m - 1) // m) * m


def _pad_to(a, shape):
    pads = [(0, s - d) for d, s in zip(a.shape, shape)]
    if all(p == (0, 0) for p in pads):
        return a
    return jnp.pad(a, pads)


def _gelu_tanh(x):
    c = 0.7978845608028654  # sqrt(2/pi)
    return 0.5 * x * (1.0 + jnp.tanh(c * (x + 0.044715 * x * x * x)))


def _sinusoidal_emb(dim, length):
    inv_freq = 1.0 / (10000.0 ** (jnp.arange(0, dim, 2, dtype=jnp.float32) / dim))
    t = jnp.arange(length, dtype=jnp.float32)
    sinusoid = t[:, None] * inv_freq[None, :]
    return jnp.concatenate([jnp.sin(sinusoid), jnp.cos(sinusoid)], axis=-1)


def _rotate_every_two(t):
    t1 = t[..., 0::2]
    t2 = t[..., 1::2]
    return jnp.stack([-t2, t1], axis=-1).reshape(t.shape)


def _apply_rotary_with_cls(q, k, rel):
    """q, k: (b, n, h, d); rel: (n-1, d). Rotary applied to all tokens but cls."""
    d = rel.shape[-1]
    sin = jnp.repeat(rel[:, : d // 2], 2, axis=-1)[None, :, None, :]
    cos = jnp.repeat(rel[:, d // 2:], 2, axis=-1)[None, :, None, :]

    def rot(t):
        t_cls, t_rest = t[:, :1], t[:, 1:]
        r = t_rest * cos + _rotate_every_two(t_rest) * sin
        return jnp.concatenate([t_cls, r], axis=1)

    return rot(q), rot(k)


# ------------------------------ Pallas kernels -------------------------------

def _matmul_kernel(x_ref, w_ref, o_ref, acc_ref):
    @pl.when(pl.program_id(2) == 0)
    def _():
        acc_ref[...] = jnp.zeros_like(acc_ref)

    acc_ref[...] += jnp.dot(x_ref[...], w_ref[...],
                            preferred_element_type=jnp.float32)

    @pl.when(pl.program_id(2) == pl.num_programs(2) - 1)
    def _():
        o_ref[...] = acc_ref[...].astype(o_ref.dtype)


def _matmul_bias_kernel(x_ref, w_ref, b_ref, o_ref, acc_ref):
    @pl.when(pl.program_id(2) == 0)
    def _():
        acc_ref[...] = jnp.zeros_like(acc_ref)

    acc_ref[...] += jnp.dot(x_ref[...], w_ref[...],
                            preferred_element_type=jnp.float32)

    @pl.when(pl.program_id(2) == pl.num_programs(2) - 1)
    def _():
        o_ref[...] = (acc_ref[...] + b_ref[...].astype(jnp.float32)).astype(o_ref.dtype)


def _matmul_bias_res_kernel(x_ref, w_ref, b_ref, r_ref, o_ref, acc_ref):
    """out = x @ W + b + residual   (residual add fused into the epilogue)."""
    @pl.when(pl.program_id(2) == 0)
    def _():
        acc_ref[...] = jnp.zeros_like(acc_ref)

    acc_ref[...] += jnp.dot(x_ref[...], w_ref[...],
                            preferred_element_type=jnp.float32)

    @pl.when(pl.program_id(2) == pl.num_programs(2) - 1)
    def _():
        o_ref[...] = (acc_ref[...]
                      + b_ref[...].astype(jnp.float32)
                      + r_ref[...].astype(jnp.float32)).astype(o_ref.dtype)


def _linear_geglu_kernel(x_ref, wx_ref, wg_ref, bx_ref, bg_ref, o_ref,
                         accx_ref, accg_ref):
    """Fused Linear(dim, 2F) + GEGLU: out = (x@Wx+bx) * gelu(x@Wg+bg)."""
    @pl.when(pl.program_id(2) == 0)
    def _():
        accx_ref[...] = jnp.zeros_like(accx_ref)
        accg_ref[...] = jnp.zeros_like(accg_ref)

    x = x_ref[...]
    accx_ref[...] += jnp.dot(x, wx_ref[...], preferred_element_type=jnp.float32)
    accg_ref[...] += jnp.dot(x, wg_ref[...], preferred_element_type=jnp.float32)

    @pl.when(pl.program_id(2) == pl.num_programs(2) - 1)
    def _():
        xv = accx_ref[...] + bx_ref[...].astype(jnp.float32)
        gv = accg_ref[...] + bg_ref[...].astype(jnp.float32)
        o_ref[...] = (xv * _gelu_tanh(gv)).astype(o_ref.dtype)


def _layernorm_kernel(x_ref, g_ref, b_ref, o_ref, *, eps):
    x = x_ref[...].astype(jnp.float32)
    mu = jnp.mean(x, axis=-1, keepdims=True)
    xc = x - mu
    var = jnp.mean(xc * xc, axis=-1, keepdims=True)
    y = xc * jax.lax.rsqrt(var + eps)
    y = y * g_ref[...].astype(jnp.float32) + b_ref[...].astype(jnp.float32)
    o_ref[...] = y.astype(o_ref.dtype)


def _flash_attention_kernel(mask_ref, q_ref, k_ref, v_ref, o_ref, *rest,
                            scale, return_attn):
    if return_attn:
        attn_ref, m_sc, l_sc, acc_sc = rest
    else:
        m_sc, l_sc, acc_sc = rest

    ki = pl.program_id(2)

    @pl.when(ki == 0)
    def _():
        m_sc[...] = jnp.full(m_sc.shape, -jnp.inf, jnp.float32)
        l_sc[...] = jnp.zeros_like(l_sc)
        acc_sc[...] = jnp.zeros_like(acc_sc)

    # All heads of one batch per grid step; fold scale into q (O(tq*d) per block).
    q = q_ref[0] * scale                       # (H, tq, d), input dtype (bf16-ready)
    k = k_ref[0]                               # (H, tkv, d)
    v = v_ref[0]                               # (H, tkv, d)

    # scores: contract last dims, batch over heads -> no k.T / XLU transpose
    s = jnp.einsum("hqd,hkd->hqk", q, k, preferred_element_type=jnp.float32)

    m = mask_ref[0]                            # (1, tkv) fp32: 1 keep, 0 mask
    s = jnp.where(m[None] > 0, s, -_F32_MAX)   # torch masked_fill with -finfo.max

    m_prev = m_sc[...]
    m_new = jnp.maximum(m_prev, s.max(axis=-1, keepdims=True))
    alpha = jnp.exp(m_prev - m_new)
    p = jnp.exp(s - m_new)
    l_sc[...] = alpha * l_sc[...] + p.sum(axis=-1, keepdims=True)
    acc_sc[...] = alpha * acc_sc[...] + jnp.einsum(
        "hqk,hkd->hqd", p.astype(v.dtype), v, preferred_element_type=jnp.float32)
    m_sc[...] = m_new

    @pl.when(ki == pl.num_programs(2) - 1)
    def _():
        inv_l = pl.reciprocal(l_sc[...], approx=True)
        o_ref[0] = (acc_sc[...] * inv_l).astype(o_ref.dtype)
        if return_attn:
            # Only used with a single KV block (wrapper enforces it), so p is
            # the full score row and p * inv_l is the normalized softmax.
            attn_ref[0] = (p * inv_l).astype(attn_ref.dtype)


# -------------------------------- wrappers -----------------------------------

def pallas_linear(x2d, w, bias=None, residual=None, *, tm=256, tn=256, tk=512):
    """x2d: (M, K), w: (K, N), bias: (1, N) or None, residual: (M, N) or None.

    Tiled, pipelined matmul; bias and residual adds fused into the epilogue.
    """
    M, K = x2d.shape
    N = w.shape[1]
    tm = min(tm, _round_up(M, 8))
    tn = min(tn, _round_up(N, 128))
    tk = min(tk, _round_up(K, 128))
    Mp, Kp, Np = _round_up(M, tm), _round_up(K, tk), _round_up(N, tn)

    xp = _pad_to(x2d, (Mp, Kp))
    wp = _pad_to(w, (Kp, Np))
    grid = (Mp // tm, Np // tn, Kp // tk)

    x_spec = pl.BlockSpec((tm, tk), lambda i, j, kk: (i, kk))
    w_spec = pl.BlockSpec((tk, tn), lambda i, j, kk: (kk, j))
    b_spec = pl.BlockSpec((1, tn), lambda i, j, kk: (0, j))
    r_spec = pl.BlockSpec((tm, tn), lambda i, j, kk: (i, j))
    o_spec = pl.BlockSpec((tm, tn), lambda i, j, kk: (i, j))
    cparams = pltpu.CompilerParams(
        dimension_semantics=("parallel", "parallel", "arbitrary"),
        vmem_limit_bytes=_VMEM_LIMIT)
    scratch = [pltpu.VMEM((tm, tn), jnp.float32)]

    if bias is None:
        out = pl.pallas_call(
            _matmul_kernel,
            out_shape=jax.ShapeDtypeStruct((Mp, Np), x2d.dtype),
            grid_spec=pltpu.PrefetchScalarGridSpec(
                num_scalar_prefetch=0, grid=grid,
                in_specs=[x_spec, w_spec], out_specs=o_spec,
                scratch_shapes=scratch),
            compiler_params=cparams,
        )(xp, wp)
    elif residual is None:
        bp = _pad_to(bias, (1, Np))
        out = pl.pallas_call(
            _matmul_bias_kernel,
            out_shape=jax.ShapeDtypeStruct((Mp, Np), x2d.dtype),
            grid_spec=pltpu.PrefetchScalarGridSpec(
                num_scalar_prefetch=0, grid=grid,
                in_specs=[x_spec, w_spec, b_spec], out_specs=o_spec,
                scratch_shapes=scratch),
            compiler_params=cparams,
        )(xp, wp, bp)
    else:
        bp = _pad_to(bias, (1, Np))
        rp = _pad_to(residual, (Mp, Np))
        out = pl.pallas_call(
            _matmul_bias_res_kernel,
            out_shape=jax.ShapeDtypeStruct((Mp, Np), x2d.dtype),
            grid_spec=pltpu.PrefetchScalarGridSpec(
                num_scalar_prefetch=0, grid=grid,
                in_specs=[x_spec, w_spec, b_spec, r_spec], out_specs=o_spec,
                scratch_shapes=scratch),
            compiler_params=cparams,
        )(xp, wp, bp, rp)
    return out[:M, :N]


def pallas_linear_geglu(x2d, wx, wg, bx, bg, *, tm=256, tn=256, tk=512):
    """Fused FeedForward first Linear + GEGLU.  x2d: (M, K) -> (M, F)."""
    M, K = x2d.shape
    N = wx.shape[1]
    tm = min(tm, _round_up(M, 8))
    tn = min(tn, _round_up(N, 128))
    tk = min(tk, _round_up(K, 128))
    Mp, Kp, Np = _round_up(M, tm), _round_up(K, tk), _round_up(N, tn)

    xp = _pad_to(x2d, (Mp, Kp))
    wxp, wgp = _pad_to(wx, (Kp, Np)), _pad_to(wg, (Kp, Np))
    bxp, bgp = _pad_to(bx, (1, Np)), _pad_to(bg, (1, Np))
    grid = (Mp // tm, Np // tn, Kp // tk)

    out = pl.pallas_call(
        _linear_geglu_kernel,
        out_shape=jax.ShapeDtypeStruct((Mp, Np), x2d.dtype),
        grid_spec=pltpu.PrefetchScalarGridSpec(
            num_scalar_prefetch=0, grid=grid,
            in_specs=[
                pl.BlockSpec((tm, tk), lambda i, j, kk: (i, kk)),
                pl.BlockSpec((tk, tn), lambda i, j, kk: (kk, j)),
                pl.BlockSpec((tk, tn), lambda i, j, kk: (kk, j)),
                pl.BlockSpec((1, tn), lambda i, j, kk: (0, j)),
                pl.BlockSpec((1, tn), lambda i, j, kk: (0, j)),
            ],
            out_specs=pl.BlockSpec((tm, tn), lambda i, j, kk: (i, j)),
            scratch_shapes=[pltpu.VMEM((tm, tn), jnp.float32),
                            pltpu.VMEM((tm, tn), jnp.float32)]),
        compiler_params=pltpu.CompilerParams(
            dimension_semantics=("parallel", "parallel", "arbitrary"),
            vmem_limit_bytes=_VMEM_LIMIT),
    )(xp, wxp, wgp, bxp, bgp)
    return out[:M, :N]


def pallas_layernorm(x2d, gamma, beta, *, eps=1e-5, tm=256):
    """Row-wise LayerNorm over the last (full) dim.  gamma/beta: (1, D)."""
    M, D = x2d.shape
    tm = min(tm, _round_up(M, 8))
    Mp = _round_up(M, tm)
    xp = _pad_to(x2d, (Mp, D))
    out = pl.pallas_call(
        functools.partial(_layernorm_kernel, eps=eps),
        out_shape=jax.ShapeDtypeStruct((Mp, D), x2d.dtype),
        grid_spec=pltpu.PrefetchScalarGridSpec(
            num_scalar_prefetch=0, grid=(Mp // tm,),
            in_specs=[pl.BlockSpec((tm, D), lambda i: (i, 0)),
                      pl.BlockSpec((1, D), lambda i: (0, 0)),
                      pl.BlockSpec((1, D), lambda i: (0, 0))],
            out_specs=pl.BlockSpec((tm, D), lambda i: (i, 0))),
        compiler_params=pltpu.CompilerParams(
            dimension_semantics=("parallel",),
            vmem_limit_bytes=_VMEM_LIMIT),
    )(xp, gamma, beta)
    return out[:M]


def pallas_attention(q, k, v, mask, scale, *, return_attn=False, tq=256, tkv=512):
    """q,k,v: (b, h, n, d); mask: (b, n) bool over keys.  Flash attention.

    Returns (out (b,h,n,d), attn (b,h,n,n) or None).  The (n,n) probability
    tensor is only materialized when return_attn=True (single KV block).
    """
    b, h, n, d = q.shape
    tq = min(tq, _round_up(n, 8))
    nq_pad = _round_up(n, tq)
    if return_attn:
        tkv = _round_up(n, 128)        # one KV block -> normalized probs emitted
    else:
        tkv = min(tkv, _round_up(n, 128))
    nkv_pad = _round_up(n, tkv)

    qp = _pad_to(q, (b, h, nq_pad, d))
    kp = _pad_to(k, (b, h, nkv_pad, d))
    vp = _pad_to(v, (b, h, nkv_pad, d))
    maskf = _pad_to(mask.astype(jnp.float32), (b, nkv_pad)).reshape(b, 1, nkv_pad)

    grid = (b, nq_pad // tq, nkv_pad // tkv)
    kernel = functools.partial(_flash_attention_kernel, scale=scale,
                               return_attn=return_attn)

    in_specs = [
        pl.BlockSpec((1, 1, tkv), lambda bi, qi, ki: (bi, 0, ki)),        # key mask
        pl.BlockSpec((1, h, tq, d), lambda bi, qi, ki: (bi, 0, qi, 0)),   # q
        pl.BlockSpec((1, h, tkv, d), lambda bi, qi, ki: (bi, 0, ki, 0)),  # k
        pl.BlockSpec((1, h, tkv, d), lambda bi, qi, ki: (bi, 0, ki, 0)),  # v
    ]
    o_spec = pl.BlockSpec((1, h, tq, d), lambda bi, qi, ki: (bi, 0, qi, 0))
    scratch = [pltpu.VMEM((h, tq, 1), jnp.float32),
               pltpu.VMEM((h, tq, 1), jnp.float32),
               pltpu.VMEM((h, tq, d), jnp.float32)]
    cparams = pltpu.CompilerParams(
        dimension_semantics=("parallel", "parallel", "arbitrary"),
        vmem_limit_bytes=_VMEM_LIMIT)

    if return_attn:
        out, attn = pl.pallas_call(
            kernel,
            out_shape=(jax.ShapeDtypeStruct((b, h, nq_pad, d), q.dtype),
                       jax.ShapeDtypeStruct((b, h, nq_pad, nkv_pad), jnp.float32)),
            grid_spec=pltpu.PrefetchScalarGridSpec(
                num_scalar_prefetch=0, grid=grid,
                in_specs=in_specs,
                out_specs=(o_spec,
                           pl.BlockSpec((1, h, tq, tkv),
                                        lambda bi, qi, ki: (bi, 0, qi, ki))),
                scratch_shapes=scratch),
            compiler_params=cparams,
        )(maskf, qp, kp, vp)
        return out[:, :, :n, :], attn[:, :, :n, :n]

    out = pl.pallas_call(
        kernel,
        out_shape=jax.ShapeDtypeStruct((b, h, nq_pad, d), q.dtype),
        grid_spec=pltpu.PrefetchScalarGridSpec(
            num_scalar_prefetch=0, grid=grid,
            in_specs=in_specs, out_specs=o_spec, scratch_shapes=scratch),
        compiler_params=cparams,
    )(maskf, qp, kp, vp)
    return out[:, :, :n, :], None


# ---------------------------- Transformer forward ----------------------------

def transformer_forward(x, attention_mask, params, *, heads, dim_head):
    b, n_in, dim = x.shape
    inner = heads * dim_head
    scale = dim_head ** (-0.5)
    n = n_in + 1

    cls = jnp.broadcast_to(params["cls_token"].astype(x.dtype)[None, None, :],
                           (b, 1, dim))
    h_x = jnp.concatenate([cls, x], axis=1)                       # prepend cls token
    mask = jnp.concatenate([jnp.ones((b, 1), dtype=jnp.bool_),
                            attention_mask.astype(jnp.bool_)], axis=1)
    h_x = h_x + _sinusoidal_emb(dim, n).astype(x.dtype)[None]     # abs pos emb
    rel = _sinusoidal_emb(dim_head, n_in)                         # rotary rel pos emb

    attn_weights = None
    depth = len(params["layers"])
    for li, p in enumerate(params["layers"]):
        # ---------------- PreNorm(Attention) + residual ----------------
        res = h_x.reshape(b * n, dim)
        xn = pallas_layernorm(res, p["ln1_g"], p["ln1_b"])
        qkv = pallas_linear(xn, p["w_qkv"])                       # (b*n, 3*inner)
        qkv = qkv.reshape(b, n, 3, heads, dim_head)
        q, k, v = qkv[:, :, 0], qkv[:, :, 1], qkv[:, :, 2]        # (b, n, h, d)
        q, k = _apply_rotary_with_cls(q, k, rel)
        q, k, v = (jnp.transpose(t, (0, 2, 1, 3)) for t in (q, k, v))  # (b, h, n, d)
        out, attn = pallas_attention(q, k, v, mask, scale,
                                     return_attn=(li == depth - 1))
        if attn is not None:
            attn_weights = attn
        out = jnp.transpose(out, (0, 2, 1, 3)).reshape(b * n, inner)
        # to_out + Dropout(0) + residual add, fused into one matmul kernel
        out = pallas_linear(out, p["w_out"], p["b_out"], residual=res)
        h_x = out.reshape(b, n, dim)

        # ------------- PreNorm(FeedForward) + residual (GEGLU fused) -------------
        res = h_x.reshape(b * n, dim)
        xn = pallas_layernorm(res, p["ln2_g"], p["ln2_b"])
        gl = pallas_linear_geglu(xn, p["w_ff1_x"], p["w_ff1_g"],
                                 p["b_ff1_x"], p["b_ff1_g"])
        ff = pallas_linear(gl, p["w_ff2"], p["b_ff2"], residual=res)
        h_x = ff.reshape(b, n, dim)

    cls_out = pallas_layernorm(h_x[:, 0], params["final_ln_g"], params["final_ln_b"])
    return cls_out, attn_weights


# ----------------------------- pure-JAX reference ----------------------------

def reference_transformer(x, attention_mask, params, *, heads, dim_head):
    b, n_in, dim = x.shape
    inner = heads * dim_head
    d = dim_head
    scale = dim_head ** (-0.5)
    n = n_in + 1

    cls = jnp.broadcast_to(params["cls_token"][None, None, :], (b, 1, dim))
    h_x = jnp.concatenate([cls, x], axis=1)
    mask = jnp.concatenate([jnp.ones((b, 1), dtype=jnp.bool_),
                            attention_mask.astype(jnp.bool_)], axis=1)
    h_x = h_x + _sinusoidal_emb(dim, n)[None]
    rel = _sinusoidal_emb(dim_head, n_in)

    def layernorm(t, g, bb):
        mu = jnp.mean(t, axis=-1, keepdims=True)
        var = jnp.mean((t - mu) ** 2, axis=-1, keepdims=True)
        return (t - mu) / jnp.sqrt(var + 1e-5) * g + bb

    attn_w = None
    depth = len(params["layers"])
    for li, p in enumerate(params["layers"]):
        xn = layernorm(h_x, p["ln1_g"], p["ln1_b"])
        qkv = (xn @ p["w_qkv"]).reshape(b, n, 3, heads, d)
        q, k, v = qkv[:, :, 0], qkv[:, :, 1], qkv[:, :, 2]
        q, k = _apply_rotary_with_cls(q, k, rel)
        q, k, v = (jnp.transpose(t, (0, 2, 1, 3)) for t in (q, k, v))
        dots = jnp.einsum("bhid,bhjd->bhij", q, k) * scale
        dots = jnp.where(mask[:, None, None, :], dots, -_F32_MAX)
        attn = jax.nn.softmax(dots, axis=-1)
        out = jnp.einsum("bhij,bhjd->bhid", attn, v)
        out = jnp.transpose(out, (0, 2, 1, 3)).reshape(b, n, inner)
        h_x = out @ p["w_out"] + p["b_out"] + h_x

        xn = layernorm(h_x, p["ln2_g"], p["ln2_b"])
        hx = xn @ p["w_ff1_x"] + p["b_ff1_x"]
        hg = xn @ p["w_ff1_g"] + p["b_ff1_g"]
        h_x = (hx * _gelu_tanh(hg)) @ p["w_ff2"] + p["b_ff2"] + h_x
        if li == depth - 1:
            attn_w = attn

    return layernorm(h_x[:, 0], params["final_ln_g"], params["final_ln_b"]), attn_w


# ---------------------------------- params -----------------------------------

def init_params(key, *, dim, heads, dim_head, depth, ff_mult):
    inner = heads * dim_head
    f = dim * ff_mult
    keys = iter(jax.random.split(key, 64))

    def nrm(shape, s=0.05):
        return jax.random.normal(next(keys), shape, jnp.float32) * s

    params = {
        "cls_token": nrm((dim,), 1.0),
        "final_ln_g": 1.0 + nrm((1, dim), 0.1),
        "final_ln_b": nrm((1, dim), 0.02),
        "layers": [],
    }
    for _ in range(depth):
        params["layers"].append({
            "ln1_g": 1.0 + nrm((1, dim), 0.1),
            "ln1_b": nrm((1, dim), 0.02),
            "w_qkv": nrm((dim, 3 * inner), 0.15),    # to_qkv (no bias)
            "w_out": nrm((inner, dim)),
            "b_out": nrm((1, dim), 0.02),
            "ln2_g": 1.0 + nrm((1, dim), 0.1),
            "ln2_b": nrm((1, dim), 0.02),
            "w_ff1_x": nrm((dim, f)),                # first half of Linear(dim, 2f)
            "w_ff1_g": nrm((dim, f)),                # gate half
            "b_ff1_x": nrm((1, f), 0.02),
            "b_ff1_g": nrm((1, f), 0.02),
            "w_ff2": nrm((f, dim)),
            "b_ff2": nrm((1, dim), 0.02),
        })
    return params


# ----------------------------------- main -------------------------------------

if __name__ == "__main__":
    batch, seq_len, dim = 2, 8, 32
    heads, dim_head, depth, ff_mult = 4, 8, 2, 4

    key = jax.random.PRNGKey(0)
    kx, kp = jax.random.split(key)
    x = jax.random.normal(kx, (batch, seq_len, dim), dtype=jnp.float32)
    attention_mask = jnp.ones((batch, seq_len), dtype=jnp.bool_)
    attention_mask = attention_mask.at[1, seq_len - 3:].set(False)  # mask some keys

    params = init_params(kp, dim=dim, heads=heads, dim_head=dim_head,
                         depth=depth, ff_mult=ff_mult)

    fwd = jax.jit(functools.partial(transformer_forward,
                                    heads=heads, dim_head=dim_head))
    out, attn = fwd(x, attention_mask, params)
    out = jax.block_until_ready(out)
    attn = jax.block_until_ready(attn)

    ref_out, ref_attn = reference_transformer(x, attention_mask, params,
                                              heads=heads, dim_head=dim_head)

    assert out.shape == (batch, dim)
    assert attn.shape == (batch, heads, seq_len + 1, seq_len + 1)
    assert jnp.allclose(out, ref_out, atol=5e-3, rtol=5e-3), (
        "out mismatch, max abs err %e" % float(jnp.max(jnp.abs(out - ref_out))))
    assert jnp.allclose(attn, ref_attn, atol=5e-3, rtol=5e-3), (
        "attn mismatch, max abs err %e" % float(jnp.max(jnp.abs(attn - ref_attn))))

    print("KERNEL_OK")
</pallas_src>

<mosaic_0001>
module attributes {stable_mosaic.version = 11 : i64} {
  func.func @_layernorm_kernel(%arg0: i32, %arg1: memref<24x32xf32, #tpu.memory_space<vmem>>, %arg2: memref<1x32xf32, #tpu.memory_space<vmem>>, %arg3: memref<1x32xf32, #tpu.memory_space<vmem>>, %arg4: memref<24x32xf32, #tpu.memory_space<vmem>>) attributes {dimension_semantics = [#tpu.dimension_semantics<parallel>], iteration_bounds = array<i64: 1>, scalar_prefetch = 0 : i64, scratch_operands = 0 : i64, tpu.core_type = #tpu.core_type<tc>, window_params = [{transform_indices = @transform_0, window_bounds = array<i64: 24, 32>}, {pipeline_mode = #tpu.pipeline_mode<synchronous>, transform_indices = @transform_1, window_bounds = array<i64: 1, 32>}, {pipeline_mode = #tpu.pipeline_mode<synchronous>, transform_indices = @transform_2, window_bounds = array<i64: 1, 32>}, {transform_indices = @transform_3, window_bounds = array<i64: 24, 32>}]} {
    %c0 = arith.constant 0 : index
    %c0_0 = arith.constant 0 : index
    %0 = vector.load %arg1[%c0, %c0_0] : memref<24x32xf32, #tpu.memory_space<vmem>>, vector<24x32xf32>
    %cst = arith.constant dense<0.000000e+00> : vector<24xf32>
    %1 = vector.multi_reduction <add>, %0, %cst [1] : vector<24x32xf32> to vector<24xf32>
    %2 = vector.shape_cast %1 : vector<24xf32> to vector<24x1xf32>
    %cst_1 = arith.constant 3.200000e+01 : f32
    %3 = vector.broadcast %cst_1 : f32 to vector<24x1xf32>
    %4 = arith.divf %2, %3 : vector<24x1xf32>
    %5 = vector.broadcast %4 : vector<24x1xf32> to vector<24x32xf32>
    %6 = arith.subf %0, %5 : vector<24x32xf32>
    %7 = arith.mulf %6, %6 : vector<24x32xf32>
    %cst_2 = arith.constant dense<0.000000e+00> : vector<24xf32>
    %8 = vector.multi_reduction <add>, %7, %cst_2 [1] : vector<24x32xf32> to vector<24xf32>
    %9 = vector.shape_cast %8 : vector<24xf32> to vector<24x1xf32>
    %cst_3 = arith.constant 3.200000e+01 : f32
    %10 = vector.broadcast %cst_3 : f32 to vector<24x1xf32>
    %11 = arith.divf %9, %10 : vector<24x1xf32>
    %cst_4 = arith.constant 9.99999974E-6 : f32
    %12 = vector.broadcast %cst_4 : f32 to vector<24x1xf32>
    %13 = arith.addf %11, %12 : vector<24x1xf32>
    %14 = math.rsqrt %13 : vector<24x1xf32>
    %15 = vector.broadcast %14 : vector<24x1xf32> to vector<24x32xf32>
    %16 = arith.mulf %6, %15 : vector<24x32xf32>
    %c0_5 = arith.constant 0 : index
    %c0_6 = arith.constant 0 : index
    %17 = vector.load %arg2[%c0_5, %c0_6] : memref<1x32xf32, #tpu.memory_space<vmem>>, vector<1x32xf32>
    %18 = vector.broadcast %17 : vector<1x32xf32> to vector<24x32xf32>
    %19 = arith.mulf %16, %18 : vector<24x32xf32>
    %c0_7 = arith.constant 0 : index
    %c0_8 = arith.constant 0 : index
    %20 = vector.load %arg3[%c0_7, %c0_8] : memref<1x32xf32, #tpu.memory_space<vmem>>, vector<1x32xf32>
    %21 = vector.broadcast %20 : vector<1x32xf32> to vector<24x32xf32>
    %22 = arith.addf %19, %21 : vector<24x32xf32>
    %c0_9 = arith.constant 0 : index
    %c0_10 = arith.constant 0 : index
    %23 = vector.load %arg4[%c0_9, %c0_10] : memref<24x32xf32, #tpu.memory_space<vmem>>, vector<24x32xf32>
    tpu.vector_store %arg4[%c0_9, %c0_10], %22 {strides = array<i32>} : memref<24x32xf32, #tpu.memory_space<vmem>>, vector<24x32xf32>,
    return
  }
  func.func @transform_0(%arg0: i32) -> (i32, i32) {
    %c0_i32 = arith.constant 0 : i32
    %c0_i32_0 = arith.constant 0 : i32
    return %arg0, %c0_i32 : i32, i32
  }
  func.func @transform_1(%arg0: i32) -> (i32, i32) {
    %c0_i32 = arith.constant 0 : i32
    %c0_i32_0 = arith.constant 0 : i32
    %c0_i32_1 = arith.constant 0 : i32
    return %c0_i32, %c0_i32_0 : i32, i32
  }
  func.func @transform_2(%arg0: i32) -> (i32, i32) {
    %c0_i32 = arith.constant 0 : i32
    %c0_i32_0 = arith.constant 0 : i32
    %c0_i32_1 = arith.constant 0 : i32
    return %c0_i32, %c0_i32_0 : i32, i32
  }
  func.func @transform_3(%arg0: i32) -> (i32, i32) {
    %c0_i32 = arith.constant 0 : i32
    %c0_i32_0 = arith.constant 0 : i32
    return %arg0, %c0_i32 : i32, i32
  }
}

module attributes {stable_mosaic.version = 11 : i64} {
  func.func @_matmul_kernel(%arg0: i32, %arg1: i32, %arg2: i32, %arg3: memref<24x128xf32, #tpu.memory_space<vmem>>, %arg4: memref<128x128xf32, #tpu.memory_space<vmem>>, %arg5: memref<24x128xf32, #tpu.memory_space<vmem>>, %arg6: memref<24x128xf32, #tpu.memory_space<vmem>>) attributes {dimension_semantics = [#tpu.dimension_semantics<parallel>, #tpu.dimension_semantics<parallel>, #tpu.dimension_semantics<arbitrary>], iteration_bounds = array<i64: 1, 1, 1>, scalar_prefetch = 0 : i64, scratch_operands = 1 : i64, tpu.core_type = #tpu.core_type<tc>, window_params = [{transform_indices = @transform_0, window_bounds = array<i64: 24, 128>}, {transform_indices = @transform_1, window_bounds = array<i64: 128, 128>}, {transform_indices = @transform_2, window_bounds = array<i64: 24, 128>}]} {
    %c0_i32 = arith.constant 0 : i32
    %0 = arith.cmpi eq, %arg2, %c0_i32 : i32
    %1 = arith.extui %0 : i1 to i32
    %c0_i32_0 = arith.constant 0 : i32
    %2 = arith.cmpi ne, %1, %c0_i32_0 : i32
    scf.if %2 {
      %cst_10 = arith.constant 0.000000e+00 : f32
      %12 = vector.broadcast %cst_10 : f32 to vector<24x128xf32>
      %c0_11 = arith.constant 0 : index
      %c0_12 = arith.constant 0 : index
      %13 = vector.load %arg6[%c0_11, %c0_12] : memref<24x128xf32, #tpu.memory_space<vmem>>, vector<24x128xf32>
      tpu.vector_store %arg6[%c0_11, %c0_12], %12 {strides = array<i32>} : memref<24x128xf32, #tpu.memory_space<vmem>>, vector<24x128xf32>,
    } else {
    }
    %c0 = arith.constant 0 : index
    %c0_1 = arith.constant 0 : index
    %3 = vector.load %arg6[%c0, %c0_1] : memref<24x128xf32, #tpu.memory_space<vmem>>, vector<24x128xf32>
    %c0_2 = arith.constant 0 : index
    %c0_3 = arith.constant 0 : index
    %4 = vector.load %arg3[%c0_2, %c0_3] : memref<24x128xf32, #tpu.memory_space<vmem>>, vector<24x128xf32>
    %c0_4 = arith.constant 0 : index
    %c0_5 = arith.constant 0 : index
    %5 = vector.load %arg4[%c0_4, %c0_5] : memref<128x128xf32, #tpu.memory_space<vmem>>, vector<128x128xf32>
    %cst = arith.constant dense<0.000000e+00> : vector<24x128xf32>
    %6 = tpu.matmul %4, %5, %cst {dimension_numbers = #tpu.dot_dimension_numbers<[1], [0], [0], [1], [0, 0, 1, 1], [], []>} : vector<24x128xf32>, vector<128x128xf32>, vector<24x128xf32> -> vector<24x128xf32>
    %7 = arith.addf %3, %6 : vector<24x128xf32>
    %c0_6 = arith.constant 0 : index
    %c0_7 = arith.constant 0 : index
    %8 = vector.load %arg6[%c0_6, %c0_7] : memref<24x128xf32, #tpu.memory_space<vmem>>, vector<24x128xf32>
    tpu.vector_store %arg6[%c0_6, %c0_7], %7 {strides = array<i32>} : memref<24x128xf32, #tpu.memory_space<vmem>>, vector<24x128xf32>,
    %c0_i32_8 = arith.constant 0 : i32
    %9 = arith.cmpi eq, %arg2, %c0_i32_8 : i32
    %10 = arith.extui %9 : i1 to i32
    %c0_i32_9 = arith.constant 0 : i32
    %11 = arith.cmpi ne, %10, %c0_i32_9 : i32
    scf.if %11 {
      %c0_10 = arith.constant 0 : index
      %c0_11 = arith.constant 0 : index
      %12 = vector.load %arg6[%c0_10, %c0_11] : memref<24x128xf32, #tpu.memory_space<vmem>>, vector<24x128xf32>
      %c0_12 = arith.constant 0 : index
      %c0_13 = arith.constant 0 : index
      %13 = vector.load %arg5[%c0_12, %c0_13] : memref<24x128xf32, #tpu.memory_space<vmem>>, vector<24x128xf32>
      tpu.vector_store %arg5[%c0_12, %c0_13], %12 {strides = array<i32>} : memref<24x128xf32, #tpu.memory_space<vmem>>, vector<24x128xf32>,
    } else {
    }
    return
  }
  func.func @transform_0(%arg0: i32, %arg1: i32, %arg2: i32) -> (i32, i32) {
    %c0_i32 = arith.constant 0 : i32
    return %arg0, %arg2 : i32, i32
  }
  func.func @transform_1(%arg0: i32, %arg1: i32, %arg2: i32) -> (i32, i32) {
    %c0_i32 = arith.constant 0 : i32
    return %arg2, %arg1 : i32, i32
  }
  func.func @transform_2(%arg0: i32, %arg1: i32, %arg2: i32) -> (i32, i32) {
    %c0_i32 = arith.constant 0 : i32
    return %arg0, %arg1 : i32, i32
  }
}

module attributes {stable_mosaic.version = 11 : i64} {
  func.func @_flash_attention_kernel(%arg0: i32, %arg1: i32, %arg2: i32, %arg3: memref<1x1x128xf32, #tpu.memory_space<vmem>>, %arg4: memref<1x4x16x8xf32, #tpu.memory_space<vmem>>, %arg5: memref<1x4x128x8xf32, #tpu.memory_space<vmem>>, %arg6: memref<1x4x128x8xf32, #tpu.memory_space<vmem>>, %arg7: memref<1x4x16x8xf32, #tpu.memory_space<vmem>>, %arg8: memref<4x16x1xf32, #tpu.memory_space<vmem>>, %arg9: memref<4x16x1xf32, #tpu.memory_space<vmem>>, %arg10: memref<4x16x8xf32, #tpu.memory_space<vmem>>) attributes {dimension_semantics = [#tpu.dimension_semantics<parallel>, #tpu.dimension_semantics<parallel>, #tpu.dimension_semantics<arbitrary>], iteration_bounds = array<i64: 2, 1, 1>, scalar_prefetch = 0 : i64, scratch_operands = 3 : i64, tpu.core_type = #tpu.core_type<tc>, window_params = [{transform_indices = @transform_0, window_bounds = array<i64: 1, 1, 128>}, {transform_indices = @transform_1, window_bounds = array<i64: 1, 4, 16, 8>}, {transform_indices = @transform_2, window_bounds = array<i64: 1, 4, 128, 8>}, {transform_indices = @transform_3, window_bounds = array<i64: 1, 4, 128, 8>}, {transform_indices = @transform_4, window_bounds = array<i64: 1, 4, 16, 8>}]} {
    %c0_i32 = arith.constant 0 : i32
    %0 = arith.cmpi eq, %arg2, %c0_i32 : i32
    %1 = arith.extui %0 : i1 to i32
    %c0_i32_0 = arith.constant 0 : i32
    %2 = arith.cmpi ne, %1, %c0_i32_0 : i32
    scf.if %2 {
      %cst_41 = arith.constant 0xFF800000 : f32
      %46 = vector.broadcast %cst_41 : f32 to vector<4x16x1xf32>
      %c0_42 = arith.constant 0 : index
      %c0_43 = arith.constant 0 : index
      %c0_44 = arith.constant 0 : index
      %47 = vector.load %arg8[%c0_42, %c0_43, %c0_44] : memref<4x16x1xf32, #tpu.memory_space<vmem>>, vector<4x16x1xf32>
      tpu.vector_store %arg8[%c0_42, %c0_43, %c0_44], %46 {strides = array<i32>} : memref<4x16x1xf32, #tpu.memory_space<vmem>>, vector<4x16x1xf32>,
      %cst_45 = arith.constant 0.000000e+00 : f32
      %48 = vector.broadcast %cst_45 : f32 to vector<4x16x1xf32>
      %c0_46 = arith.constant 0 : index
      %c0_47 = arith.constant 0 : index
      %c0_48 = arith.constant 0 : index
      %49 = vector.load %arg9[%c0_46, %c0_47, %c0_48] : memref<4x16x1xf32, #tpu.memory_space<vmem>>, vector<4x16x1xf32>
      tpu.vector_store %arg9[%c0_46, %c0_47, %c0_48], %48 {strides = array<i32>} : memref<4x16x1xf32, #tpu.memory_space<vmem>>, vector<4x16x1xf32>,
      %cst_49 = arith.constant 0.000000e+00 : f32
      %50 = vector.broadcast %cst_49 : f32 to vector<4x16x8xf32>
      %c0_50 = arith.constant 0 : index
      %c0_51 = arith.constant 0 : index
      %c0_52 = arith.constant 0 : index
      %51 = vector.load %arg10[%c0_50, %c0_51, %c0_52] : memref<4x16x8xf32, #tpu.memory_space<vmem>>, vector<4x16x8xf32>
      tpu.vector_store %arg10[%c0_50, %c0_51, %c0_52], %50 {strides = array<i32>} : memref<4x16x8xf32, #tpu.memory_space<vmem>>, vector<4x16x8xf32>,
    } else {
    }
    %c0 = arith.constant 0 : index
    %c0_1 = arith.constant 0 : index
    %c0_2 = arith.constant 0 : index
    %c0_3 = arith.constant 0 : index
    %3 = vector.load %arg4[%c0, %c0_1, %c0_2, %c0_3] : memref<1x4x16x8xf32, #tpu.memory_space<vmem>>, vector<1x4x16x8xf32>
    %4 = vector.shape_cast %3 : vector<1x4x16x8xf32> to vector<4x16x8xf32>
    %cst = arith.constant 0.353553385 : f32
    %5 = vector.broadcast %cst : f32 to vector<4x16x8xf32>
    %6 = arith.mulf %4, %5 : vector<4x16x8xf32>
    %c0_4 = arith.constant 0 : index
    %c0_5 = arith.constant 0 : index
    %c0_6 = arith.constant 0 : index
    %c0_7 = arith.constant 0 : index
    %7 = vector.load %arg5[%c0_4, %c0_5, %c0_6, %c0_7] : memref<1x4x128x8xf32, #tpu.memory_space<vmem>>, vector<1x4x128x8xf32>
    %8 = vector.shape_cast %7 : vector<1x4x128x8xf32> to vector<4x128x8xf32>
    %c0_8 = arith.constant 0 : index
    %c0_9 = arith.constant 0 : index
    %c0_10 = arith.constant 0 : index
    %c0_11 = arith.constant 0 : index
    %9 = vector.load %arg6[%c0_8, %c0_9, %c0_10, %c0_11] : memref<1x4x128x8xf32, #tpu.memory_space<vmem>>, vector<1x4x128x8xf32>
    %10 = vector.shape_cast %9 : vector<1x4x128x8xf32> to vector<4x128x8xf32>
    "tpu.trace_start"() <{level = 10 : i32, message = "hqd,hkd->hqk"}> : () -> ()
    %cst_12 = arith.constant dense<0.000000e+00> : vector<4x16x128xf32>
    %11 = tpu.matmul %6, %8, %cst_12 {dimension_numbers = #tpu.dot_dimension_numbers<[2], [2], [1], [1], [0, 0, 0, 1, 1, 1], [0], [0]>} : vector<4x16x8xf32>, vector<4x128x8xf32>, vector<4x16x128xf32> -> vector<4x16x128xf32>
    "tpu.trace_stop"() : () -> ()
    %c0_13 = arith.constant 0 : index
    %c0_14 = arith.constant 0 : index
    %c0_15 = arith.constant 0 : index
    %12 = vector.load %arg3[%c0_13, %c0_14, %c0_15] : memref<1x1x128xf32, #tpu.memory_space<vmem>>, vector<1x1x128xf32>
    %13 = vector.shape_cast %12 : vector<1x1x128xf32> to vector<1x128xf32>
    %14 = vector.shape_cast %13 : vector<1x128xf32> to vector<1x1x128xf32>
    %cst_16 = arith.constant 0.000000e+00 : f32
    %15 = vector.broadcast %cst_16 : f32 to vector<1x1x128xf32>
    %16 = arith.cmpf ogt, %14, %15 : vector<1x1x128xf32>
    %cst_17 = arith.constant -3.40282347E+38 : f32
    %17 = vector.shape_cast %16 : vector<1x1x128xi1> to vector<1x1x128xi1>
    %18 = vector.broadcast %17 : vector<1x1x128xi1> to vector<4x16x128xi1>
    %19 = vector.broadcast %cst_17 : f32 to vector<4x16x128xf32>
    %20 = arith.select %18, %11, %19 : vector<4x16x128xi1>, vector<4x16x128xf32>
    %c0_18 = arith.constant 0 : index
    %c0_19 = arith.constant 0 : index
    %c0_20 = arith.constant 0 : index
    %21 = vector.load %arg8[%c0_18, %c0_19, %c0_20] : memref<4x16x1xf32, #tpu.memory_space<vmem>>, vector<4x16x1xf32>
    %cst_21 = arith.constant dense<0xFF800000> : vector<4x16xf32>
    %22 = vector.multi_reduction <maximumf>, %20, %cst_21 [2] : vector<4x16x128xf32> to vector<4x16xf32>
    %23 = vector.shape_cast %22 : vector<4x16xf32> to vector<4x16x1xf32>
    %24 = arith.maximumf %21, %23 : vector<4x16x1xf32>
    %25 = arith.subf %21, %24 : vector<4x16x1xf32>
    %26 = math.exp %25 : vector<4x16x1xf32>
    %27 = vector.broadcast %24 : vector<4x16x1xf32> to vector<4x16x128xf32>
    %28 = arith.subf %20, %27 : vector<4x16x128xf32>
    %29 = math.exp %28 : vector<4x16x128xf32>
    %c0_22 = arith.constant 0 : index
    %c0_23 = arith.constant 0 : index
    %c0_24 = arith.constant 0 : index
    %30 = vector.load %arg9[%c0_22, %c0_23, %c0_24] : memref<4x16x1xf32, #tpu.memory_space<vmem>>, vector<4x16x1xf32>
    %31 = arith.mulf %26, %30 : vector<4x16x1xf32>
    %cst_25 = arith.constant dense<0.000000e+00> : vector<4x16xf32>
    %32 = vector.multi_reduction <add>, %29, %cst_25 [2] : vector<4x16x128xf32> to vector<4x16xf32>
    %33 = vector.shape_cast %32 : vector<4x16xf32> to vector<4x16x1xf32>
    %34 = arith.addf %31, %33 : vector<4x16x1xf32>
    %c0_26 = arith.constant 0 : index
    %c0_27 = arith.constant 0 : index
    %c0_28 = arith.constant 0 : index
    %35 = vector.load %arg9[%c0_26, %c0_27, %c0_28] : memref<4x16x1xf32, #tpu.memory_space<vmem>>, vector<4x16x1xf32>
    tpu.vector_store %arg9[%c0_26, %c0_27, %c0_28], %34 {strides = array<i32>} : memref<4x16x1xf32, #tpu.memory_space<vmem>>, vector<4x16x1xf32>,
    %c0_29 = arith.constant 0 : index
    %c0_30 = arith.constant 0 : index
    %c0_31 = arith.constant 0 : index
    %36 = vector.load %arg10[%c0_29, %c0_30, %c0_31] : memref<4x16x8xf32, #tpu.memory_space<vmem>>, vector<4x16x8xf32>
    %37 = vector.broadcast %26 : vector<4x16x1xf32> to vector<4x16x8xf32>
    %38 = arith.mulf %37, %36 : vector<4x16x8xf32>
    "tpu.trace_start"() <{level = 10 : i32, message = "hqk,hkd->hqd"}> : () -> ()
    %cst_32 = arith.constant dense<0.000000e+00> : vector<4x16x8xf32>
    %39 = tpu.matmul %29, %10, %cst_32 {dimension_numbers = #tpu.dot_dimension_numbers<[2], [1], [1], [2], [0, 0, 0, 1, 1, 2], [0], [0]>} : vector<4x16x128xf32>, vector<4x128x8xf32>, vector<4x16x8xf32> -> vector<4x16x8xf32>
    "tpu.trace_stop"() : () -> ()
    %40 = arith.addf %38, %39 : vector<4x16x8xf32>
    %c0_33 = arith.constant 0 : index
    %c0_34 = arith.constant 0 : index
    %c0_35 = arith.constant 0 : index
    %41 = vector.load %arg10[%c0_33, %c0_34, %c0_35] : memref<4x16x8xf32, #tpu.memory_space<vmem>>, vector<4x16x8xf32>
    tpu.vector_store %arg10[%c0_33, %c0_34, %c0_35], %40 {strides = array<i32>} : memref<4x16x8xf32, #tpu.memory_space<vmem>>, vector<4x16x8xf32>,
    %c0_36 = arith.constant 0 : index
    %c0_37 = arith.constant 0 : index
    %c0_38 = arith.constant 0 : index
    %42 = vector.load %arg8[%c0_36, %c0_37, %c0_38] : memref<4x16x1xf32, #tpu.memory_space<vmem>>, vector<4x16x1xf32>
    tpu.vector_store %arg8[%c0_36, %c0_37, %c0_38], %24 {strides = array<i32>} : memref<4x16x1xf32, #tpu.memory_space<vmem>>, vector<4x16x1xf32>,
    %c0_i32_39 = arith.constant 0 : i32
    %43 = arith.cmpi eq, %arg2, %c0_i32_39 : i32
    %44 = arith.extui %43 : i1 to i32
    %c0_i32_40 = arith.constant 0 : i32
    %45 = arith.cmpi ne, %44, %c0_i32_40 : i32
    scf.if %45 {
      %c0_41 = arith.constant 0 : index
      %c0_42 = arith.constant 0 : index
      %c0_43 = arith.constant 0 : index
      %46 = vector.load %arg9[%c0_41, %c0_42, %c0_43] : memref<4x16x1xf32, #tpu.memory_space<vmem>>, vector<4x16x1xf32>
      %47 = tpu.reciprocal %46 {approx = true} : vector<4x16x1xf32> -> vector<4x16x1xf32>
      %c0_44 = arith.constant 0 : index
      %c0_45 = arith.constant 0 : index
      %c0_46 = arith.constant 0 : index
      %48 = vector.load %arg10[%c0_44, %c0_45, %c0_46] : memref<4x16x8xf32, #tpu.memory_space<vmem>>, vector<4x16x8xf32>
      %49 = vector.broadcast %47 : vector<4x16x1xf32> to vector<4x16x8xf32>
      %50 = arith.mulf %48, %49 : vector<4x16x8xf32>
      %c0_47 = arith.constant 0 : index
      %c0_48 = arith.constant 0 : index
      %c0_49 = arith.constant 0 : index
      %c0_50 = arith.constant 0 : index
      %51 = vector.load %arg7[%c0_47, %c0_48, %c0_49, %c0_50] : memref<1x4x16x8xf32, #tpu.memory_space<vmem>>, vector<1x4x16x8xf32>
      %52 = vector.shape_cast %51 : vector<1x4x16x8xf32> to vector<4x16x8xf32>
      %53 = vector.shape_cast %50 : vector<4x16x8xf32> to vector<1x4x16x8xf32>
      tpu.vector_store %arg7[%c0_47, %c0_48, %c0_49, %c0_50], %53 {strides = array<i32>} : memref<1x4x16x8xf32, #tpu.memory_space<vmem>>, vector<1x4x16x8xf32>,
    } else {
    }
    return
  }
  func.func @transform_0(%arg0: i32, %arg1: i32, %arg2: i32) -> (i32, i32, i32) {
    %c0_i32 = arith.constant 0 : i32
    %c0_i32_0 = arith.constant 0 : i32
    return %arg0, %c0_i32, %arg2 : i32, i32, i32
  }
  func.func @transform_1(%arg0: i32, %arg1: i32, %arg2: i32) -> (i32, i32, i32, i32) {
    %c0_i32 = arith.constant 0 : i32
    %c0_i32_0 = arith.constant 0 : i32
    %c0_i32_1 = arith.constant 0 : i32
    return %arg0, %c0_i32, %arg1, %c0_i32_0 : i32, i32, i32, i32
  }
  func.func @transform_2(%arg0: i32, %arg1: i32, %arg2: i32) -> (i32, i32, i32, i32) {
    %c0_i32 = arith.constant 0 : i32
    %c0_i32_0 = arith.constant 0 : i32
    %c0_i32_1 = arith.constant 0 : i32
    return %arg0, %c0_i32, %arg2, %c0_i32_0 : i32, i32, i32, i32
  }
  func.func @transform_3(%arg0: i32, %arg1: i32, %arg2: i32) -> (i32, i32, i32, i32) {
    %c0_i32 = arith.constant 0 : i32
    %c0_i32_0 = arith.constant 0 : i32
    %c0_i32_1 = arith.constant 0 : i32
    return %arg0, %c0_i32, %arg2, %c0_i32_0 : i32, i32, i32, i32
  }
  func.func @transform_4(%arg0: i32, %arg1: i32, %arg2: i32) -> (i32, i32, i32, i32) {
    %c0_i32 = arith.constant 0 : i32
    %c0_i32_0 = arith.constant 0 : i32
    %c0_i32_1 = arith.constant 0 : i32
    return %arg0, %c0_i32, %arg1, %c0_i32_0 : i32, i32, i32, i32
  }
}

module attributes {stable_mosaic.version = 11 : i64} {
  func.func @_matmul_bias_res_kernel(%arg0: i32, %arg1: i32, %arg2: i32, %arg3: memref<24x128xf32, #tpu.memory_space<vmem>>, %arg4: memref<128x128xf32, #tpu.memory_space<vmem>>, %arg5: memref<1x128xf32, #tpu.memory_space<vmem>>, %arg6: memref<24x128xf32, #tpu.memory_space<vmem>>, %arg7: memref<24x128xf32, #tpu.memory_space<vmem>>, %arg8: memref<24x128xf32, #tpu.memory_space<vmem>>) attributes {dimension_semantics = [#tpu.dimension_semantics<parallel>, #tpu.dimension_semantics<parallel>, #tpu.dimension_semantics<arbitrary>], iteration_bounds = array<i64: 1, 1, 1>, scalar_prefetch = 0 : i64, scratch_operands = 1 : i64, tpu.core_type = #tpu.core_type<tc>, window_params = [{transform_indices = @transform_0, window_bounds = array<i64: 24, 128>}, {transform_indices = @transform_1, window_bounds = array<i64: 128, 128>}, {transform_indices = @transform_2, window_bounds = array<i64: 1, 128>}, {transform_indices = @transform_3, window_bounds = array<i64: 24, 128>}, {transform_indices = @transform_4, window_bounds = array<i64: 24, 128>}]} {
    %c0_i32 = arith.constant 0 : i32
    %0 = arith.cmpi eq, %arg2, %c0_i32 : i32
    %1 = arith.extui %0 : i1 to i32
    %c0_i32_0 = arith.constant 0 : i32
    %2 = arith.cmpi ne, %1, %c0_i32_0 : i32
    scf.if %2 {
      %cst_10 = arith.constant 0.000000e+00 : f32
      %12 = vector.broadcast %cst_10 : f32 to vector<24x128xf32>
      %c0_11 = arith.constant 0 : index
      %c0_12 = arith.constant 0 : index
      %13 = vector.load %arg8[%c0_11, %c0_12] : memref<24x128xf32, #tpu.memory_space<vmem>>, vector<24x128xf32>
      tpu.vector_store %arg8[%c0_11, %c0_12], %12 {strides = array<i32>} : memref<24x128xf32, #tpu.memory_space<vmem>>, vector<24x128xf32>,
    } else {
    }
    %c0 = arith.constant 0 : index
    %c0_1 = arith.constant 0 : index
    %3 = vector.load %arg8[%c0, %c0_1] : memref<24x128xf32, #tpu.memory_space<vmem>>, vector<24x128xf32>
    %c0_2 = arith.constant 0 : index
    %c0_3 = arith.constant 0 : index
    %4 = vector.load %arg3[%c0_2, %c0_3] : memref<24x128xf32, #tpu.memory_space<vmem>>, vector<24x128xf32>
    %c0_4 = arith.constant 0 : index
    %c0_5 = arith.constant 0 : index
    %5 = vector.load %arg4[%c0_4, %c0_5] : memref<128x128xf32, #tpu.memory_space<vmem>>, vector<128x128xf32>
    %cst = arith.constant dense<0.000000e+00> : vector<24x128xf32>
    %6 = tpu.matmul %4, %5, %cst {dimension_numbers = #tpu.dot_dimension_numbers<[1], [0], [0], [1], [0, 0, 1, 1], [], []>} : vector<24x128xf32>, vector<128x128xf32>, vector<24x128xf32> -> vector<24x128xf32>
    %7 = arith.addf %3, %6 : vector<24x128xf32>
    %c0_6 = arith.constant 0 : index
    %c0_7 = arith.constant 0 : index
    %8 = vector.load %arg8[%c0_6, %c0_7] : memref<24x128xf32, #tpu.memory_space<vmem>>, vector<24x128xf32>
    tpu.vector_store %arg8[%c0_6, %c0_7], %7 {strides = array<i32>} : memref<24x128xf32, #tpu.memory_space<vmem>>, vector<24x128xf32>,
    %c0_i32_8 = arith.constant 0 : i32
    %9 = arith.cmpi eq, %arg2, %c0_i32_8 : i32
    %10 = arith.extui %9 : i1 to i32
    %c0_i32_9 = arith.constant 0 : i32
    %11 = arith.cmpi ne, %10, %c0_i32_9 : i32
    scf.if %11 {
      %c0_10 = arith.constant 0 : index
      %c0_11 = arith.constant 0 : index
      %12 = vector.load %arg8[%c0_10, %c0_11] : memref<24x128xf32, #tpu.memory_space<vmem>>, vector<24x128xf32>
      %c0_12 = arith.constant 0 : index
      %c0_13 = arith.constant 0 : index
      %13 = vector.load %arg5[%c0_12, %c0_13] : memref<1x128xf32, #tpu.memory_space<vmem>>, vector<1x128xf32>
      %14 = vector.broadcast %13 : vector<1x128xf32> to vector<24x128xf32>
      %15 = arith.addf %12, %14 : vector<24x128xf32>
      %c0_14 = arith.constant 0 : index
      %c0_15 = arith.constant 0 : index
      %16 = vector.load %arg6[%c0_14, %c0_15] : memref<24x128xf32, #tpu.memory_space<vmem>>, vector<24x128xf32>
      %17 = arith.addf %15, %16 : vector<24x128xf32>
      %c0_16 = arith.constant 0 : index
      %c0_17 = arith.constant 0 : index
      %18 = vector.load %arg7[%c0_16, %c0_17] : memref<24x128xf32, #tpu.memory_space<vmem>>, vector<24x128xf32>
      tpu.vector_store %arg7[%c0_16, %c0_17], %17 {strides = array<i32>} : memref<24x128xf32, #tpu.memory_space<vmem>>, vector<24x128xf32>,
    } else {
    }
    return
  }
  func.func @transform_0(%arg0: i32, %arg1: i32, %arg2: i32) -> (i32, i32) {
    %c0_i32 = arith.constant 0 : i32
    return %arg0, %arg2 : i32, i32
  }
  func.func @transform_1(%arg0: i32, %arg1: i32, %arg2: i32) -> (i32, i32) {
    %c0_i32 = arith.constant 0 : i32
    return %arg2, %arg1 : i32, i32
  }
  func.func @transform_2(%arg0: i32, %arg1: i32, %arg2: i32) -> (i32, i32) {
    %c0_i32 = arith.constant 0 : i32
    %c0_i32_0 = arith.constant 0 : i32
    return %c0_i32, %arg1 : i32, i32
  }
  func.func @transform_3(%arg0: i32, %arg1: i32, %arg2: i32) -> (i32, i32) {
    %c0_i32 = arith.constant 0 : i32
    return %arg0, %arg1 : i32, i32
  }
  func.func @transform_4(%arg0: i32, %arg1: i32, %arg2: i32) -> (i32, i32) {
    %c0_i32 = arith.constant 0 : i32
    return %arg0, %arg1 : i32, i32
  }
}

module attributes {stable_mosaic.version = 11 : i64} {
  func.func @_linear_geglu_kernel(%arg0: i32, %arg1: i32, %arg2: i32, %arg3: memref<24x128xf32, #tpu.memory_space<vmem>>, %arg4: memref<128x128xf32, #tpu.memory_space<vmem>>, %arg5: memref<128x128xf32, #tpu.memory_space<vmem>>, %arg6: memref<1x128xf32, #tpu.memory_space<vmem>>, %arg7: memref<1x128xf32, #tpu.memory_space<vmem>>, %arg8: memref<24x128xf32, #tpu.memory_space<vmem>>, %arg9: memref<24x128xf32, #tpu.memory_space<vmem>>, %arg10: memref<24x128xf32, #tpu.memory_space<vmem>>) attributes {dimension_semantics = [#tpu.dimension_semantics<parallel>, #tpu.dimension_semantics<parallel>, #tpu.dimension_semantics<arbitrary>], iteration_bounds = array<i64: 1, 1, 1>, scalar_prefetch = 0 : i64, scratch_operands = 2 : i64, tpu.core_type = #tpu.core_type<tc>, window_params = [{transform_indices = @transform_0, window_bounds = array<i64: 24, 128>}, {transform_indices = @transform_1, window_bounds = array<i64: 128, 128>}, {transform_indices = @transform_2, window_bounds = array<i64: 128, 128>}, {transform_indices = @transform_3, window_bounds = array<i64: 1, 128>}, {transform_indices = @transform_4, window_bounds = array<i64: 1, 128>}, {transform_indices = @transform_5, window_bounds = array<i64: 24, 128>}]} {
    %c0_i32 = arith.constant 0 : i32
    %0 = arith.cmpi eq, %arg2, %c0_i32 : i32
    %1 = arith.extui %0 : i1 to i32
    %c0_i32_0 = arith.constant 0 : i32
    %2 = arith.cmpi ne, %1, %c0_i32_0 : i32
    scf.if %2 {
      %cst_17 = arith.constant 0.000000e+00 : f32
      %17 = vector.broadcast %cst_17 : f32 to vector<24x128xf32>
      %c0_18 = arith.constant 0 : index
      %c0_19 = arith.constant 0 : index
      %18 = vector.load %arg9[%c0_18, %c0_19] : memref<24x128xf32, #tpu.memory_space<vmem>>, vector<24x128xf32>
      tpu.vector_store %arg9[%c0_18, %c0_19], %17 {strides = array<i32>} : memref<24x128xf32, #tpu.memory_space<vmem>>, vector<24x128xf32>,
      %cst_20 = arith.constant 0.000000e+00 : f32
      %19 = vector.broadcast %cst_20 : f32 to vector<24x128xf32>
      %c0_21 = arith.constant 0 : index
      %c0_22 = arith.constant 0 : index
      %20 = vector.load %arg10[%c0_21, %c0_22] : memref<24x128xf32, #tpu.memory_space<vmem>>, vector<24x128xf32>
      tpu.vector_store %arg10[%c0_21, %c0_22], %19 {strides = array<i32>} : memref<24x128xf32, #tpu.memory_space<vmem>>, vector<24x128xf32>,
    } else {
    }
    %c0 = arith.constant 0 : index
    %c0_1 = arith.constant 0 : index
    %3 = vector.load %arg3[%c0, %c0_1] : memref<24x128xf32, #tpu.memory_space<vmem>>, vector<24x128xf32>
    %c0_2 = arith.constant 0 : index
    %c0_3 = arith.constant 0 : index
    %4 = vector.load %arg9[%c0_2, %c0_3] : memref<24x128xf32, #tpu.memory_space<vmem>>, vector<24x128xf32>
    %c0_4 = arith.constant 0 : index
    %c0_5 = arith.constant 0 : index
    %5 = vector.load %arg4[%c0_4, %c0_5] : memref<128x128xf32, #tpu.memory_space<vmem>>, vector<128x128xf32>
    %cst = arith.constant dense<0.000000e+00> : vector<24x128xf32>
    %6 = tpu.matmul %3, %5, %cst {dimension_numbers = #tpu.dot_dimension_numbers<[1], [0], [0], [1], [0, 0, 1, 1], [], []>} : vector<24x128xf32>, vector<128x128xf32>, vector<24x128xf32> -> vector<24x128xf32>
    %7 = arith.addf %4, %6 : vector<24x128xf32>
    %c0_6 = arith.constant 0 : index
    %c0_7 = arith.constant 0 : index
    %8 = vector.load %arg9[%c0_6, %c0_7] : memref<24x128xf32, #tpu.memory_space<vmem>>, vector<24x128xf32>
    tpu.vector_store %arg9[%c0_6, %c0_7], %7 {strides = array<i32>} : memref<24x128xf32, #tpu.memory_space<vmem>>, vector<24x128xf32>,
    %c0_8 = arith.constant 0 : index
    %c0_9 = arith.constant 0 : index
    %9 = vector.load %arg10[%c0_8, %c0_9] : memref<24x128xf32, #tpu.memory_space<vmem>>, vector<24x128xf32>
    %c0_10 = arith.constant 0 : index
    %c0_11 = arith.constant 0 : index
    %10 = vector.load %arg5[%c0_10, %c0_11] : memref<128x128xf32, #tpu.memory_space<vmem>>, vector<128x128xf32>
    %cst_12 = arith.constant dense<0.000000e+00> : vector<24x128xf32>
    %11 = tpu.matmul %3, %10, %cst_12 {dimension_numbers = #tpu.dot_dimension_numbers<[1], [0], [0], [1], [0, 0, 1, 1], [], []>} : vector<24x128xf32>, vector<128x128xf32>, vector<24x128xf32> -> vector<24x128xf32>
    %12 = arith.addf %9, %11 : vector<24x128xf32>
    %c0_13 = arith.constant 0 : index
    %c0_14 = arith.constant 0 : index
    %13 = vector.load %arg10[%c0_13, %c0_14] : memref<24x128xf32, #tpu.memory_space<vmem>>, vector<24x128xf32>
    tpu.vector_store %arg10[%c0_13, %c0_14], %12 {strides = array<i32>} : memref<24x128xf32, #tpu.memory_space<vmem>>, vector<24x128xf32>,
    %c0_i32_15 = arith.constant 0 : i32
    %14 = arith.cmpi eq, %arg2, %c0_i32_15 : i32
    %15 = arith.extui %14 : i1 to i32
    %c0_i32_16 = arith.constant 0 : i32
    %16 = arith.cmpi ne, %15, %c0_i32_16 : i32
    scf.if %16 {
      %c0_17 = arith.constant 0 : index
      %c0_18 = arith.constant 0 : index
      %17 = vector.load %arg9[%c0_17, %c0_18] : memref<24x128xf32, #tpu.memory_space<vmem>>, vector<24x128xf32>
      %c0_19 = arith.constant 0 : index
      %c0_20 = arith.constant 0 : index
      %18 = vector.load %arg6[%c0_19, %c0_20] : memref<1x128xf32, #tpu.memory_space<vmem>>, vector<1x128xf32>
      %19 = vector.broadcast %18 : vector<1x128xf32> to vector<24x128xf32>
      %20 = arith.addf %17, %19 : vector<24x128xf32>
      %c0_21 = arith.constant 0 : index
      %c0_22 = arith.constant 0 : index
      %21 = vector.load %arg10[%c0_21, %c0_22] : memref<24x128xf32, #tpu.memory_space<vmem>>, vector<24x128xf32>
      %c0_23 = arith.constant 0 : index
      %c0_24 = arith.constant 0 : index
      %22 = vector.load %arg7[%c0_23, %c0_24] : memref<1x128xf32, #tpu.memory_space<vmem>>, vector<1x128xf32>
      %23 = vector.broadcast %22 : vector<1x128xf32> to vector<24x128xf32>
      %24 = arith.addf %21, %23 : vector<24x128xf32>
      %cst_25 = arith.constant 5.000000e-01 : f32
      %25 = vector.broadcast %cst_25 : f32 to vector<24x128xf32>
      %26 = arith.mulf %25, %24 : vector<24x128xf32>
      %cst_26 = arith.constant 4.471500e-02 : f32
      %27 = vector.broadcast %cst_26 : f32 to vector<24x128xf32>
      %28 = arith.mulf %27, %24 : vector<24x128xf32>
      %29 = arith.mulf %28, %24 : vector<24x128xf32>
      %30 = arith.mulf %29, %24 : vector<24x128xf32>
      %31 = arith.addf %24, %30 : vector<24x128xf32>
      %cst_27 = arith.constant 0.797884583 : f32
      %32 = vector.broadcast %cst_27 : f32 to vector<24x128xf32>
      %33 = arith.mulf %32, %31 : vector<24x128xf32>
      %34 = math.tanh %33 : vector<24x128xf32>
      %cst_28 = arith.constant 1.000000e+00 : f32
      %35 = vector.broadcast %cst_28 : f32 to vector<24x128xf32>
      %36 = arith.addf %35, %34 : vector<24x128xf32>
      %37 = arith.mulf %26, %36 : vector<24x128xf32>
      %38 = arith.mulf %20, %37 : vector<24x128xf32>
      %c0_29 = arith.constant 0 : index
      %c0_30 = arith.constant 0 : index
      %39 = vector.load %arg8[%c0_29, %c0_30] : memref<24x128xf32, #tpu.memory_space<vmem>>, vector<24x128xf32>
      tpu.vector_store %arg8[%c0_29, %c0_30], %38 {strides = array<i32>} : memref<24x128xf32, #tpu.memory_space<vmem>>, vector<24x128xf32>,
    } else {
    }
    return
  }
  func.func @transform_0(%arg0: i32, %arg1: i32, %arg2: i32) -> (i32, i32) {
    %c0_i32 = arith.constant 0 : i32
    return %arg0, %arg2 : i32, i32
  }
  func.func @transform_1(%arg0: i32, %arg1: i32, %arg2: i32) -> (i32, i32) {
    %c0_i32 = arith.constant 0 : i32
    return %arg2, %arg1 : i32, i32
  }
  func.func @transform_2(%arg0: i32, %arg1: i32, %arg2: i32) -> (i32, i32) {
    %c0_i32 = arith.constant 0 : i32
    return %arg2, %arg1 : i32, i32
  }
  func.func @transform_3(%arg0: i32, %arg1: i32, %arg2: i32) -> (i32, i32) {
    %c0_i32 = arith.constant 0 : i32
    %c0_i32_0 = arith.constant 0 : i32
    return %c0_i32, %arg1 : i32, i32
  }
  func.func @transform_4(%arg0: i32, %arg1: i32, %arg2: i32) -> (i32, i32) {
    %c0_i32 = arith.constant 0 : i32
    %c0_i32_0 = arith.constant 0 : i32
    return %c0_i32, %arg1 : i32, i32
  }
  func.func @transform_5(%arg0: i32, %arg1: i32, %arg2: i32) -> (i32, i32) {
    %c0_i32 = arith.constant 0 : i32
    return %arg0, %arg1 : i32, i32
  }
}

module attributes {stable_mosaic.version = 11 : i64} {
  func.func @_flash_attention_kernel(%arg0: i32, %arg1: i32, %arg2: i32, %arg3: memref<1x1x128xf32, #tpu.memory_space<vmem>>, %arg4: memref<1x4x16x8xf32, #tpu.memory_space<vmem>>, %arg5: memref<1x4x128x8xf32, #tpu.memory_space<vmem>>, %arg6: memref<1x4x128x8xf32, #tpu.memory_space<vmem>>, %arg7: memref<1x4x16x8xf32, #tpu.memory_space<vmem>>, %arg8: memref<1x4x16x128xf32, #tpu.memory_space<vmem>>, %arg9: memref<4x16x1xf32, #tpu.memory_space<vmem>>, %arg10: memref<4x16x1xf32, #tpu.memory_space<vmem>>, %arg11: memref<4x16x8xf32, #tpu.memory_space<vmem>>) attributes {dimension_semantics = [#tpu.dimension_semantics<parallel>, #tpu.dimension_semantics<parallel>, #tpu.dimension_semantics<arbitrary>], iteration_bounds = array<i64: 2, 1, 1>, scalar_prefetch = 0 : i64, scratch_operands = 3 : i64, tpu.core_type = #tpu.core_type<tc>, window_params = [{transform_indices = @transform_0, window_bounds = array<i64: 1, 1, 128>}, {transform_indices = @transform_1, window_bounds = array<i64: 1, 4, 16, 8>}, {transform_indices = @transform_2, window_bounds = array<i64: 1, 4, 128, 8>}, {transform_indices = @transform_3, window_bounds = array<i64: 1, 4, 128, 8>}, {transform_indices = @transform_4, window_bounds = array<i64: 1, 4, 16, 8>}, {transform_indices = @transform_5, window_bounds = array<i64: 1, 4, 16, 128>}]} {
    %c0_i32 = arith.constant 0 : i32
    %0 = arith.cmpi eq, %arg2, %c0_i32 : i32
    %1 = arith.extui %0 : i1 to i32
    %c0_i32_0 = arith.constant 0 : i32
    %2 = arith.cmpi ne, %1, %c0_i32_0 : i32
    scf.if %2 {
      %cst_41 = arith.constant 0xFF800000 : f32
      %46 = vector.broadcast %cst_41 : f32 to vector<4x16x1xf32>
      %c0_42 = arith.constant 0 : index
      %c0_43 = arith.constant 0 : index
      %c0_44 = arith.constant 0 : index
      %47 = vector.load %arg9[%c0_42, %c0_43, %c0_44] : memref<4x16x1xf32, #tpu.memory_space<vmem>>, vector<4x16x1xf32>
      tpu.vector_store %arg9[%c0_42, %c0_43, %c0_44], %46 {strides = array<i32>} : memref<4x16x1xf32, #tpu.memory_space<vmem>>, vector<4x16x1xf32>,
      %cst_45 = arith.constant 0.000000e+00 : f32
      %48 = vector.broadcast %cst_45 : f32 to vector<4x16x1xf32>
      %c0_46 = arith.constant 0 : index
      %c0_47 = arith.constant 0 : index
      %c0_48 = arith.constant 0 : index
      %49 = vector.load %arg10[%c0_46, %c0_47, %c0_48] : memref<4x16x1xf32, #tpu.memory_space<vmem>>, vector<4x16x1xf32>
      tpu.vector_store %arg10[%c0_46, %c0_47, %c0_48], %48 {strides = array<i32>} : memref<4x16x1xf32, #tpu.memory_space<vmem>>, vector<4x16x1xf32>,
      %cst_49 = arith.constant 0.000000e+00 : f32
      %50 = vector.broadcast %cst_49 : f32 to vector<4x16x8xf32>
      %c0_50 = arith.constant 0 : index
      %c0_51 = arith.constant 0 : index
      %c0_52 = arith.constant 0 : index
      %51 = vector.load %arg11[%c0_50, %c0_51, %c0_52] : memref<4x16x8xf32, #tpu.memory_space<vmem>>, vector<4x16x8xf32>
      tpu.vector_store %arg11[%c0_50, %c0_51, %c0_52], %50 {strides = array<i32>} : memref<4x16x8xf32, #tpu.memory_space<vmem>>, vector<4x16x8xf32>,
    } else {
    }
    %c0 = arith.constant 0 : index
    %c0_1 = arith.constant 0 : index
    %c0_2 = arith.constant 0 : index
    %c0_3 = arith.constant 0 : index
    %3 = vector.load %arg4[%c0, %c0_1, %c0_2, %c0_3] : memref<1x4x16x8xf32, #tpu.memory_space<vmem>>, vector<1x4x16x8xf32>
    %4 = vector.shape_cast %3 : vector<1x4x16x8xf32> to vector<4x16x8xf32>
    %cst = arith.constant 0.353553385 : f32
    %5 = vector.broadcast %cst : f32 to vector<4x16x8xf32>
    %6 = arith.mulf %4, %5 : vector<4x16x8xf32>
    %c0_4 = arith.constant 0 : index
    %c0_5 = arith.constant 0 : index
    %c0_6 = arith.constant 0 : index
    %c0_7 = arith.constant 0 : index
    %7 = vector.load %arg5[%c0_4, %c0_5, %c0_6, %c0_7] : memref<1x4x128x8xf32, #tpu.memory_space<vmem>>, vector<1x4x128x8xf32>
    %8 = vector.shape_cast %7 : vector<1x4x128x8xf32> to vector<4x128x8xf32>
    %c0_8 = arith.constant 0 : index
    %c0_9 = arith.constant 0 : index
    %c0_10 = arith.constant 0 : index
    %c0_11 = arith.constant 0 : index
    %9 = vector.load %arg6[%c0_8, %c0_9, %c0_10, %c0_11] : memref<1x4x128x8xf32, #tpu.memory_space<vmem>>, vector<1x4x128x8xf32>
    %10 = vector.shape_cast %9 : vector<1x4x128x8xf32> to vector<4x128x8xf32>
    "tpu.trace_start"() <{level = 10 : i32, message = "hqd,hkd->hqk"}> : () -> ()
    %cst_12 = arith.constant dense<0.000000e+00> : vector<4x16x128xf32>
    %11 = tpu.matmul %6, %8, %cst_12 {dimension_numbers = #tpu.dot_dimension_numbers<[2], [2], [1], [1], [0, 0, 0, 1, 1, 1], [0], [0]>} : vector<4x16x8xf32>, vector<4x128x8xf32>, vector<4x16x128xf32> -> vector<4x16x128xf32>
    "tpu.trace_stop"() : () -> ()
    %c0_13 = arith.constant 0 : index
    %c0_14 = arith.constant 0 : index
    %c0_15 = arith.constant 0 : index
    %12 = vector.load %arg3[%c0_13, %c0_14, %c0_15] : memref<1x1x128xf32, #tpu.memory_space<vmem>>, vector<1x1x128xf32>
    %13 = vector.shape_cast %12 : vector<1x1x128xf32> to vector<1x128xf32>
    %14 = vector.shape_cast %13 : vector<1x128xf32> to vector<1x1x128xf32>
    %cst_16 = arith.constant 0.000000e+00 : f32
    %15 = vector.broadcast %cst_16 : f32 to vector<1x1x128xf32>
    %16 = arith.cmpf ogt, %14, %15 : vector<1x1x128xf32>
    %cst_17 = arith.constant -3.40282347E+38 : f32
    %17 = vector.shape_cast %16 : vector<1x1x128xi1> to vector<1x1x128xi1>
    %18 = vector.broadcast %17 : vector<1x1x128xi1> to vector<4x16x128xi1>
    %19 = vector.broadcast %cst_17 : f32 to vector<4x16x128xf32>
    %20 = arith.select %18, %11, %19 : vector<4x16x128xi1>, vector<4x16x128xf32>
    %c0_18 = arith.constant 0 : index
    %c0_19 = arith.constant 0 : index
    %c0_20 = arith.constant 0 : index
    %21 = vector.load %arg9[%c0_18, %c0_19, %c0_20] : memref<4x16x1xf32, #tpu.memory_space<vmem>>, vector<4x16x1xf32>
    %cst_21 = arith.constant dense<0xFF800000> : vector<4x16xf32>
    %22 = vector.multi_reduction <maximumf>, %20, %cst_21 [2] : vector<4x16x128xf32> to vector<4x16xf32>
    %23 = vector.shape_cast %22 : vector<4x16xf32> to vector<4x16x1xf32>
    %24 = arith.maximumf %21, %23 : vector<4x16x1xf32>
    %25 = arith.subf %21, %24 : vector<4x16x1xf32>
    %26 = math.exp %25 : vector<4x16x1xf32>
    %27 = vector.broadcast %24 : vector<4x16x1xf32> to vector<4x16x128xf32>
    %28 = arith.subf %20, %27 : vector<4x16x128xf32>
    %29 = math.exp %28 : vector<4x16x128xf32>
    %c0_22 = arith.constant 0 : index
    %c0_23 = arith.constant 0 : index
    %c0_24 = arith.constant 0 : index
    %30 = vector.load %arg10[%c0_22, %c0_23, %c0_24] : memref<4x16x1xf32, #tpu.memory_space<vmem>>, vector<4x16x1xf32>
    %31 = arith.mulf %26, %30 : vector<4x16x1xf32>
    %cst_25 = arith.constant dense<0.000000e+00> : vector<4x16xf32>
    %32 = vector.multi_reduction <add>, %29, %cst_25 [2] : vector<4x16x128xf32> to vector<4x16xf32>
    %33 = vector.shape_cast %32 : vector<4x16xf32> to vector<4x16x1xf32>
    %34 = arith.addf %31, %33 : vector<4x16x1xf32>
    %c0_26 = arith.constant 0 : index
    %c0_27 = arith.constant 0 : index
    %c0_28 = arith.constant 0 : index
    %35 = vector.load %arg10[%c0_26, %c0_27, %c0_28] : memref<4x16x1xf32, #tpu.memory_space<vmem>>, vector<4x16x1xf32>
    tpu.vector_store %arg10[%c0_26, %c0_27, %c0_28], %34 {strides = array<i32>} : memref<4x16x1xf32, #tpu.memory_space<vmem>>, vector<4x16x1xf32>,
    %c0_29 = arith.constant 0 : index
    %c0_30 = arith.constant 0 : index
    %c0_31 = arith.constant 0 : index
    %36 = vector.load %arg11[%c0_29, %c0_30, %c0_31] : memref<4x16x8xf32, #tpu.memory_space<vmem>>, vector<4x16x8xf32>
    %37 = vector.broadcast %26 : vector<4x16x1xf32> to vector<4x16x8xf32>
    %38 = arith.mulf %37, %36 : vector<4x16x8xf32>
    "tpu.trace_start"() <{level = 10 : i32, message = "hqk,hkd->hqd"}> : () -> ()
    %cst_32 = arith.constant dense<0.000000e+00> : vector<4x16x8xf32>
    %39 = tpu.matmul %29, %10, %cst_32 {dimension_numbers = #tpu.dot_dimension_numbers<[2], [1], [1], [2], [0, 0, 0, 1, 1, 2], [0], [0]>} : vector<4x16x128xf32>, vector<4x128x8xf32>, vector<4x16x8xf32> -> vector<4x16x8xf32>
    "tpu.trace_stop"() : () -> ()
    %40 = arith.addf %38, %39 : vector<4x16x8xf32>
    %c0_33 = arith.constant 0 : index
    %c0_34 = arith.constant 0 : index
    %c0_35 = arith.constant 0 : index
    %41 = vector.load %arg11[%c0_33, %c0_34, %c0_35] : memref<4x16x8xf32, #tpu.memory_space<vmem>>, vector<4x16x8xf32>
    tpu.vector_store %arg11[%c0_33, %c0_34, %c0_35], %40 {strides = array<i32>} : memref<4x16x8xf32, #tpu.memory_space<vmem>>, vector<4x16x8xf32>,
    %c0_36 = arith.constant 0 : index
    %c0_37 = arith.constant 0 : index
    %c0_38 = arith.constant 0 : index
    %42 = vector.load %arg9[%c0_36, %c0_37, %c0_38] : memref<4x16x1xf32, #tpu.memory_space<vmem>>, vector<4x16x1xf32>
    tpu.vector_store %arg9[%c0_36, %c0_37, %c0_38], %24 {strides = array<i32>} : memref<4x16x1xf32, #tpu.memory_space<vmem>>, vector<4x16x1xf32>,
    %c0_i32_39 = arith.constant 0 : i32
    %43 = arith.cmpi eq, %arg2, %c0_i32_39 : i32
    %44 = arith.extui %43 : i1 to i32
    %c0_i32_40 = arith.constant 0 : i32
    %45 = arith.cmpi ne, %44, %c0_i32_40 : i32
    scf.if %45 {
      %c0_41 = arith.constant 0 : index
      %c0_42 = arith.constant 0 : index
      %c0_43 = arith.constant 0 : index
      %46 = vector.load %arg10[%c0_41, %c0_42, %c0_43] : memref<4x16x1xf32, #tpu.memory_space<vmem>>, vector<4x16x1xf32>
      %47 = tpu.reciprocal %46 {approx = true} : vector<4x16x1xf32> -> vector<4x16x1xf32>
      %c0_44 = arith.constant 0 : index
      %c0_45 = arith.constant 0 : index
      %c0_46 = arith.constant 0 : index
      %48 = vector.load %arg11[%c0_44, %c0_45, %c0_46] : memref<4x16x8xf32, #tpu.memory_space<vmem>>, vector<4x16x8xf32>
      %49 = vector.broadcast %47 : vector<4x16x1xf32> to vector<4x16x8xf32>
      %50 = arith.mulf %48, %49 : vector<4x16x8xf32>
      %c0_47 = arith.constant 0 : index
      %c0_48 = arith.constant 0 : index
      %c0_49 = arith.constant 0 : index
      %c0_50 = arith.constant 0 : index
      %51 = vector.load %arg7[%c0_47, %c0_48, %c0_49, %c0_50] : memref<1x4x16x8xf32, #tpu.memory_space<vmem>>, vector<1x4x16x8xf32>
      %52 = vector.shape_cast %51 : vector<1x4x16x8xf32> to vector<4x16x8xf32>
      %53 = vector.shape_cast %50 : vector<4x16x8xf32> to vector<1x4x16x8xf32>
      tpu.vector_store %arg7[%c0_47, %c0_48, %c0_49, %c0_50], %53 {strides = array<i32>} : memref<1x4x16x8xf32, #tpu.memory_space<vmem>>, vector<1x4x16x8xf32>,
      %54 = vector.broadcast %47 : vector<4x16x1xf32> to vector<4x16x128xf32>
      %55 = arith.mulf %29, %54 : vector<4x16x128xf32>
      %c0_51 = arith.constant 0 : index
      %c0_52 = arith.constant 0 : index
      %c0_53 = arith.constant 0 : index
      %c0_54 = arith.constant 0 : index
      %56 = vector.load %arg8[%c0_51, %c0_52, %c0_53, %c0_54] : memref<1x4x16x128xf32, #tpu.memory_space<vmem>>, vector<1x4x16x128xf32>
      %57 = vector.shape_cast %56 : vector<1x4x16x128xf32> to vector<4x16x128xf32>
      %58 = vector.shape_cast %55 : vector<4x16x128xf32> to vector<1x4x16x128xf32>
      tpu.vector_store %arg8[%c0_51, %c0_52, %c0_53, %c0_54], %58 {strides = array<i32>} : memref<1x4x16x128xf32, #tpu.memory_space<vmem>>, vector<1x4x16x128xf32>,
    } else {
    }
    return
  }
  func.func @transform_0(%arg0: i32, %arg1: i32, %arg2: i32) -> (i32, i32, i32) {
    %c0_i32 = arith.constant 0 : i32
    %c0_i32_0 = arith.constant 0 : i32
    return %arg0, %c0_i32, %arg2 : i32, i32, i32
  }
  func.func @transform_1(%arg0: i32, %arg1: i32, %arg2: i32) -> (i32, i32, i32, i32) {
    %c0_i32 = arith.constant 0 : i32
    %c0_i32_0 = arith.constant 0 : i32
    %c0_i32_1 = arith.constant 0 : i32
    return %arg0, %c0_i32, %arg1, %c0_i32_0 : i32, i32, i32, i32
  }
  func.func @transform_2(%arg0: i32, %arg1: i32, %arg2: i32) -> (i32, i32, i32, i32) {
    %c0_i32 = arith.constant 0 : i32
    %c0_i32_0 = arith.constant 0 : i32
    %c0_i32_1 = arith.constant 0 : i32
    return %arg0, %c0_i32, %arg2, %c0_i32_0 : i32, i32, i32, i32
  }
  func.func @transform_3(%arg0: i32, %arg1: i32, %arg2: i32) -> (i32, i32, i32, i32) {
    %c0_i32 = arith.constant 0 : i32
    %c0_i32_0 = arith.constant 0 : i32
    %c0_i32_1 = arith.constant 0 : i32
    return %arg0, %c0_i32, %arg2, %c0_i32_0 : i32, i32, i32, i32
  }
  func.func @transform_4(%arg0: i32, %arg1: i32, %arg2: i32) -> (i32, i32, i32, i32) {
    %c0_i32 = arith.constant 0 : i32
    %c0_i32_0 = arith.constant 0 : i32
    %c0_i32_1 = arith.constant 0 : i32
    return %arg0, %c0_i32, %arg1, %c0_i32_0 : i32, i32, i32, i32
  }
  func.func @transform_5(%arg0: i32, %arg1: i32, %arg2: i32) -> (i32, i32, i32, i32) {
    %c0_i32 = arith.constant 0 : i32
    %c0_i32_0 = arith.constant 0 : i32
    return %arg0, %c0_i32, %arg1, %arg2 : i32, i32, i32, i32
  }
}

module attributes {stable_mosaic.version = 11 : i64} {
  func.func @_layernorm_kernel(%arg0: i32, %arg1: memref<8x32xf32, #tpu.memory_space<vmem>>, %arg2: memref<1x32xf32, #tpu.memory_space<vmem>>, %arg3: memref<1x32xf32, #tpu.memory_space<vmem>>, %arg4: memref<8x32xf32, #tpu.memory_space<vmem>>) attributes {dimension_semantics = [#tpu.dimension_semantics<parallel>], iteration_bounds = array<i64: 1>, scalar_prefetch = 0 : i64, scratch_operands = 0 : i64, tpu.core_type = #tpu.core_type<tc>, window_params = [{transform_indices = @transform_0, window_bounds = array<i64: 8, 32>}, {pipeline_mode = #tpu.pipeline_mode<synchronous>, transform_indices = @transform_1, window_bounds = array<i64: 1, 32>}, {pipeline_mode = #tpu.pipeline_mode<synchronous>, transform_indices = @transform_2, window_bounds = array<i64: 1, 32>}, {transform_indices = @transform_3, window_bounds = array<i64: 8, 32>}]} {
    %c0 = arith.constant 0 : index
    %c0_0 = arith.constant 0 : index
    %0 = vector.load %arg1[%c0, %c0_0] : memref<8x32xf32, #tpu.memory_space<vmem>>, vector<8x32xf32>
    %cst = arith.constant dense<0.000000e+00> : vector<8xf32>
    %1 = vector.multi_reduction <add>, %0, %cst [1] : vector<8x32xf32> to vector<8xf32>
    %2 = vector.shape_cast %1 : vector<8xf32> to vector<8x1xf32>
    %cst_1 = arith.constant 3.200000e+01 : f32
    %3 = vector.broadcast %cst_1 : f32 to vector<8x1xf32>
    %4 = arith.divf %2, %3 : vector<8x1xf32>
    %5 = vector.broadcast %4 : vector<8x1xf32> to vector<8x32xf32>
    %6 = arith.subf %0, %5 : vector<8x32xf32>
    %7 = arith.mulf %6, %6 : vector<8x32xf32>
    %cst_2 = arith.constant dense<0.000000e+00> : vector<8xf32>
    %8 = vector.multi_reduction <add>, %7, %cst_2 [1] : vector<8x32xf32> to vector<8xf32>
    %9 = vector.shape_cast %8 : vector<8xf32> to vector<8x1xf32>
    %cst_3 = arith.constant 3.200000e+01 : f32
    %10 = vector.broadcast %cst_3 : f32 to vector<8x1xf32>
    %11 = arith.divf %9, %10 : vector<8x1xf32>
    %cst_4 = arith.constant 9.99999974E-6 : f32
    %12 = vector.broadcast %cst_4 : f32 to vector<8x1xf32>
    %13 = arith.addf %11, %12 : vector<8x1xf32>
    %14 = math.rsqrt %13 : vector<8x1xf32>
    %15 = vector.broadcast %14 : vector<8x1xf32> to vector<8x32xf32>
    %16 = arith.mulf %6, %15 : vector<8x32xf32>
    %c0_5 = arith.constant 0 : index
    %c0_6 = arith.constant 0 : index
    %17 = vector.load %arg2[%c0_5, %c0_6] : memref<1x32xf32, #tpu.memory_space<vmem>>, vector<1x32xf32>
    %18 = vector.broadcast %17 : vector<1x32xf32> to vector<8x32xf32>
    %19 = arith.mulf %16, %18 : vector<8x32xf32>
    %c0_7 = arith.constant 0 : index
    %c0_8 = arith.constant 0 : index
    %20 = vector.load %arg3[%c0_7, %c0_8] : memref<1x32xf32, #tpu.memory_space<vmem>>, vector<1x32xf32>
    %21 = vector.broadcast %20 : vector<1x32xf32> to vector<8x32xf32>
    %22 = arith.addf %19, %21 : vector<8x32xf32>
    %c0_9 = arith.constant 0 : index
    %c0_10 = arith.constant 0 : index
    %23 = vector.load %arg4[%c0_9, %c0_10] : memref<8x32xf32, #tpu.memory_space<vmem>>, vector<8x32xf32>
    tpu.vector_store %arg4[%c0_9, %c0_10], %22 {strides = array<i32>} : memref<8x32xf32, #tpu.memory_space<vmem>>, vector<8x32xf32>,
    return
  }
  func.func @transform_0(%arg0: i32) -> (i32, i32) {
    %c0_i32 = arith.constant 0 : i32
    %c0_i32_0 = arith.constant 0 : i32
    return %arg0, %c0_i32 : i32, i32
  }
  func.func @transform_1(%arg0: i32) -> (i32, i32) {
    %c0_i32 = arith.constant 0 : i32
    %c0_i32_0 = arith.constant 0 : i32
    %c0_i32_1 = arith.constant 0 : i32
    return %c0_i32, %c0_i32_0 : i32, i32
  }
  func.func @transform_2(%arg0: i32) -> (i32, i32) {
    %c0_i32 = arith.constant 0 : i32
    %c0_i32_0 = arith.constant 0 : i32
    %c0_i32_1 = arith.constant 0 : i32
    return %c0_i32, %c0_i32_0 : i32, i32
  }
  func.func @transform_3(%arg0: i32) -> (i32, i32) {
    %c0_i32 = arith.constant 0 : i32
    %c0_i32_0 = arith.constant 0 : i32
    return %arg0, %c0_i32 : i32, i32
  }
}

</mosaic_0001>

<llo_original>
// kernel: transformer_forward.15
$region0: #{transformer_forward.15}
  #allocation0 [shape = 'u32[]', space=smem, size = 0x4, offset = 0x4, fixed_abs, tag = 'smem constant byte address 0x4 - core index']
  #allocation1 [shape = 'u32[72,128]{1,0:T(1,128)}', space=vmem, size = 0x9000, scoped, tag = 'internal scratch']
  %s0 = inlined_call_operand.vmem [shape: f32[24,32], index: 0, kind: input, shape index: {}]
  %s1 = inlined_call_operand.vmem [shape: f32[1,32], index: 1, kind: input, shape index: {}]
  %s2 = inlined_call_operand.vmem [shape: f32[1,32], index: 2, kind: input, shape index: {}]
  %s3 = inlined_call_operand.vmem [shape: f32[24,32], index: 3, kind: output, shape index: {}]
  %s4 = sld [smem:[#allocation0]]
  $region22: #{transformer_forward.15} parent=0
    _
  %s6 = ssub.s32 1, %s4
  %s7 = scalar_select 0, %s6, %s4
  // Predicated region
  $region2: #{transformer_forward.15} parent=0 // pred_check
    _
  $region3: #{transformer_forward.15} parent=0 // pred_check_branch
    %9 = sbr.rel (0) target = $region5
  $region4: #{transformer_forward.15} parent=0 // pred_region
    _
  $region5: #{transformer_forward.15} parent=0 // pred_fallthru
    _
  // Predicated region
  $region6: #{transformer_forward.15} parent=0 // pred_check
    _
  $region7: #{transformer_forward.15} parent=0 // pred_check_branch
    %11 = sbr.rel (0) target = $region9
  $region8: #{transformer_forward.15} parent=0 // pred_region
    _
  $region9: #{transformer_forward.15} parent=0 // pred_fallthru
    _
  // Predicated region
  $region10: #{transformer_forward.15} parent=0 // pred_check
    _
  $region11: #{transformer_forward.15} parent=0 // pred_check_branch
    %13 = sbr.rel (0) target = $region13
  $region12: #{transformer_forward.15} parent=0 // pred_region
    _
  $region13: #{transformer_forward.15} parent=0 // pred_fallthru
    _
  %v14 = vld [vmem:[%s0] sm:$0xff]
  %v15 = vld [vmem:[%s0 + $0x8] sm:$0xff]
  %v16 = vld [vmem:[%s0 + $0x10] sm:$0xff]
  %vm17 = vcmask 261120
  %v18 = vsel %vm17, %v14, 0.0
  %19 = vadd.xlane.f32.xlu0 %v18
  %v20 = vpop.xlane.xlu0 %19
  %v21 = vsel %vm17, %v15, 0.0
  %22 = vadd.xlane.f32.xlu0 %v21
  %v23 = vpop.xlane.xlu0 %22
  %v24 = vsel %vm17, %v16, 0.0
  %25 = vadd.xlane.f32.xlu0 %v24
  %v26 = vpop.xlane.xlu0 %25
  %v27 = vrcp.pop 32.0
  %v28 = vmul.f32 32.0, %v27
  %v29 = vsub.f32 1.0, %v28
  %v30 = vmul.f32 %v27, %v29
  %v31 = vadd.f32 %v27, %v30
  %vm32 = vweird.f32 %v27
  %v33 = vsel %vm32, %v27, %v31
  %v34 = vmul.f32 %v20, %v33
  %v35 = vmul.f32 %v23, %v33
  %v36 = vmul.f32 %v26, %v33
  %v37 = vsub.f32 %v14, %v34
  %v38 = vsub.f32 %v15, %v35
  %v39 = vsub.f32 %v16, %v36
  %v40 = vmul.f32 %v37, %v37
  %v41 = vmul.f32 %v38, %v38
  %v42 = vmul.f32 %v39, %v39
  %v43 = vsel %vm17, %v40, 0.0
  %44 = vadd.xlane.f32.xlu0 %v43
  %v45 = vpop.xlane.xlu0 %44
  %v46 = vsel %vm17, %v41, 0.0
  %47 = vadd.xlane.f32.xlu0 %v46
  %v48 = vpop.xlane.xlu0 %47
  %v49 = vsel %vm17, %v42, 0.0
  %50 = vadd.xlane.f32.xlu0 %v49
  %v51 = vpop.xlane.xlu0 %50
  %v52 = vmul.f32 %v45, %v33
  %v53 = vmul.f32 %v48, %v33
  %v54 = vmul.f32 %v51, %v33
  %v55 = vadd.f32 %v52, 1e-05
  %v56 = vadd.f32 %v53, 1e-05
  %v57 = vadd.f32 %v54, 1e-05
  %v58 = vrsqrt.pop %v55
  %v59 = vmul.f32 %v58, %v55
  %v60 = vmul.f32 %v59, %v58
  %v61 = vmul.f32 0.5, %v60
  %v62 = vsub.f32 1.5, %v61
  %v63 = vmul.f32 %v58, %v62
  %vm64 = vweird.f32 %v55
  %vm65 = vweird.f32 %v58
  %vm66 = vmor %vm64, %vm65
  %v67 = vsel %vm66, %v58, %v63
  %v68 = vrsqrt.pop %v56
  %v69 = vmul.f32 %v68, %v56
  %v70 = vmul.f32 %v69, %v68
  %v71 = vmul.f32 0.5, %v70
  %v72 = vsub.f32 1.5, %v71
  %v73 = vmul.f32 %v68, %v72
  %vm74 = vweird.f32 %v56
  %vm75 = vweird.f32 %v68
  %vm76 = vmor %vm74, %vm75
  %v77 = vsel %vm76, %v68, %v73
  %v78 = vrsqrt.pop %v57
  %v79 = vmul.f32 %v78, %v57
  %v80 = vmul.f32 %v79, %v78
  %v81 = vmul.f32 0.5, %v80
  %v82 = vsub.f32 1.5, %v81
  %v83 = vmul.f32 %v78, %v82
  %vm84 = vweird.f32 %v57
  %vm85 = vweird.f32 %v78
  %vm86 = vmor %vm84, %vm85
  %v87 = vsel %vm86, %v78, %v83
  %v88 = vmul.f32 %v37, %v67
  %v89 = vmul.f32 %v38, %v77
  %v90 = vmul.f32 %v39, %v87
  %v91 = vld [vmem:[%s1] sm:$0x1]
  %v93 = vperm.slane %v91, 0
  %v95 = vmul.f32 %v88, %v93
  %v96 = vmul.f32 %v89, %v93
  %v97 = vmul.f32 %v90, %v93
  %v98 = vld [vmem:[%s2] sm:$0x1]
  %v100 = vperm.slane %v98, 0
  %v102 = vadd.f32 %v95, %v100
  %v103 = vadd.f32 %v96, %v100
  %v104 = vadd.f32 %v97, %v100
  %105 = vst.msk [vmem:[%s3] sm:$0xff] %vm17, %v102
  %106 = vst.msk [vmem:[%s3 + $0x8] sm:$0xff] %vm17, %v103
  %107 = vst.msk [vmem:[%s3 + $0x10] sm:$0xff] %vm17, %v104
  // Predicated region
  $region14: #{transformer_forward.15} parent=0 // pred_check
    _
  $region15: #{transformer_forward.15} parent=0 // pred_check_branch
    %109 = sbr.rel (0) target = $region17
  $region16: #{transformer_forward.15} parent=0 // pred_region
    _
  $region17: #{transformer_forward.15} parent=0 // pred_fallthru
    _
  // Predicated region
  $region18: #{transformer_forward.15} parent=0 // pred_check
    _
  $region19: #{transformer_forward.15} parent=0 // pred_check_branch
    %111 = sbr.rel (0) target = $region21
  $region20: #{transformer_forward.15} parent=0 // pred_region
    _
  $region21: #{transformer_forward.15} parent=0 // pred_fallthru
    _

// kernel: transformer_forward.16
$region0: #{transformer_forward.16}
  #allocation0 [shape = 'u32[]', space=smem, size = 0x4, offset = 0x4, fixed_abs, tag = 'smem constant byte address 0x4 - core index']
  #allocation1 [shape = 'u32[72,128]{1,0:T(1,128)}', space=vmem, size = 0x9000, scoped, tag = 'internal scratch']
  #allocation2 [shape = 'f32[24,128]{1,0:T(8,128)}', space=vmem, size = 0x3000, scoped, tag = 'scratch operand']
  %s0 = inlined_call_operand.vmem [shape: f32[24,128], index: 0, kind: input, shape index: {}]
  %s1 = inlined_call_operand.vmem [shape: f32[128,128], index: 1, kind: input, shape index: {}]
  %s2 = inlined_call_operand.vmem [shape: f32[24,128], index: 2, kind: output, shape index: {}]
  %s3 = sld [smem:[#allocation0]]
  $region26: #{transformer_forward.16} parent=0
    _
  %s5 = ssub.s32 1, %s3
  %s6 = scalar_select 0, %s5, %s3
  // Predicated region
  $region2: #{transformer_forward.16} parent=0 // pred_check
    _
  $region3: #{transformer_forward.16} parent=0 // pred_check_branch
    %8 = sbr.rel (0) target = $region5
  $region4: #{transformer_forward.16} parent=0 // pred_region
    _
  $region5: #{transformer_forward.16} parent=0 // pred_fallthru
    _
  // Predicated region
  $region6: #{transformer_forward.16} parent=0 // pred_check
    _
  $region7: #{transformer_forward.16} parent=0 // pred_check_branch
    %10 = sbr.rel (0) target = $region9
  $region8: #{transformer_forward.16} parent=0 // pred_region
    _
  $region9: #{transformer_forward.16} parent=0 // pred_fallthru
    _
  %p11 = scmp.eq.s32.totalorder 0, 0
  // Predicated region
  $region10: #{transformer_forward.16} parent=0 // pred_check
    %p12 = pneg %p11
  $region11: #{transformer_forward.16} parent=0 // pred_check_branch
    %14 = sbr.rel (%p12) target = $region13
  $region12: #{transformer_forward.16} parent=0 // pred_region
    %15 = vst [vmem:[#allocation2] sm:$0xff] 0.0
    %16 = vst [vmem:[#allocation2 + $0x8] sm:$0xff] 0.0
    %17 = vst [vmem:[#allocation2 + $0x10] sm:$0xff] 0.0
  $region13: #{transformer_forward.16} parent=0 // pred_fallthru
    _
  %v18 = vld [vmem:[#allocation2] sm:$0xff]
  %v19 = vld [vmem:[#allocation2 + $0x8] sm:$0xff]
  %v20 = vld [vmem:[#allocation2 + $0x10] sm:$0xff]
  %v21 = vld [vmem:[%s0] sm:$0xff]
  %v22 = vld [vmem:[%s0 + $0x8] sm:$0xff]
  %v23 = vld [vmem:[%s0 + $0x10] sm:$0xff]
  %v24 = vld [vmem:[%s1] sm:$0xff]
  %v25 = vld [vmem:[%s1 + $0x8] sm:$0xff]
  %v26 = vld [vmem:[%s1 + $0x10] sm:$0xff]
  %v27 = vld [vmem:[%s1 + $0x18] sm:$0xff]
  %v28 = vld [vmem:[%s1 + $0x20] sm:$0xff]
  %v29 = vld [vmem:[%s1 + $0x28] sm:$0xff]
  %v30 = vld [vmem:[%s1 + $0x30] sm:$0xff]
  %v31 = vld [vmem:[%s1 + $0x38] sm:$0xff]
  %v32 = vld [vmem:[%s1 + $0x40] sm:$0xff]
  %v33 = vld [vmem:[%s1 + $0x48] sm:$0xff]
  %v34 = vld [vmem:[%s1 + $0x50] sm:$0xff]
  %v35 = vld [vmem:[%s1 + $0x58] sm:$0xff]
  %v36 = vld [vmem:[%s1 + $0x60] sm:$0xff]
  %v37 = vld [vmem:[%s1 + $0x68] sm:$0xff]
  %v38 = vld [vmem:[%s1 + $0x70] sm:$0xff]
  %v39 = vld [vmem:[%s1 + $0x78] sm:$0xff]
  %40 = vmatpush.msra.mxu0 %v39
  %41 = vmatpush.msra.mxu0 %v38
  %42 = vmatpush.msra.mxu0 %v37
  %43 = vmatpush.msra.mxu0 %v36
  %44 = vmatpush.msra.mxu0 %v35
  %45 = vmatpush.msra.mxu0 %v34
  %46 = vmatpush.msra.mxu0 %v33
  %47 = vmatpush.msra.mxu0 %v32
  %48 = vmatpush.msra.mxu0 %v31
  %49 = vmatpush.msra.mxu0 %v30
  %50 = vmatpush.msra.mxu0 %v29
  %51 = vmatpush.msra.mxu0 %v28
  %52 = vmatpush.msra.mxu0 %v27
  %53 = vmatpush.msra.mxu0 %v26
  %54 = vmatpush.msra.mxu0 %v25
  %55 = vmatpush.msra.mxu0 %v24
  %56 = vmatmul.f32.gmra.mxu0 %v21
  %v57 = vpop.f32.mrf.mxu0
  %v58 = vadd.f32 0.0, %v57
  %59 = vmatmul.f32.gmra.mxu0 %v22
  %v60 = vpop.f32.mrf.mxu0
  %v61 = vadd.f32 0.0, %v60
  %62 = vmatmul.f32.gmra.mxu0 %v23
  %v63 = vpop.f32.mrf.mxu0
  %v64 = vadd.f32 0.0, %v63
  %65 = vdwg.mxu0
  %v66 = vadd.f32 %v18, %v58
  %v67 = vadd.f32 %v19, %v61
  %v68 = vadd.f32 %v20, %v64
  %69 = vst [vmem:[#allocation2] sm:$0xff] %v66
  %70 = vst [vmem:[#allocation2 + $0x8] sm:$0xff] %v67
  %71 = vst [vmem:[#allocation2 + $0x10] sm:$0xff] %v68
  // Predicated region
  $region14: #{transformer_forward.16} parent=0 // pred_check
    %p72 = pneg %p11
  $region15: #{transformer_forward.16} parent=0 // pred_check_branch
    %74 = sbr.rel (%p72) target = $region17
  $region16: #{transformer_forward.16} parent=0 // pred_region
    %v75 = vld [vmem:[#allocation2] sm:$0xff]
    %v76 = vld [vmem:[#allocation2 + $0x8] sm:$0xff]
    %v77 = vld [vmem:[#allocation2 + $0x10] sm:$0xff]
    %78 = vst [vmem:[%s2] sm:$0xff] %v75
    %79 = vst [vmem:[%s2 + $0x8] sm:$0xff] %v76
    %80 = vst [vmem:[%s2 + $0x10] sm:$0xff] %v77
  $region17: #{transformer_forward.16} parent=0 // pred_fallthru
    _
  // Predicated region
  $region18: #{transformer_forward.16} parent=0 // pred_check
    _
  $region19: #{transformer_forward.16} parent=0 // pred_check_branch
    %82 = sbr.rel (0) target = $region21
  $region20: #{transformer_forward.16} parent=0 // pred_region
    _
  $region21: #{transformer_forward.16} parent=0 // pred_fallthru
    _
  // Predicated region
  $region22: #{transformer_forward.16} parent=0 // pred_check
    _
  $region23: #{transformer_forward.16} parent=0 // pred_check_branch
    %84 = sbr.rel (0) target = $region25
  $region24: #{transformer_forward.16} parent=0 // pred_region
    _
  $region25: #{transformer_forward.16} parent=0 // pred_fallthru
    _

// kernel: transformer_forward.18
$region0: #{transformer_forward.18}
  #allocation0 [shape = 'u32[]', space=smem, size = 0x4, offset = 0x4, fixed_abs, tag = 'smem constant byte address 0x4 - core index']
  #allocation1 [shape = 'u32[72,128]{1,0:T(1,128)}', space=vmem, size = 0x9000, scoped, tag = 'internal scratch']
  #allocation2 [shape = 'f32[24,128]{1,0:T(8,128)}', space=vmem, size = 0x3000, scoped, tag = 'scratch operand']
  %s0 = inlined_call_operand.vmem [shape: f32[24,128], index: 0, kind: input, shape index: {}]
  %s1 = inlined_call_operand.vmem [shape: f32[128,128], index: 1, kind: input, shape index: {}]
  %s2 = inlined_call_operand.vmem [shape: f32[1,128], index: 2, kind: input, shape index: {}]
  %s3 = inlined_call_operand.vmem [shape: f32[24,128], index: 3, kind: input, shape index: {}]
  %s4 = inlined_call_operand.vmem [shape: f32[24,128], index: 4, kind: output, shape index: {}]
  %s5 = sld [smem:[#allocation0]]
  $region34: #{transformer_forward.18} parent=0
    _
  %s7 = ssub.s32 1, %s5
  %s8 = scalar_select 0, %s7, %s5
  // Predicated region
  $region2: #{transformer_forward.18} parent=0 // pred_check
    _
  $region3: #{transformer_forward.18} parent=0 // pred_check_branch
    %10 = sbr.rel (0) target = $region5
  $region4: #{transformer_forward.18} parent=0 // pred_region
    _
  $region5: #{transformer_forward.18} parent=0 // pred_fallthru
    _
  // Predicated region
  $region6: #{transformer_forward.18} parent=0 // pred_check
    _
  $region7: #{transformer_forward.18} parent=0 // pred_check_branch
    %12 = sbr.rel (0) target = $region9
  $region8: #{transformer_forward.18} parent=0 // pred_region
    _
  $region9: #{transformer_forward.18} parent=0 // pred_fallthru
    _
  // Predicated region
  $region10: #{transformer_forward.18} parent=0 // pred_check
    _
  $region11: #{transformer_forward.18} parent=0 // pred_check_branch
    %14 = sbr.rel (0) target = $region13
  $region12: #{transformer_forward.18} parent=0 // pred_region
    _
  $region13: #{transformer_forward.18} parent=0 // pred_fallthru
    _
  // Predicated region
  $region14: #{transformer_forward.18} parent=0 // pred_check
    _
  $region15: #{transformer_forward.18} parent=0 // pred_check_branch
    %16 = sbr.rel (0) target = $region17
  $region16: #{transformer_forward.18} parent=0 // pred_region
    _
  $region17: #{transformer_forward.18} parent=0 // pred_fallthru
    _
  %p17 = scmp.eq.s32.totalorder 0, 0
  // Predicated region
  $region18: #{transformer_forward.18} parent=0 // pred_check
    %p18 = pneg %p17
  $region19: #{transformer_forward.18} parent=0 // pred_check_branch
    %20 = sbr.rel (%p18) target = $region21
  $region20: #{transformer_forward.18} parent=0 // pred_region
    %21 = vst [vmem:[#allocation2] sm:$0xff] 0.0
    %22 = vst [vmem:[#allocation2 + $0x8] sm:$0xff] 0.0
    %23 = vst [vmem:[#allocation2 + $0x10] sm:$0xff] 0.0
  $region21: #{transformer_forward.18} parent=0 // pred_fallthru
    _
  %v24 = vld [vmem:[#allocation2] sm:$0xff]
  %v25 = vld [vmem:[#allocation2 + $0x8] sm:$0xff]
  %v26 = vld [vmem:[#allocation2 + $0x10] sm:$0xff]
  %v27 = vld [vmem:[%s0] sm:$0xff]
  %v28 = vld [vmem:[%s0 + $0x8] sm:$0xff]
  %v29 = vld [vmem:[%s0 + $0x10] sm:$0xff]
  %v30 = vld [vmem:[%s1] sm:$0xff]
  %v31 = vld [vmem:[%s1 + $0x8] sm:$0xff]
  %v32 = vld [vmem:[%s1 + $0x10] sm:$0xff]
  %v33 = vld [vmem:[%s1 + $0x18] sm:$0xff]
  %v34 = vld [vmem:[%s1 + $0x20] sm:$0xff]
  %v35 = vld [vmem:[%s1 + $0x28] sm:$0xff]
  %v36 = vld [vmem:[%s1 + $0x30] sm:$0xff]
  %v37 = vld [vmem:[%s1 + $0x38] sm:$0xff]
  %v38 = vld [vmem:[%s1 + $0x40] sm:$0xff]
  %v39 = vld [vmem:[%s1 + $0x48] sm:$0xff]
  %v40 = vld [vmem:[%s1 + $0x50] sm:$0xff]
  %v41 = vld [vmem:[%s1 + $0x58] sm:$0xff]
  %v42 = vld [vmem:[%s1 + $0x60] sm:$0xff]
  %v43 = vld [vmem:[%s1 + $0x68] sm:$0xff]
  %v44 = vld [vmem:[%s1 + $0x70] sm:$0xff]
  %v45 = vld [vmem:[%s1 + $0x78] sm:$0xff]
  %46 = vmatpush.msra.mxu0 %v45
  %47 = vmatpush.msra.mxu0 %v44
  %48 = vmatpush.msra.mxu0 %v43
  %49 = vmatpush.msra.mxu0 %v42
  %50 = vmatpush.msra.mxu0 %v41
  %51 = vmatpush.msra.mxu0 %v40
  %52 = vmatpush.msra.mxu0 %v39
  %53 = vmatpush.msra.mxu0 %v38
  %54 = vmatpush.msra.mxu0 %v37
  %55 = vmatpush.msra.mxu0 %v36
  %56 = vmatpush.msra.mxu0 %v35
  %57 = vmatpush.msra.mxu0 %v34
  %58 = vmatpush.msra.mxu0 %v33
  %59 = vmatpush.msra.mxu0 %v32
  %60 = vmatpush.msra.mxu0 %v31
  %61 = vmatpush.msra.mxu0 %v30
  %62 = vmatmul.f32.gmra.mxu0 %v27
  %v63 = vpop.f32.mrf.mxu0
  %v64 = vadd.f32 0.0, %v63
  %65 = vmatmul.f32.gmra.mxu0 %v28
  %v66 = vpop.f32.mrf.mxu0
  %v67 = vadd.f32 0.0, %v66
  %68 = vmatmul.f32.gmra.mxu0 %v29
  %v69 = vpop.f32.mrf.mxu0
  %v70 = vadd.f32 0.0, %v69
  %71 = vdwg.mxu0
  %v72 = vadd.f32 %v24, %v64
  %v73 = vadd.f32 %v25, %v67
  %v74 = vadd.f32 %v26, %v70
  %75 = vst [vmem:[#allocation2] sm:$0xff] %v72
  %76 = vst [vmem:[#allocation2 + $0x8] sm:$0xff] %v73
  %77 = vst [vmem:[#allocation2 + $0x10] sm:$0xff] %v74
  // Predicated region
  $region22: #{transformer_forward.18} parent=0 // pred_check
    %p78 = pneg %p17
  $region23: #{transformer_forward.18} parent=0 // pred_check_branch
    %80 = sbr.rel (%p78) target = $region25
  $region24: #{transformer_forward.18} parent=0 // pred_region
    %v81 = vld [vmem:[#allocation2] sm:$0xff]
    %v82 = vld [vmem:[#allocation2 + $0x8] sm:$0xff]
    %v83 = vld [vmem:[#allocation2 + $0x10] sm:$0xff]
    %v84 = vld [vmem:[%s2] sm:$0x1]
    %v86 = vperm.slane %v84, 0
    %v88 = vadd.f32 %v81, %v86
    %v89 = vadd.f32 %v82, %v86
    %v90 = vadd.f32 %v83, %v86
    %v91 = vld [vmem:[%s3] sm:$0xff]
    %v92 = vld [vmem:[%s3 + $0x8] sm:$0xff]
    %v93 = vld [vmem:[%s3 + $0x10] sm:$0xff]
    %v94 = vadd.f32 %v88, %v91
    %v95 = vadd.f32 %v89, %v92
    %v96 = vadd.f32 %v90, %v93
    %97 = vst [vmem:[%s4] sm:$0xff] %v94
    %98 = vst [vmem:[%s4 + $0x8] sm:$0xff] %v95
    %99 = vst [vmem:[%s4 + $0x10] sm:$0xff] %v96
  $region25: #{transformer_forward.18} parent=0 // pred_fallthru
    _
  // Predicated region
  $region26: #{transformer_forward.18} parent=0 // pred_check
    _
  $region27: #{transformer_forward.18} parent=0 // pred_check_branch
    %101 = sbr.rel (0) target = $region29
  $region28: #{transformer_forward.18} parent=0 // pred_region
    _
  $region29: #{transformer_forward.18} parent=0 // pred_fallthru
    _
  // Predicated region
  $region30: #{transformer_forward.18} parent=0 // pred_check
    _
  $region31: #{transformer_forward.18} parent=0 // pred_check_branch
    %103 = sbr.rel (0) target = $region33
  $region32: #{transformer_forward.18} parent=0 // pred_region
    _
  $region33: #{transformer_forward.18} parent=0 // pred_fallthru
    _

// kernel: transformer_forward.20
$region0: #{transformer_forward.20}
  #allocation0 [shape = 'u32[]', space=smem, size = 0x4, offset = 0x4, fixed_abs, tag = 'smem constant byte address 0x4 - core index']
  #allocation1 [shape = 'u32[72,128]{1,0:T(1,128)}', space=vmem, size = 0x9000, scoped, tag = 'internal scratch']
  #allocation2 [shape = 'f32[24,128]{1,0:T(8,128)}', space=vmem, size = 0x3000, scoped, tag = 'scratch operand']
  #allocation3 [shape = 'f32[24,128]{1,0:T(8,128)}', space=vmem, size = 0x3000, scoped, tag = 'scratch operand']
  %s0 = inlined_call_operand.vmem [shape: f32[24,128], index: 0, kind: input, shape index: {}]
  %s1 = inlined_call_operand.vmem [shape: f32[128,128], index: 1, kind: input, shape index: {}]
  %s2 = inlined_call_operand.vmem [shape: f32[128,128], index: 2, kind: input, shape index: {}]
  %s3 = inlined_call_operand.vmem [shape: f32[1,128], index: 3, kind: input, shape index: {}]
  %s4 = inlined_call_operand.vmem [shape: f32[1,128], index: 4, kind: input, shape index: {}]
  %s5 = inlined_call_operand.vmem [shape: f32[24,128], index: 5, kind: output, shape index: {}]
  %s6 = sld [smem:[#allocation0]]
  $region38: #{transformer_forward.20} parent=0
    _
  %s8 = ssub.s32 1, %s6
  %s9 = scalar_select 0, %s8, %s6
  // Predicated region
  $region2: #{transformer_forward.20} parent=0 // pred_check
    _
  $region3: #{transformer_forward.20} parent=0 // pred_check_branch
    %11 = sbr.rel (0) target = $region5
  $region4: #{transformer_forward.20} parent=0 // pred_region
    _
  $region5: #{transformer_forward.20} parent=0 // pred_fallthru
    _
  // Predicated region
  $region6: #{transformer_forward.20} parent=0 // pred_check
    _
  $region7: #{transformer_forward.20} parent=0 // pred_check_branch
    %13 = sbr.rel (0) target = $region9
  $region8: #{transformer_forward.20} parent=0 // pred_region
    _
  $region9: #{transformer_forward.20} parent=0 // pred_fallthru
    _
  // Predicated region
  $region10: #{transformer_forward.20} parent=0 // pred_check
    _
  $region11: #{transformer_forward.20} parent=0 // pred_check_branch
    %15 = sbr.rel (0) target = $region13
  $region12: #{transformer_forward.20} parent=0 // pred_region
    _
  $region13: #{transformer_forward.20} parent=0 // pred_fallthru
    _
  // Predicated region
  $region14: #{transformer_forward.20} parent=0 // pred_check
    _
  $region15: #{transformer_forward.20} parent=0 // pred_check_branch
    %17 = sbr.rel (0) target = $region17
  $region16: #{transformer_forward.20} parent=0 // pred_region
    _
  $region17: #{transformer_forward.20} parent=0 // pred_fallthru
    _
  // Predicated region
  $region18: #{transformer_forward.20} parent=0 // pred_check
    _
  $region19: #{transformer_forward.20} parent=0 // pred_check_branch
    %19 = sbr.rel (0) target = $region21
  $region20: #{transformer_forward.20} parent=0 // pred_region
    _
  $region21: #{transformer_forward.20} parent=0 // pred_fallthru
    _
  %p20 = scmp.eq.s32.totalorder 0, 0
  // Predicated region
  $region22: #{transformer_forward.20} parent=0 // pred_check
    %p21 = pneg %p20
  $region23: #{transformer_forward.20} parent=0 // pred_check_branch
    %23 = sbr.rel (%p21) target = $region25
  $region24: #{transformer_forward.20} parent=0 // pred_region
    %24 = vst [vmem:[#allocation2] sm:$0xff] 0.0
    %25 = vst [vmem:[#allocation2 + $0x8] sm:$0xff] 0.0
    %26 = vst [vmem:[#allocation2 + $0x10] sm:$0xff] 0.0
    %27 = vst [vmem:[#allocation3] sm:$0xff] 0.0
    %28 = vst [vmem:[#allocation3 + $0x8] sm:$0xff] 0.0
    %29 = vst [vmem:[#allocation3 + $0x10] sm:$0xff] 0.0
  $region25: #{transformer_forward.20} parent=0 // pred_fallthru
    _
  %v30 = vld [vmem:[%s0] sm:$0xff]
  %v31 = vld [vmem:[%s0 + $0x8] sm:$0xff]
  %v32 = vld [vmem:[%s0 + $0x10] sm:$0xff]
  %v33 = vld [vmem:[#allocation2] sm:$0xff]
  %v34 = vld [vmem:[#allocation2 + $0x8] sm:$0xff]
  %v35 = vld [vmem:[#allocation2 + $0x10] sm:$0xff]
  %v36 = vld [vmem:[%s1] sm:$0xff]
  %v37 = vld [vmem:[%s1 + $0x8] sm:$0xff]
  %v38 = vld [vmem:[%s1 + $0x10] sm:$0xff]
  %v39 = vld [vmem:[%s1 + $0x18] sm:$0xff]
  %v40 = vld [vmem:[%s1 + $0x20] sm:$0xff]
  %v41 = vld [vmem:[%s1 + $0x28] sm:$0xff]
  %v42 = vld [vmem:[%s1 + $0x30] sm:$0xff]
  %v43 = vld [vmem:[%s1 + $0x38] sm:$0xff]
  %v44 = vld [vmem:[%s1 + $0x40] sm:$0xff]
  %v45 = vld [vmem:[%s1 + $0x48] sm:$0xff]
  %v46 = vld [vmem:[%s1 + $0x50] sm:$0xff]
  %v47 = vld [vmem:[%s1 + $0x58] sm:$0xff]
  %v48 = vld [vmem:[%s1 + $0x60] sm:$0xff]
  %v49 = vld [vmem:[%s1 + $0x68] sm:$0xff]
  %v50 = vld [vmem:[%s1 + $0x70] sm:$0xff]
  %v51 = vld [vmem:[%s1 + $0x78] sm:$0xff]
  %52 = vmatpush.msra.mxu0 %v51
  %53 = vmatpush.msra.mxu0 %v50
  %54 = vmatpush.msra.mxu0 %v49
  %55 = vmatpush.msra.mxu0 %v48
  %56 = vmatpush.msra.mxu0 %v47
  %57 = vmatpush.msra.mxu0 %v46
  %58 = vmatpush.msra.mxu0 %v45
  %59 = vmatpush.msra.mxu0 %v44
  %60 = vmatpush.msra.mxu0 %v43
  %61 = vmatpush.msra.mxu0 %v42
  %62 = vmatpush.msra.mxu0 %v41
  %63 = vmatpush.msra.mxu0 %v40
  %64 = vmatpush.msra.mxu0 %v39
  %65 = vmatpush.msra.mxu0 %v38
  %66 = vmatpush.msra.mxu0 %v37
  %67 = vmatpush.msra.mxu0 %v36
  %68 = vmatmul.f32.gmra.mxu0 %v30
  %v69 = vpop.f32.mrf.mxu0
  %v70 = vadd.f32 0.0, %v69
  %71 = vmatmul.f32.gmra.mxu0 %v31
  %v72 = vpop.f32.mrf.mxu0
  %v73 = vadd.f32 0.0, %v72
  %74 = vmatmul.f32.gmra.mxu0 %v32
  %v75 = vpop.f32.mrf.mxu0
  %v76 = vadd.f32 0.0, %v75
  %77 = vdwg.mxu0
  %v78 = vadd.f32 %v33, %v70
  %v79 = vadd.f32 %v34, %v73
  %v80 = vadd.f32 %v35, %v76
  %81 = vst [vmem:[#allocation2] sm:$0xff] %v78
  %82 = vst [vmem:[#allocation2 + $0x8] sm:$0xff] %v79
  %83 = vst [vmem:[#allocation2 + $0x10] sm:$0xff] %v80
  %v84 = vld [vmem:[#allocation3] sm:$0xff]
  %v85 = vld [vmem:[#allocation3 + $0x8] sm:$0xff]
  %v86 = vld [vmem:[#allocation3 + $0x10] sm:$0xff]
  %v87 = vld [vmem:[%s2] sm:$0xff]
  %v88 = vld [vmem:[%s2 + $0x8] sm:$0xff]
  %v89 = vld [vmem:[%s2 + $0x10] sm:$0xff]
  %v90 = vld [vmem:[%s2 + $0x18] sm:$0xff]
  %v91 = vld [vmem:[%s2 + $0x20] sm:$0xff]
  %v92 = vld [vmem:[%s2 + $0x28] sm:$0xff]
  %v93 = vld [vmem:[%s2 + $0x30] sm:$0xff]
  %v94 = vld [vmem:[%s2 + $0x38] sm:$0xff]
  %v95 = vld [vmem:[%s2 + $0x40] sm:$0xff]
  %v96 = vld [vmem:[%s2 + $0x48] sm:$0xff]
  %v97 = vld [vmem:[%s2 + $0x50] sm:$0xff]
  %v98 = vld [vmem:[%s2 + $0x58] sm:$0xff]
  %v99 = vld [vmem:[%s2 + $0x60] sm:$0xff]
  %v100 = vld [vmem:[%s2 + $0x68] sm:$0xff]
  %v101 = vld [vmem:[%s2 + $0x70] sm:$0xff]
  %v102 = vld [vmem:[%s2 + $0x78] sm:$0xff]
  %103 = vmatpush.msra.mxu0 %v102
  %104 = vmatpush.msra.mxu0 %v101
  %105 = vmatpush.msra.mxu0 %v100
  %106 = vmatpush.msra.mxu0 %v99
  %107 = vmatpush.msra.mxu0 %v98
  %108 = vmatpush.msra.mxu0 %v97
  %109 = vmatpush.msra.mxu0 %v96
  %110 = vmatpush.msra.mxu0 %v95
  %111 = vmatpush.msra.mxu0 %v94
  %112 = vmatpush.msra.mxu0 %v93
  %113 = vmatpush.msra.mxu0 %v92
  %114 = vmatpush.msra.mxu0 %v91
  %115 = vmatpush.msra.mxu0 %v90
  %116 = vmatpush.msra.mxu0 %v89
  %117 = vmatpush.msra.mxu0 %v88
  %118 = vmatpush.msra.mxu0 %v87
  %119 = vmatmul.f32.gmra.mxu0 %v30
  %v120 = vpop.f32.mrf.mxu0
  %v121 = vadd.f32 0.0, %v120
  %122 = vmatmul.f32.gmra.mxu0 %v31
  %v123 = vpop.f32.mrf.mxu0
  %v124 = vadd.f32 0.0, %v123
  %125 = vmatmul.f32.gmra.mxu0 %v32
  %v126 = vpop.f32.mrf.mxu0
  %v127 = vadd.f32 0.0, %v126
  %128 = vdwg.mxu0
  %v129 = vadd.f32 %v84, %v121
  %v130 = vadd.f32 %v85, %v124
  %v131 = vadd.f32 %v86, %v127
  %132 = vst [vmem:[#allocation3] sm:$0xff] %v129
  %133 = vst [vmem:[#allocation3 + $0x8] sm:$0xff] %v130
  %134 = vst [vmem:[#allocation3 + $0x10] sm:$0xff] %v131
  // Predicated region
  $region26: #{transformer_forward.20} parent=0 // pred_check
    %p135 = pneg %p20
  $region27: #{transformer_forward.20} parent=0 // pred_check_branch
    %137 = sbr.rel (%p135) target = $region29
  $region28: #{transformer_forward.20} parent=0 // pred_region
    %v138 = vld [vmem:[#allocation2] sm:$0xff]
    %v139 = vld [vmem:[#allocation2 + $0x8] sm:$0xff]
    %v140 = vld [vmem:[#allocation2 + $0x10] sm:$0xff]
    %v141 = vld [vmem:[%s3] sm:$0x1]
    %v143 = vperm.slane %v141, 0
    %v145 = vadd.f32 %v138, %v143
    %v146 = vadd.f32 %v139, %v143
    %v147 = vadd.f32 %v140, %v143
    %v148 = vld [vmem:[#allocation3] sm:$0xff]
    %v149 = vld [vmem:[#allocation3 + $0x8] sm:$0xff]
    %v150 = vld [vmem:[#allocation3 + $0x10] sm:$0xff]
    %v151 = vld [vmem:[%s4] sm:$0x1]
    %v153 = vperm.slane %v151, 0
    %v155 = vadd.f32 %v148, %v153
    %v156 = vadd.f32 %v149, %v153
    %v157 = vadd.f32 %v150, %v153
    %v158 = vmul.f32 %v155, 0.5
    %v159 = vmul.f32 %v156, 0.5
    %v160 = vmul.f32 %v157, 0.5
    %v161 = vmul.f32 %v155, 0.044715
    %v162 = vmul.f32 %v156, 0.044715
    %v163 = vmul.f32 %v157, 0.044715
    %v164 = vmul.f32 %v161, %v155
    %v165 = vmul.f32 %v162, %v156
    %v166 = vmul.f32 %v163, %v157
    %v167 = vmul.f32 %v164, %v155
    %v168 = vmul.f32 %v165, %v156
    %v169 = vmul.f32 %v166, %v157
    %v170 = vadd.f32 %v155, %v167
    %v171 = vadd.f32 %v156, %v168
    %v172 = vadd.f32 %v157, %v169
    %v173 = vmul.f32 %v170, 0.7978846
    %v174 = vmul.f32 %v171, 0.7978846
    %v175 = vmul.f32 %v172, 0.7978846
    %v176 = vtanh.pop %v173
    %v177 = vtanh.pop %v174
    %v178 = vtanh.pop %v175
    %v179 = vadd.f32 %v176, 1.0
    %v180 = vadd.f32 %v177, 1.0
    %v181 = vadd.f32 %v178, 1.0
    %v182 = vmul.f32 %v158, %v179
    %v183 = vmul.f32 %v159, %v180
    %v184 = vmul.f32 %v160, %v181
    %v185 = vmul.f32 %v145, %v182
    %v186 = vmul.f32 %v146, %v183
    %v187 = vmul.f32 %v147, %v184
    %188 = vst [vmem:[%s5] sm:$0xff] %v185
    %189 = vst [vmem:[%s5 + $0x8] sm:$0xff] %v186
    %190 = vst [vmem:[%s5 + $0x10] sm:$0xff] %v187
  $region29: #{transformer_forward.20} parent=0 // pred_fallthru
    _
  // Predicated region
  $region30: #{transformer_forward.20} parent=0 // pred_check
    _
  $region31: #{transformer_forward.20} parent=0 // pred_check_branch
    %192 = sbr.rel (0) target = $region33
  $region32: #{transformer_forward.20} parent=0 // pred_region
    _
  $region33: #{transformer_forward.20} parent=0 // pred_fallthru
    _
  // Predicated region
  $region34: #{transformer_forward.20} parent=0 // pred_check
    _
  $region35: #{transformer_forward.20} parent=0 // pred_check_branch
    %194 = sbr.rel (0) target = $region37
  $region36: #{transformer_forward.20} parent=0 // pred_region
    _
  $region37: #{transformer_forward.20} parent=0 // pred_fallthru
    _

// kernel: transformer_forward.17
$region0: #{transformer_forward.17}
  #allocation0 [shape = 'u32[]', space=smem, size = 0x4, offset = 0x4, fixed_abs, tag = 'smem constant byte address 0x4 - core index']
  #allocation1 [shape = 'u32[72,128]{1,0:T(1,128)}', space=vmem, size = 0x9000, scoped, tag = 'internal scratch']
  #allocation2 [shape = 'f32[4,16,1]{2,1,0:T(8,128)}', space=vmem, size = 0x8000, scoped, tag = 'scratch operand']
  #allocation3 [shape = 'f32[4,16,1]{2,1,0:T(8,128)}', space=vmem, size = 0x8000, scoped, tag = 'scratch operand']
  #allocation4 [shape = 'f32[4,16,8]{2,1,0:T(8,128)}', space=vmem, size = 0x8000, scoped, tag = 'scratch operand']
  %s0 = inlined_call_operand.vmem [shape: f32[2,1,128], index: 0, kind: input, shape index: {}]
  %s1 = inlined_call_operand.vmem [shape: f32[2,4,16,8], index: 1, kind: input, shape index: {}]
  %s2 = inlined_call_operand.vmem [shape: f32[2,4,128,8], index: 2, kind: input, shape index: {}]
  %s3 = inlined_call_operand.vmem [shape: f32[2,4,128,8], index: 3, kind: input, shape index: {}]
  %s4 = inlined_call_operand.vmem [shape: f32[2,4,16,8], index: 4, kind: output, shape index: {}]
  %s5 = sld [smem:[#allocation0]]
  $region57: #{transformer_forward.17} parent=0
    _
  %s7 = ssub.s32 1, %s5
  %s8 = scalar_select 0, %s7, %s5
  loop: start=0, step=1, limit=4
  $region2: #{transformer_forward.17} parent=0 // loop_pre_header
    _
  $region3: #{transformer_forward.17} parent=0 // loop_header
    %s10 = sphi 0, %s14
    %p11 = scmp.ge.s32.totalorder %s10, 4
    %s17 = sphi 0, %s36
    %s18 = sphi 0, %s32
    %s19 = sphi 0, %s28
    %s20 = sphi 0, %s17
    %s21 = sphi 0, %s18
    %s22 = sphi 0, %s19
    %s23 = sphi 0, %s20
    %s24 = sphi 0, %s21
    %s25 = sphi 0, %s22
    %s41 = sphi 0, %s43
    %s44 = sphi 0, %s41
    %s45 = sphi 0, %s44
    %s61 = sphi 0, %s45
    %s69 = sphi 0, %s71
    %s72 = sphi 0, %s69
    %s73 = sphi 0, %s72
    %s89 = sphi 0, %s73
    %s97 = sphi 0, %s99
    %s100 = sphi 0, %s97
    %s101 = sphi 0, %s100
    %s117 = sphi 0, %s101
    %s125 = sphi 0, %s127
    %s128 = sphi 0, %s125
    %s129 = sphi 0, %s128
    %s145 = sphi 0, %s129
    %s153 = sphi 0, %s155
    %s156 = sphi 0, %s153
    %s157 = sphi 0, %s156
    %s173 = sphi 0, %s157
  $region4: #{transformer_forward.17} parent=0 // loop_header_branch
    %13 = sbr.rel (%p11) target = $region8
  $region5: #{transformer_forward.17} parent=0 // loop_body
    %s15 = ssub.s32 %s10, 1
    %s16 = ssub.s32 %s10, 2
    %s26 = sadd.s32 1, %s19
    %p27 = scmp.ge.s32.totalorder %s26, 1
    %s28 = scalar_select %p27, 0, %s26
    %s29 = sadd.s32 1, %s18
    %s30 = scalar_select %p27, %s29, %s18
    %p31 = scmp.ge.s32.totalorder %s30, 1
    %s32 = scalar_select %p31, 0, %s30
    %s33 = sadd.s32 1, %s17
    %s34 = scalar_select %p31, %s33, %s17
    %p35 = scmp.ge.s32.totalorder %s34, 2
    %s36 = scalar_select %p35, 0, %s34
    %s37 = ssub.s32 %s17, %s36
    %s38 = ssub.s32 %s19, %s28
    %s39 = sor.u32 %s37, %s38
    %p40 = scmp.eq.s32.totalorder %s39, 0
    %s42 = sadd.s32 %s41, 1
    %s43 = scalar_select %p40, %s41, %s42
    %p46 = pneg %p40
    %p47 = scmp.eq.s32.totalorder %s10, 1
    %p48 = por %p46, %p47
    %p49 = scmp.ne.s32.totalorder %s41, %s44
    %p50 = scmp.eq.s32.totalorder %s10, 0
    %p51 = por %p49, %p50
    %p52 = scmp.ne.s32.totalorder %s41, %s44
    %p53 = scmp.eq.s32.totalorder %s15, 1
    %p54 = por %p52, %p53
    %p55 = scmp.ne.s32.totalorder %s44, %s45
    %p56 = scmp.eq.s32.totalorder %s15, 0
    %p57 = por %p55, %p56
    %p58 = scmp.ne.s32.totalorder %s44, %s45
    %p59 = scmp.eq.s32.totalorder %s16, 1
    %p60 = por %p58, %p59
    %p62 = scmp.ne.s32.totalorder %s45, %s61
    %p63 = scmp.eq.s32.totalorder %s16, 0
    %p64 = por %p62, %p63
    %s65 = ssub.s32 %s17, %s36
    %s66 = ssub.s32 %s18, %s32
    %s67 = sor.u32 %s65, %s66
    %p68 = scmp.eq.s32.totalorder %s67, 0
    %s70 = sadd.s32 %s69, 1
    %s71 = scalar_select %p68, %s69, %s70
    %p74 = pneg %p68
    %p75 = scmp.eq.s32.totalorder %s10, 1
    %p76 = por %p74, %p75
    %p77 = scmp.ne.s32.totalorder %s69, %s72
    %p78 = scmp.eq.s32.totalorder %s10, 0
    %p79 = por %p77, %p78
    %p80 = scmp.ne.s32.totalorder %s69, %s72
    %p81 = scmp.eq.s32.totalorder %s15, 1
    %p82 = por %p80, %p81
    %p83 = scmp.ne.s32.totalorder %s72, %s73
    %p84 = scmp.eq.s32.totalorder %s15, 0
    %p85 = por %p83, %p84
    %p86 = scmp.ne.s32.totalorder %s72, %s73
    %p87 = scmp.eq.s32.totalorder %s16, 1
    %p88 = por %p86, %p87
    %p90 = scmp.ne.s32.totalorder %s73, %s89
    %p91 = scmp.eq.s32.totalorder %s16, 0
    %p92 = por %p90, %p91
    %s93 = ssub.s32 %s17, %s36
    %s94 = ssub.s32 %s19, %s28
    %s95 = sor.u32 %s93, %s94
    %p96 = scmp.eq.s32.totalorder %s95, 0
    %s98 = sadd.s32 %s97, 1
    %s99 = scalar_select %p96, %s97, %s98
    %p102 = pneg %p96
    %p103 = scmp.eq.s32.totalorder %s10, 1
    %p104 = por %p102, %p103
    %p105 = scmp.ne.s32.totalorder %s97, %s100
    %p106 = scmp.eq.s32.totalorder %s10, 0
    %p107 = por %p105, %p106
    %p108 = scmp.ne.s32.totalorder %s97, %s100
    %p109 = scmp.eq.s32.totalorder %s15, 1
    %p110 = por %p108, %p109
    %p111 = scmp.ne.s32.totalorder %s100, %s101
    %p112 = scmp.eq.s32.totalorder %s15, 0
    %p113 = por %p111, %p112
    %p114 = scmp.ne.s32.totalorder %s100, %s101
    %p115 = scmp.eq.s32.totalorder %s16, 1
    %p116 = por %p114, %p115
    %p118 = scmp.ne.s32.totalorder %s101, %s117
    %p119 = scmp.eq.s32.totalorder %s16, 0
    %p120 = por %p118, %p119
    %s121 = ssub.s32 %s17, %s36
    %s122 = ssub.s32 %s19, %s28
    %s123 = sor.u32 %s121, %s122
    %p124 = scmp.eq.s32.totalorder %s123, 0
    %s126 = sadd.s32 %s125, 1
    %s127 = scalar_select %p124, %s125, %s126
    %p130 = pneg %p124
    %p131 = scmp.eq.s32.totalorder %s10, 1
    %p132 = por %p130, %p131
    %p133 = scmp.ne.s32.totalorder %s125, %s128
    %p134 = scmp.eq.s32.totalorder %s10, 0
    %p135 = por %p133, %p134
    %p136 = scmp.ne.s32.totalorder %s125, %s128
    %p137 = scmp.eq.s32.totalorder %s15, 1
    %p138 = por %p136, %p137
    %p139 = scmp.ne.s32.totalorder %s128, %s129
    %p140 = scmp.eq.s32.totalorder %s15, 0
    %p141 = por %p139, %p140
    %p142 = scmp.ne.s32.totalorder %s128, %s129
    %p143 = scmp.eq.s32.totalorder %s16, 1
    %p144 = por %p142, %p143
    %p146 = scmp.ne.s32.totalorder %s129, %s145
    %p147 = scmp.eq.s32.totalorder %s16, 0
    %p148 = por %p146, %p147
    %s149 = ssub.s32 %s17, %s36
    %s150 = ssub.s32 %s18, %s32
    %s151 = sor.u32 %s149, %s150
    %p152 = scmp.eq.s32.totalorder %s151, 0
    %s154 = sadd.s32 %s153, 1
    %s155 = scalar_select %p152, %s153, %s154
    %p158 = pneg %p152
    %p159 = scmp.eq.s32.totalorder %s10, 1
    %p160 = por %p158, %p159
    %p161 = scmp.ne.s32.totalorder %s153, %s156
    %p162 = scmp.eq.s32.totalorder %s10, 0
    %p163 = por %p161, %p162
    %p164 = scmp.ne.s32.totalorder %s153, %s156
    %p165 = scmp.eq.s32.totalorder %s15, 1
    %p166 = por %p164, %p165
    %p167 = scmp.ne.s32.totalorder %s156, %s157
    %p168 = scmp.eq.s32.totalorder %s15, 0
    %p169 = por %p167, %p168
    %p170 = scmp.ne.s32.totalorder %s156, %s157
    %p171 = scmp.eq.s32.totalorder %s16, 1
    %p172 = por %p170, %p171
    %p174 = scmp.ne.s32.totalorder %s157, %s173
    %p175 = scmp.eq.s32.totalorder %s16, 0
    %p176 = por %p174, %p175
    %p177 = scmp.le.s32.totalorder 1, %s10
    %p178 = scmp.lt.s32.totalorder %s10, 3
    %p179 = pnand %p177, %p178
    %p180 = pneg %p179
    // Predicated region
    $region9: #{transformer_forward.17} parent=5 // pred_check
      _
    $region10: #{transformer_forward.17} parent=5 // pred_check_branch
      %182 = sbr.rel (%p179) target = $region12
    $region11: #{transformer_forward.17} parent=5 // pred_region
      %s183 = ssub.s32 %s10, 1
    $region12: #{transformer_forward.17} parent=5 // pred_fallthru
      _
    %p184 = scmp.lt.s32.totalorder %s10, 2
    // Predicated region
    $region13: #{transformer_forward.17} parent=5 // pred_check
      %p185 = pneg %p184
    $region14: #{transformer_forward.17} parent=5 // pred_check_branch
      %187 = sbr.rel (%p185) target = $region16
    $region15: #{transformer_forward.17} parent=5 // pred_region
      // Predicated region
      $region17: #{transformer_forward.17} parent=15 // pred_check
        %p188 = pneg %p51
      $region18: #{transformer_forward.17} parent=15 // pred_check_branch
        %190 = sbr.rel (%p188) target = $region20
      $region19: #{transformer_forward.17} parent=15 // pred_region
        %p191 = scmp.lt.s32.totalorder %s17, 1
        %s192 = scalar_select %p191, %s17, 1
        %p193 = scmp.lt.s32.totalorder %s19, 0
        %s194 = scalar_select %p193, %s19, 0
        %s195 = sadd.s32 %s194, %s192
        %s196 = scalar_lea.vmem %s0, %s195
      $region20: #{transformer_forward.17} parent=15 // pred_fallthru
        _
      // Predicated region
      $region21: #{transformer_forward.17} parent=15 // pred_check
        %p197 = pneg %p79
      $region22: #{transformer_forward.17} parent=15 // pred_check_branch
        %199 = sbr.rel (%p197) target = $region24
      $region23: #{transformer_forward.17} parent=15 // pred_region
        %s200 = smul.u32 2, %s18
        %p201 = scmp.lt.s32.totalorder %s17, 1
        %s202 = scalar_select %p201, %s17, 1
        %p203 = scmp.lt.s32.totalorder %s200, 1
        %s204 = scalar_select %p203, %s200, 1
        %s205 = smul.addr %s202, 8
        %s206 = sadd.s32 %s204, %s205
        %s207 = smul.addr %s206, 8
        %s208 = scalar_lea.vmem %s1, %s207
        %s209 = smul.u32 2, %s18
      $region24: #{transformer_forward.17} parent=15 // pred_fallthru
        _
      // Predicated region
      $region25: #{transformer_forward.17} parent=15 // pred_check
        %p210 = pneg %p107
      $region26: #{transformer_forward.17} parent=15 // pred_check_branch
        %212 = sbr.rel (%p210) target = $region28
      $region27: #{transformer_forward.17} parent=15 // pred_region
        %s213 = smul.u32 16, %s19
        %p214 = scmp.lt.s32.totalorder %s17, 1
        %s215 = scalar_select %p214, %s17, 1
        %p216 = scmp.lt.s32.totalorder %s213, 15
        %s217 = scalar_select %p216, %s213, 15
        %s218 = smul.addr %s215, 64
        %s219 = sadd.s32 %s217, %s218
        %s220 = smul.addr %s219, 8
        %s221 = scalar_lea.vmem %s2, %s220
        %s222 = smul.u32 16, %s19
      $region28: #{transformer_forward.17} parent=15 // pred_fallthru
        _
      // Predicated region
      $region29: #{transformer_forward.17} parent=15 // pred_check
        %p223 = pneg %p135
      $region30: #{transformer_forward.17} parent=15 // pred_check_branch
        %225 = sbr.rel (%p223) target = $region32
      $region31: #{transformer_forward.17} parent=15 // pred_region
        %s226 = smul.u32 16, %s19
        %p227 = scmp.lt.s32.totalorder %s17, 1
        %s228 = scalar_select %p227, %s17, 1
        %p229 = scmp.lt.s32.totalorder %s226, 15
        %s230 = scalar_select %p229, %s226, 15
        %s231 = smul.addr %s228, 64
        %s232 = sadd.s32 %s230, %s231
        %s233 = smul.addr %s232, 8
        %s234 = scalar_lea.vmem %s3, %s233
        %s235 = smul.u32 16, %s19
      $region32: #{transformer_forward.17} parent=15 // pred_fallthru
        _
    $region16: #{transformer_forward.17} parent=5 // pred_fallthru
      _
    %p236 = scmp.le.s32.totalorder 1, %s10
    %p237 = scmp.lt.s32.totalorder %s10, 3
    %p238 = pnand %p236, %p237
    %p239 = pneg %p238
    // Predicated region
    $region33: #{transformer_forward.17} parent=5 // pred_check
      _
    $region34: #{transformer_forward.17} parent=5 // pred_check_branch
      %241 = sbr.rel (%p238) target = $region36
    $region35: #{transformer_forward.17} parent=5 // pred_region
      %s242 = ssub.s32 %s10, 1
      %p243 = scmp.lt.s32.totalorder %s20, 1
      %s244 = scalar_select %p243, %s20, 1
      %p245 = scmp.lt.s32.totalorder %s22, 0
      %s246 = scalar_select %p245, %s22, 0
      %s247 = sadd.s32 %s246, %s244
      %s248 = scalar_lea.vmem %s0, %s247
      %p249 = pneg %p57
      %p250 = pneg %p54
      %s251 = smul.u32 2, %s21
      %p252 = scmp.lt.s32.totalorder %s20, 1
      %s253 = scalar_select %p252, %s20, 1
      %p254 = scmp.lt.s32.totalorder %s251, 1
      %s255 = scalar_select %p254, %s251, 1
      %s256 = smul.addr %s253, 8
      %s257 = sadd.s32 %s255, %s256
      %s258 = smul.addr %s257, 8
      %s259 = scalar_lea.vmem %s1, %s258
      %p260 = pneg %p85
      %p261 = pneg %p82
      %s262 = smul.u32 16, %s22
      %p263 = scmp.lt.s32.totalorder %s20, 1
      %s264 = scalar_select %p263, %s20, 1
      %p265 = scmp.lt.s32.totalorder %s262, 15
      %s266 = scalar_select %p265, %s262, 15
      %s267 = smul.addr %s264, 64
      %s268 = sadd.s32 %s266, %s267
      %s269 = smul.addr %s268, 8
      %s270 = scalar_lea.vmem %s2, %s269
      %p271 = pneg %p113
      %p272 = pneg %p110
      %s273 = smul.u32 16, %s22
      %p274 = scmp.lt.s32.totalorder %s20, 1
      %s275 = scalar_select %p274, %s20, 1
      %p276 = scmp.lt.s32.totalorder %s273, 15
      %s277 = scalar_select %p276, %s273, 15
      %s278 = smul.addr %s275, 64
      %s279 = sadd.s32 %s277, %s278
      %s280 = smul.addr %s279, 8
      %s281 = scalar_lea.vmem %s3, %s280
      %p282 = pneg %p141
      %p283 = pneg %p138
      %p284 = pneg %p169
      %p285 = pneg %p166
      %s286 = smul.u32 2, %s21
      %p287 = scmp.lt.s32.totalorder %s20, 1
      %s288 = scalar_select %p287, %s20, 1
      %p289 = scmp.lt.s32.totalorder %s286, 1
      %s290 = scalar_select %p289, %s286, 1
      %s291 = smul.addr %s288, 8
      %s292 = sadd.s32 %s290, %s291
      %s293 = smul.addr %s292, 8
      %s294 = scalar_lea.vmem %s4, %s293
      %p295 = scmp.lt.s32.totalorder %s20, 1
      %s296 = scalar_select %p295, %s20, 1
      %p297 = scmp.lt.s32.totalorder %s22, 0
      %s298 = scalar_select %p297, %s22, 0
      %s299 = sadd.s32 %s298, %s296
      %s300 = scalar_lea.vmem %s0, %s299
      %s301 = smul.u32 2, %s21
      %p302 = scmp.lt.s32.totalorder %s20, 1
      %s303 = scalar_select %p302, %s20, 1
      %p304 = scmp.lt.s32.totalorder %s301, 1
      %s305 = scalar_select %p304, %s301, 1
      %s306 = smul.addr %s303, 8
      %s307 = sadd.s32 %s305, %s306
      %s308 = smul.addr %s307, 8
      %s309 = scalar_lea.vmem %s1, %s308
      %s310 = smul.u32 2, %s21
      %s311 = smul.u32 16, %s22
      %p312 = scmp.lt.s32.totalorder %s20, 1
      %s313 = scalar_select %p312, %s20, 1
      %p314 = scmp.lt.s32.totalorder %s311, 15
      %s315 = scalar_select %p314, %s311, 15
      %s316 = smul.addr %s313, 64
      %s317 = sadd.s32 %s315, %s316
      %s318 = smul.addr %s317, 8
      %s319 = scalar_lea.vmem %s2, %s318
      %s320 = smul.u32 16, %s22
      %s321 = smul.u32 16, %s22
      %p322 = scmp.lt.s32.totalorder %s20, 1
      %s323 = scalar_select %p322, %s20, 1
      %p324 = scmp.lt.s32.totalorder %s321, 15
      %s325 = scalar_select %p324, %s321, 15
      %s326 = smul.addr %s323, 64
      %s327 = sadd.s32 %s325, %s326
      %s328 = smul.addr %s327, 8
      %s329 = scalar_lea.vmem %s3, %s328
      %s330 = smul.u32 16, %s22
      %s331 = smul.u32 2, %s21
      %p332 = scmp.lt.s32.totalorder %s20, 1
      %s333 = scalar_select %p332, %s20, 1
      %p334 = scmp.lt.s32.totalorder %s331, 1
      %s335 = scalar_select %p334, %s331, 1
      %s336 = smul.addr %s333, 8
      %s337 = sadd.s32 %s335, %s336
      %s338 = smul.addr %s337, 8
      %s339 = scalar_lea.vmem %s4, %s338
      %s340 = smul.u32 2, %s21
      %p341 = scmp.eq.s32.totalorder %s22, 0
      // Predicated region
      $region37: #{transformer_forward.17} parent=35 // pred_check
        %p342 = pneg %p341
      $region38: #{transformer_forward.17} parent=35 // pred_check_branch
        %344 = sbr.rel (%p342) target = $region40
      $region39: #{transformer_forward.17} parent=35 // pred_region
        %vm345 = vcmask 7168
        %346 = vst.msk [vmem:[#allocation2] sm:$0xff] %vm345, -inf
        %347 = vst.msk [vmem:[#allocation2 + $0x8] sm:$0xff] %vm345, -inf
        %348 = vst.msk [vmem:[#allocation2 + $0x10] sm:$0xff] %vm345, -inf
        %349 = vst.msk [vmem:[#allocation2 + $0x18] sm:$0xff] %vm345, -inf
        %350 = vst.msk [vmem:[#allocation2 + $0x20] sm:$0xff] %vm345, -inf
        %351 = vst.msk [vmem:[#allocation2 + $0x28] sm:$0xff] %vm345, -inf
        %352 = vst.msk [vmem:[#allocation2 + $0x30] sm:$0xff] %vm345, -inf
        %353 = vst.msk [vmem:[#allocation2 + $0x38] sm:$0xff] %vm345, -inf
        %354 = vst.msk [vmem:[#allocation3] sm:$0xff] %vm345, 0.0
        %355 = vst.msk [vmem:[#allocation3 + $0x8] sm:$0xff] %vm345, 0.0
        %356 = vst.msk [vmem:[#allocation3 + $0x10] sm:$0xff] %vm345, 0.0
        %357 = vst.msk [vmem:[#allocation3 + $0x18] sm:$0xff] %vm345, 0.0
        %358 = vst.msk [vmem:[#allocation3 + $0x20] sm:$0xff] %vm345, 0.0
        %359 = vst.msk [vmem:[#allocation3 + $0x28] sm:$0xff] %vm345, 0.0
        %360 = vst.msk [vmem:[#allocation3 + $0x30] sm:$0xff] %vm345, 0.0
        %361 = vst.msk [vmem:[#allocation3 + $0x38] sm:$0xff] %vm345, 0.0
        %vm362 = vcmask 64512
        %363 = vst.msk [vmem:[#allocation4] sm:$0xff] %vm362, 0.0
        %364 = vst.msk [vmem:[#allocation4 + $0x8] sm:$0xff] %vm362, 0.0
        %365 = vst.msk [vmem:[#allocation4 + $0x10] sm:$0xff] %vm362, 0.0
        %366 = vst.msk [vmem:[#allocation4 + $0x18] sm:$0xff] %vm362, 0.0
        %367 = vst.msk [vmem:[#allocation4 + $0x20] sm:$0xff] %vm362, 0.0
        %368 = vst.msk [vmem:[#allocation4 + $0x28] sm:$0xff] %vm362, 0.0
        %369 = vst.msk [vmem:[#allocation4 + $0x30] sm:$0xff] %vm362, 0.0
        %370 = vst.msk [vmem:[#allocation4 + $0x38] sm:$0xff] %vm362, 0.0
      $region40: #{transformer_forward.17} parent=35 // pred_fallthru
        _
      %v371 = vld [vmem:[%s309] sm:$0xff]
      %v372 = vld [vmem:[%s309 + $0x8] sm:$0xff]
      %v373 = vld [vmem:[%s309 + $0x10] sm:$0xff]
      %v374 = vld [vmem:[%s309 + $0x18] sm:$0xff]
      %v375 = vld [vmem:[%s309 + $0x20] sm:$0xff]
      %v376 = vld [vmem:[%s309 + $0x28] sm:$0xff]
      %v377 = vld [vmem:[%s309 + $0x30] sm:$0xff]
      %v378 = vld [vmem:[%s309 + $0x38] sm:$0xff]
      %v379 = vmul.f32 %v371, 0.35355338
      %v380 = vmul.f32 %v372, 0.35355338
      %v381 = vmul.f32 %v373, 0.35355338
      %v382 = vmul.f32 %v374, 0.35355338
      %v383 = vmul.f32 %v375, 0.35355338
      %v384 = vmul.f32 %v376, 0.35355338
      %v385 = vmul.f32 %v377, 0.35355338
      %v386 = vmul.f32 %v378, 0.35355338
      %v387 = vld [vmem:[%s319] sm:$0xff]
      %v388 = vld [vmem:[%s319 + $0x8] sm:$0xff]
      %v389 = vld [vmem:[%s319 + $0x10] sm:$0xff]
      %v390 = vld [vmem:[%s319 + $0x18] sm:$0xff]
      %v391 = vld [vmem:[%s319 + $0x20] sm:$0xff]
      %v392 = vld [vmem:[%s319 + $0x28] sm:$0xff]
      %v393 = vld [vmem:[%s319 + $0x30] sm:$0xff]
      %v394 = vld [vmem:[%s319 + $0x38] sm:$0xff]
      %v395 = vld [vmem:[%s319 + $0x40] sm:$0xff]
      %v396 = vld [vmem:[%s319 + $0x48] sm:$0xff]
      %v397 = vld [vmem:[%s319 + $0x50] sm:$0xff]
      %v398 = vld [vmem:[%s319 + $0x58] sm:$0xff]
      %v399 = vld [vmem:[%s319 + $0x60] sm:$0xff]
      %v400 = vld [vmem:[%s319 + $0x68] sm:$0xff]
      %v401 = vld [vmem:[%s319 + $0x70] sm:$0xff]
      %v402 = vld [vmem:[%s319 + $0x78] sm:$0xff]
      %v403 = vld [vmem:[%s319 + $0x80] sm:$0xff]
      %v404 = vld [vmem:[%s319 + $0x88] sm:$0xff]
      %v405 = vld [vmem:[%s319 + $0x90] sm:$0xff]
      %v406 = vld [vmem:[%s319 + $0x98] sm:$0xff]
      %v407 = vld [vmem:[%s319 + $0xa0] sm:$0xff]
      %v408 = vld [vmem:[%s319 + $0xa8] sm:$0xff]
      %v409 = vld [vmem:[%s319 + $0xb0] sm:$0xff]
      %v410 = vld [vmem:[%s319 + $0xb8] sm:$0xff]
      %v411 = vld [vmem:[%s319 + $0xc0] sm:$0xff]
      %v412 = vld [vmem:[%s319 + $0xc8] sm:$0xff]
      %v413 = vld [vmem:[%s319 + $0xd0] sm:$0xff]
      %v414 = vld [vmem:[%s319 + $0xd8] sm:$0xff]
      %v415 = vld [vmem:[%s319 + $0xe0] sm:$0xff]
      %v416 = vld [vmem:[%s319 + $0xe8] sm:$0xff]
      %v417 = vld [vmem:[%s319 + $0xf0] sm:$0xff]
      %v418 = vld [vmem:[%s319 + $0xf8] sm:$0xff]
      %v419 = vld [vmem:[%s319 + $0x100] sm:$0xff]
      %v420 = vld [vmem:[%s319 + $0x108] sm:$0xff]
      %v421 = vld [vmem:[%s319 + $0x110] sm:$0xff]
      %v422 = vld [vmem:[%s319 + $0x118] sm:$0xff]
      %v423 = vld [vmem:[%s319 + $0x120] sm:$0xff]
      %v424 = vld [vmem:[%s319 + $0x128] sm:$0xff]
      %v425 = vld [vmem:[%s319 + $0x130] sm:$0xff]
      %v426 = vld [vmem:[%s319 + $0x138] sm:$0xff]
      %v427 = vld [vmem:[%s319 + $0x140] sm:$0xff]
      %v428 = vld [vmem:[%s319 + $0x148] sm:$0xff]
      %v429 = vld [vmem:[%s319 + $0x150] sm:$0xff]
      %v430 = vld [vmem:[%s319 + $0x158] sm:$0xff]
      %v431 = vld [vmem:[%s319 + $0x160] sm:$0xff]
      %v432 = vld [vmem:[%s319 + $0x168] sm:$0xff]
      %v433 = vld [vmem:[%s319 + $0x170] sm:$0xff]
      %v434 = vld [vmem:[%s319 + $0x178] sm:$0xff]
      %v435 = vld [vmem:[%s319 + $0x180] sm:$0xff]
      %v436 = vld [vmem:[%s319 + $0x188] sm:$0xff]
      %v437 = vld [vmem:[%s319 + $0x190] sm:$0xff]
      %v438 = vld [vmem:[%s319 + $0x198] sm:$0xff]
      %v439 = vld [vmem:[%s319 + $0x1a0] sm:$0xff]
      %v440 = vld [vmem:[%s319 + $0x1a8] sm:$0xff]
      %v441 = vld [vmem:[%s319 + $0x1b0] sm:$0xff]
      %v442 = vld [vmem:[%s319 + $0x1b8] sm:$0xff]
      %v443 = vld [vmem:[%s319 + $0x1c0] sm:$0xff]
      %v444 = vld [vmem:[%s319 + $0x1c8] sm:$0xff]
      %v445 = vld [vmem:[%s319 + $0x1d0] sm:$0xff]
      %v446 = vld [vmem:[%s319 + $0x1d8] sm:$0xff]
      %v447 = vld [vmem:[%s319 + $0x1e0] sm:$0xff]
      %v448 = vld [vmem:[%s319 + $0x1e8] sm:$0xff]
      %v449 = vld [vmem:[%s319 + $0x1f0] sm:$0xff]
      %v450 = vld [vmem:[%s319 + $0x1f8] sm:$0xff]
      %v451 = vld [vmem:[%s329] sm:$0xff]
      %v452 = vld [vmem:[%s329 + $0x8] sm:$0xff]
      %v453 = vld [vmem:[%s329 + $0x10] sm:$0xff]
      %v454 = vld [vmem:[%s329 + $0x18] sm:$0xff]
      %v455 = vld [vmem:[%s329 + $0x20] sm:$0xff]
      %v456 = vld [vmem:[%s329 + $0x28] sm:$0xff]
      %v457 = vld [vmem:[%s329 + $0x30] sm:$0xff]
      %v458 = vld [vmem:[%s329 + $0x38] sm:$0xff]
      %v459 = vld [vmem:[%s329 + $0x40] sm:$0xff]
      %v460 = vld [vmem:[%s329 + $0x48] sm:$0xff]
      %v461 = vld [vmem:[%s329 + $0x50] sm:$0xff]
      %v462 = vld [vmem:[%s329 + $0x58] sm:$0xff]
      %v463 = vld [vmem:[%s329 + $0x60] sm:$0xff]
      %v464 = vld [vmem:[%s329 + $0x68] sm:$0xff]
      %v465 = vld [vmem:[%s329 + $0x70] sm:$0xff]
      %v466 = vld [vmem:[%s329 + $0x78] sm:$0xff]
      %v467 = vld [vmem:[%s329 + $0x80] sm:$0xff]
      %v468 = vld [vmem:[%s329 + $0x88] sm:$0xff]
      %v469 = vld [vmem:[%s329 + $0x90] sm:$0xff]
      %v470 = vld [vmem:[%s329 + $0x98] sm:$0xff]
      %v471 = vld [vmem:[%s329 + $0xa0] sm:$0xff]
      %v472 = vld [vmem:[%s329 + $0xa8] sm:$0xff]
      %v473 = vld [vmem:[%s329 + $0xb0] sm:$0xff]
      %v474 = vld [vmem:[%s329 + $0xb8] sm:$0xff]
      %v475 = vld [vmem:[%s329 + $0xc0] sm:$0xff]
      %v476 = vld [vmem:[%s329 + $0xc8] sm:$0xff]
      %v477 = vld [vmem:[%s329 + $0xd0] sm:$0xff]
      %v478 = vld [vmem:[%s329 + $0xd8] sm:$0xff]
      %v479 = vld [vmem:[%s329 + $0xe0] sm:$0xff]
      %v480 = vld [vmem:[%s329 + $0xe8] sm:$0xff]
      %v481 = vld [vmem:[%s329 + $0xf0] sm:$0xff]
      %v482 = vld [vmem:[%s329 + $0xf8] sm:$0xff]
      %v483 = vld [vmem:[%s329 + $0x100] sm:$0xff]
      %v484 = vld [vmem:[%s329 + $0x108] sm:$0xff]
      %v485 = vld [vmem:[%s329 + $0x110] sm:$0xff]
      %v486 = vld [vmem:[%s329 + $0x118] sm:$0xff]
      %v487 = vld [vmem:[%s329 + $0x120] sm:$0xff]
      %v488 = vld [vmem:[%s329 + $0x128] sm:$0xff]
      %v489 = vld [vmem:[%s329 + $0x130] sm:$0xff]
      %v490 = vld [vmem:[%s329 + $0x138] sm:$0xff]
      %v491 = vld [vmem:[%s329 + $0x140] sm:$0xff]
      %v492 = vld [vmem:[%s329 + $0x148] sm:$0xff]
      %v493 = vld [vmem:[%s329 + $0x150] sm:$0xff]
      %v494 = vld [vmem:[%s329 + $0x158] sm:$0xff]
      %v495 = vld [vmem:[%s329 + $0x160] sm:$0xff]
      %v496 = vld [vmem:[%s329 + $0x168] sm:$0xff]
      %v497 = vld [vmem:[%s329 + $0x170] sm:$0xff]
      %v498 = vld [vmem:[%s329 + $0x178] sm:$0xff]
      %v499 = vld [vmem:[%s329 + $0x180] sm:$0xff]
      %v500 = vld [vmem:[%s329 + $0x188] sm:$0xff]
      %v501 = vld [vmem:[%s329 + $0x190] sm:$0xff]
      %v502 = vld [vmem:[%s329 + $0x198] sm:$0xff]
      %v503 = vld [vmem:[%s329 + $0x1a0] sm:$0xff]
      %v504 = vld [vmem:[%s329 + $0x1a8] sm:$0xff]
      %v505 = vld [vmem:[%s329 + $0x1b0] sm:$0xff]
      %v506 = vld [vmem:[%s329 + $0x1b8] sm:$0xff]
      %v507 = vld [vmem:[%s329 + $0x1c0] sm:$0xff]
      %v508 = vld [vmem:[%s329 + $0x1c8] sm:$0xff]
      %v509 = vld [vmem:[%s329 + $0x1d0] sm:$0xff]
      %v510 = vld [vmem:[%s329 + $0x1d8] sm:$0xff]
      %v511 = vld [vmem:[%s329 + $0x1e0] sm:$0xff]
      %v512 = vld [vmem:[%s329 + $0x1e8] sm:$0xff]
      %v513 = vld [vmem:[%s329 + $0x1f0] sm:$0xff]
      %v514 = vld [vmem:[%s329 + $0x1f8] sm:$0xff]
      %vm515 = vcmask 64512
      %v517 = vsel %vm515, %v379, 0
      %v520 = vsel %vm515, %v380, 0
      %v523 = vsel %vm515, %v387, 0
      %v526 = vsel %vm515, %v388, 0
      %v529 = vsel %vm515, %v389, 0
      %v532 = vsel %vm515, %v390, 0
      %v535 = vsel %vm515, %v391, 0
      %v538 = vsel %vm515, %v392, 0
      %v541 = vsel %vm515, %v393, 0
      %v544 = vsel %vm515, %v394, 0
      %v547 = vsel %vm515, %v395, 0
      %v550 = vsel %vm515, %v396, 0
      %v553 = vsel %vm515, %v397, 0
      %v556 = vsel %vm515, %v398, 0
      %v559 = vsel %vm515, %v399, 0
      %v562 = vsel %vm515, %v400, 0
      %v565 = vsel %vm515, %v401, 0
      %v568 = vsel %vm515, %v402, 0
      %570 = vmatpush.xpose.msra.mxu0 %v568
      %571 = vmatpush.xpose.msra.mxu0 %v565
      %572 = vmatpush.xpose.msra.mxu0 %v562
      %573 = vmatpush.xpose.msra.mxu0 %v559
      %574 = vmatpush.xpose.msra.mxu0 %v556
      %575 = vmatpush.xpose.msra.mxu0 %v553
      %576 = vmatpush.xpose.msra.mxu0 %v550
      %577 = vmatpush.xpose.msra.mxu0 %v547
      %578 = vmatpush.xpose.msra.mxu0 %v544
      %579 = vmatpush.xpose.msra.mxu0 %v541
      %580 = vmatpush.xpose.msra.mxu0 %v538
      %581 = vmatpush.xpose.msra.mxu0 %v535
      %582 = vmatpush.xpose.msra.mxu0 %v532
      %583 = vmatpush.xpose.msra.mxu0 %v529
      %584 = vmatpush.xpose.msra.mxu0 %v526
      %585 = vmatpush.xpose.msra.mxu0 %v523
      %586 = vmatmul.f32.gmra.mxu0 %v517
      %v587 = vpop.f32.mrf.mxu0
      %v588 = vadd.f32 0.0, %v587
      %589 = vmatmul.f32.gmra.mxu0 %v520
      %v590 = vpop.f32.mrf.mxu0
      %v591 = vadd.f32 0.0, %v590
      %592 = vdwg.mxu0
      %v594 = vsel %vm515, %v381, 0
      %v597 = vsel %vm515, %v382, 0
      %v600 = vsel %vm515, %v403, 0
      %v603 = vsel %vm515, %v404, 0
      %v606 = vsel %vm515, %v405, 0
      %v609 = vsel %vm515, %v406, 0
      %v612 = vsel %vm515, %v407, 0
      %v615 = vsel %vm515, %v408, 0
      %v618 = vsel %vm515, %v409, 0
      %v621 = vsel %vm515, %v410, 0
      %v624 = vsel %vm515, %v411, 0
      %v627 = vsel %vm515, %v412, 0
      %v630 = vsel %vm515, %v413, 0
      %v633 = vsel %vm515, %v414, 0
      %v636 = vsel %vm515, %v415, 0
      %v639 = vsel %vm515, %v416, 0
      %v642 = vsel %vm515, %v417, 0
      %v645 = vsel %vm515, %v418, 0
      %647 = vmatpush.xpose.msra.mxu0 %v645
      %648 = vmatpush.xpose.msra.mxu0 %v642
      %649 = vmatpush.xpose.msra.mxu0 %v639
      %650 = vmatpush.xpose.msra.mxu0 %v636
      %651 = vmatpush.xpose.msra.mxu0 %v633
      %652 = vmatpush.xpose.msra.mxu0 %v630
      %653 = vmatpush.xpose.msra.mxu0 %v627
      %654 = vmatpush.xpose.msra.mxu0 %v624
      %655 = vmatpush.xpose.msra.mxu0 %v621
      %656 = vmatpush.xpose.msra.mxu0 %v618
      %657 = vmatpush.xpose.msra.mxu0 %v615
      %658 = vmatpush.xpose.msra.mxu0 %v612
      %659 = vmatpush.xpose.msra.mxu0 %v609
      %660 = vmatpush.xpose.msra.mxu0 %v606
      %661 = vmatpush.xpose.msra.mxu0 %v603
      %662 = vmatpush.xpose.msra.mxu0 %v600
      %663 = vmatmul.f32.gmra.mxu0 %v594
      %v664 = vpop.f32.mrf.mxu0
      %v665 = vadd.f32 0.0, %v664
      %666 = vmatmul.f32.gmra.mxu0 %v597
      %v667 = vpop.f32.mrf.mxu0
      %v668 = vadd.f32 0.0, %v667
      %669 = vdwg.mxu0
      %v671 = vsel %vm515, %v383, 0
      %v674 = vsel %vm515, %v384, 0
      %v677 = vsel %vm515, %v419, 0
      %v680 = vsel %vm515, %v420, 0
      %v683 = vsel %vm515, %v421, 0
      %v686 = vsel %vm515, %v422, 0
      %v689 = vsel %vm515, %v423, 0
      %v692 = vsel %vm515, %v424, 0
      %v695 = vsel %vm515, %v425, 0
      %v698 = vsel %vm515, %v426, 0
      %v701 = vsel %vm515, %v427, 0
      %v704 = vsel %vm515, %v428, 0
      %v707 = vsel %vm515, %v429, 0
      %v710 = vsel %vm515, %v430, 0
      %v713 = vsel %vm515, %v431, 0
      %v716 = vsel %vm515, %v432, 0
      %v719 = vsel %vm515, %v433, 0
      %v722 = vsel %vm515, %v434, 0
      %724 = vmatpush.xpose.msra.mxu0 %v722
      %725 = vmatpush.xpose.msra.mxu0 %v719
      %726 = vmatpush.xpose.msra.mxu0 %v716
      %727 = vmatpush.xpose.msra.mxu0 %v713
      %728 = vmatpush.xpose.msra.mxu0 %v710
      %729 = vmatpush.xpose.msra.mxu0 %v707
      %730 = vmatpush.xpose.msra.mxu0 %v704
      %731 = vmatpush.xpose.msra.mxu0 %v701
      %732 = vmatpush.xpose.msra.mxu0 %v698
      %733 = vmatpush.xpose.msra.mxu0 %v695
      %734 = vmatpush.xpose.msra.mxu0 %v692
      %735 = vmatpush.xpose.msra.mxu0 %v689
      %736 = vmatpush.xpose.msra.mxu0 %v686
      %737 = vmatpush.xpose.msra.mxu0 %v683
      %738 = vmatpush.xpose.msra.mxu0 %v680
      %739 = vmatpush.xpose.msra.mxu0 %v677
      %740 = vmatmul.f32.gmra.mxu0 %v671
      %v741 = vpop.f32.mrf.mxu0
      %v742 = vadd.f32 0.0, %v741
      %743 = vmatmul.f32.gmra.mxu0 %v674
      %v744 = vpop.f32.mrf.mxu0
      %v745 = vadd.f32 0.0, %v744
      %746 = vdwg.mxu0
      %v748 = vsel %vm515, %v385, 0
      %v751 = vsel %vm515, %v386, 0
      %v754 = vsel %vm515, %v435, 0
      %v757 = vsel %vm515, %v436, 0
      %v760 = vsel %vm515, %v437, 0
      %v763 = vsel %vm515, %v438, 0
      %v766 = vsel %vm515, %v439, 0
      %v769 = vsel %vm515, %v440, 0
      %v772 = vsel %vm515, %v441, 0
      %v775 = vsel %vm515, %v442, 0
      %v778 = vsel %vm515, %v443, 0
      %v781 = vsel %vm515, %v444, 0
      %v784 = vsel %vm515, %v445, 0
      %v787 = vsel %vm515, %v446, 0
      %v790 = vsel %vm515, %v447, 0
      %v793 = vsel %vm515, %v448, 0
      %v796 = vsel %vm515, %v449, 0
      %v799 = vsel %vm515, %v450, 0
      %801 = vmatpush.xpose.msra.mxu0 %v799
      %802 = vmatpush.xpose.msra.mxu0 %v796
      %803 = vmatpush.xpose.msra.mxu0 %v793
      %804 = vmatpush.xpose.msra.mxu0 %v790
      %805 = vmatpush.xpose.msra.mxu0 %v787
      %806 = vmatpush.xpose.msra.mxu0 %v784
      %807 = vmatpush.xpose.msra.mxu0 %v781
      %808 = vmatpush.xpose.msra.mxu0 %v778
      %809 = vmatpush.xpose.msra.mxu0 %v775
      %810 = vmatpush.xpose.msra.mxu0 %v772
      %811 = vmatpush.xpose.msra.mxu0 %v769
      %812 = vmatpush.xpose.msra.mxu0 %v766
      %813 = vmatpush.xpose.msra.mxu0 %v763
      %814 = vmatpush.xpose.msra.mxu0 %v760
      %815 = vmatpush.xpose.msra.mxu0 %v757
      %816 = vmatpush.xpose.msra.mxu0 %v754
      %817 = vmatmul.f32.gmra.mxu0 %v748
      %v818 = vpop.f32.mrf.mxu0
      %v819 = vadd.f32 0.0, %v818
      %820 = vmatmul.f32.gmra.mxu0 %v751
      %v821 = vpop.f32.mrf.mxu0
      %v822 = vadd.f32 0.0, %v821
      %823 = vdwg.mxu0
      %v824 = vld [vmem:[%s300] sm:$0x1]
      %vm825 = vcmp.gt.f32.partialorder %v824, 0.0
      %v826 = vsel %vm825, 1, 0
      %v827 = vperm.slane %v826, 0
      %vm828 = vcmp.eq.s32.totalorder %v827, 1
      %v829 = vsel %vm828, %v588, -3.4028235e+38
      %v830 = vsel %vm828, %v591, -3.4028235e+38
      %v831 = vsel %vm828, %v665, -3.4028235e+38
      %v832 = vsel %vm828, %v668, -3.4028235e+38
      %v833 = vsel %vm828, %v742, -3.4028235e+38
      %v834 = vsel %vm828, %v745, -3.4028235e+38
      %v835 = vsel %vm828, %v819, -3.4028235e+38
      %v836 = vsel %vm828, %v822, -3.4028235e+38
      %v837 = vld [vmem:[#allocation2] sm:$0xff]
      %v838 = vld [vmem:[#allocation2 + $0x8] sm:$0xff]
      %v839 = vld [vmem:[#allocation2 + $0x10] sm:$0xff]
      %v840 = vld [vmem:[#allocation2 + $0x18] sm:$0xff]
      %v841 = vld [vmem:[#allocation2 + $0x20] sm:$0xff]
      %v842 = vld [vmem:[#allocation2 + $0x28] sm:$0xff]
      %v843 = vld [vmem:[#allocation2 + $0x30] sm:$0xff]
      %v844 = vld [vmem:[#allocation2 + $0x38] sm:$0xff]
      %845 = vmax.xlane.f32.xlu0 %v829
      %v846 = vpop.xlane.xlu0 %845
      %847 = vmax.xlane.f32.xlu0 %v830
      %v848 = vpop.xlane.xlu0 %847
      %849 = vmax.xlane.f32.xlu0 %v831
      %v850 = vpop.xlane.xlu0 %849
      %851 = vmax.xlane.f32.xlu0 %v832
      %v852 = vpop.xlane.xlu0 %851
      %853 = vmax.xlane.f32.xlu0 %v833
      %v854 = vpop.xlane.xlu0 %853
      %855 = vmax.xlane.f32.xlu0 %v834
      %v856 = vpop.xlane.xlu0 %855
      %857 = vmax.xlane.f32.xlu0 %v835
      %v858 = vpop.xlane.xlu0 %857
      %859 = vmax.xlane.f32.xlu0 %v836
      %v860 = vpop.xlane.xlu0 %859
      %v861 = vmax.f32 %v837, %v846
      %v862 = vmax.f32 %v838, %v848
      %v863 = vmax.f32 %v839, %v850
      %v864 = vmax.f32 %v840, %v852
      %v865 = vmax.f32 %v841, %v854
      %v866 = vmax.f32 %v842, %v856
      %v867 = vmax.f32 %v843, %v858
      %v868 = vmax.f32 %v844, %v860
      %v869 = vsub.f32 %v837, %v861
      %v870 = vsub.f32 %v838, %v862
      %v871 = vsub.f32 %v839, %v863
      %v872 = vsub.f32 %v840, %v864
      %v873 = vsub.f32 %v841, %v865
      %v874 = vsub.f32 %v842, %v866
      %v875 = vsub.f32 %v843, %v867
      %v876 = vsub.f32 %v844, %v868
      %v877 = vmul.f32 %v869, 1.442695
      %v878 = vpow.pop %v877
      %v879 = vmul.f32 %v870, 1.442695
      %v880 = vpow.pop %v879
      %v881 = vmul.f32 %v871, 1.442695
      %v882 = vpow.pop %v881
      %v883 = vmul.f32 %v872, 1.442695
      %v884 = vpow.pop %v883
      %v885 = vmul.f32 %v873, 1.442695
      %v886 = vpow.pop %v885
      %v887 = vmul.f32 %v874, 1.442695
      %v888 = vpow.pop %v887
      %v889 = vmul.f32 %v875, 1.442695
      %v890 = vpow.pop %v889
      %v891 = vmul.f32 %v876, 1.442695
      %v892 = vpow.pop %v891
      %894 = vset.pattern.permute.xlu0 0
      %895 = vperm.xlu0 %894, %v861
      %v896 = vpop.permute.xlu0 %895
      %899 = vset.pattern.permute.xlu0 0
      %900 = vperm.xlu0 %899, %v862
      %v901 = vpop.permute.xlu0 %900
      %904 = vset.pattern.permute.xlu0 0
      %905 = vperm.xlu0 %904, %v863
      %v906 = vpop.permute.xlu0 %905
      %909 = vset.pattern.permute.xlu0 0
      %910 = vperm.xlu0 %909, %v864
      %v911 = vpop.permute.xlu0 %910
      %914 = vset.pattern.permute.xlu0 0
      %915 = vperm.xlu0 %914, %v865
      %v916 = vpop.permute.xlu0 %915
      %919 = vset.pattern.permute.xlu0 0
      %920 = vperm.xlu0 %919, %v866
      %v921 = vpop.permute.xlu0 %920
      %924 = vset.pattern.permute.xlu0 0
      %925 = vperm.xlu0 %924, %v867
      %v926 = vpop.permute.xlu0 %925
      %929 = vset.pattern.permute.xlu0 0
      %930 = vperm.xlu0 %929, %v868
      %v931 = vpop.permute.xlu0 %930
      %v933 = vsub.f32 %v829, %v896
      %v934 = vsub.f32 %v830, %v901
      %v935 = vsub.f32 %v831, %v906
      %v936 = vsub.f32 %v832, %v911
      %v937 = vsub.f32 %v833, %v916
      %v938 = vsub.f32 %v834, %v921
      %v939 = vsub.f32 %v835, %v926
      %v940 = vsub.f32 %v836, %v931
      %v941 = vmul.f32 %v933, 1.442695
      %v942 = vpow.pop %v941
      %v943 = vmul.f32 %v934, 1.442695
      %v944 = vpow.pop %v943
      %v945 = vmul.f32 %v935, 1.442695
      %v946 = vpow.pop %v945
      %v947 = vmul.f32 %v936, 1.442695
      %v948 = vpow.pop %v947
      %v949 = vmul.f32 %v937, 1.442695
      %v950 = vpow.pop %v949
      %v951 = vmul.f32 %v938, 1.442695
      %v952 = vpow.pop %v951
      %v953 = vmul.f32 %v939, 1.442695
      %v954 = vpow.pop %v953
      %v955 = vmul.f32 %v940, 1.442695
      %v956 = vpow.pop %v955
      %v957 = vld [vmem:[#allocation3] sm:$0xff]
      %v958 = vld [vmem:[#allocation3 + $0x8] sm:$0xff]
      %v959 = vld [vmem:[#allocation3 + $0x10] sm:$0xff]
      %v960 = vld [vmem:[#allocation3 + $0x18] sm:$0xff]
      %v961 = vld [vmem:[#allocation3 + $0x20] sm:$0xff]
      %v962 = vld [vmem:[#allocation3 + $0x28] sm:$0xff]
      %v963 = vld [vmem:[#allocation3 + $0x30] sm:$0xff]
      %v964 = vld [vmem:[#allocation3 + $0x38] sm:$0xff]
      %v965 = vmul.f32 %v878, %v957
      %v966 = vmul.f32 %v880, %v958
      %v967 = vmul.f32 %v882, %v959
      %v968 = vmul.f32 %v884, %v960
      %v969 = vmul.f32 %v886, %v961
      %v970 = vmul.f32 %v888, %v962
      %v971 = vmul.f32 %v890, %v963
      %v972 = vmul.f32 %v892, %v964
      %973 = vadd.xlane.f32.xlu0 %v942
      %v974 = vpop.xlane.xlu0 %973
      %975 = vadd.xlane.f32.xlu0 %v944
      %v976 = vpop.xlane.xlu0 %975
      %977 = vadd.xlane.f32.xlu0 %v946
      %v978 = vpop.xlane.xlu0 %977
      %979 = vadd.xlane.f32.xlu0 %v948
      %v980 = vpop.xlane.xlu0 %979
      %981 = vadd.xlane.f32.xlu0 %v950
      %v982 = vpop.xlane.xlu0 %981
      %983 = vadd.xlane.f32.xlu0 %v952
      %v984 = vpop.xlane.xlu0 %983
      %985 = vadd.xlane.f32.xlu0 %v954
      %v986 = vpop.xlane.xlu0 %985
      %987 = vadd.xlane.f32.xlu0 %v956
      %v988 = vpop.xlane.xlu0 %987
      %v989 = vadd.f32 %v965, %v974
      %v990 = vadd.f32 %v966, %v976
      %v991 = vadd.f32 %v967, %v978
      %v992 = vadd.f32 %v968, %v980
      %v993 = vadd.f32 %v969, %v982
      %v994 = vadd.f32 %v970, %v984
      %v995 = vadd.f32 %v971, %v986
      %v996 = vadd.f32 %v972, %v988
      %vm997 = vcmask 7168
      %998 = vst.msk [vmem:[#allocation3] sm:$0xff] %vm997, %v989
      %999 = vst.msk [vmem:[#allocation3 + $0x8] sm:$0xff] %vm997, %v990
      %1000 = vst.msk [vmem:[#allocation3 + $0x10] sm:$0xff] %vm997, %v991
      %1001 = vst.msk [vmem:[#allocation3 + $0x18] sm:$0xff] %vm997, %v992
      %1002 = vst.msk [vmem:[#allocation3 + $0x20] sm:$0xff] %vm997, %v993
      %1003 = vst.msk [vmem:[#allocation3 + $0x28] sm:$0xff] %vm997, %v994
      %1004 = vst.msk [vmem:[#allocation3 + $0x30] sm:$0xff] %vm997, %v995
      %1005 = vst.msk [vmem:[#allocation3 + $0x38] sm:$0xff] %vm997, %v996
      %v1006 = vld [vmem:[#allocation4] sm:$0xff]
      %v1007 = vld [vmem:[#allocation4 + $0x8] sm:$0xff]
      %v1008 = vld [vmem:[#allocation4 + $0x10] sm:$0xff]
      %v1009 = vld [vmem:[#allocation4 + $0x18] sm:$0xff]
      %v1010 = vld [vmem:[#allocation4 + $0x20] sm:$0xff]
      %v1011 = vld [vmem:[#allocation4 + $0x28] sm:$0xff]
      %v1012 = vld [vmem:[#allocation4 + $0x30] sm:$0xff]
      %v1013 = vld [vmem:[#allocation4 + $0x38] sm:$0xff]
      %1015 = vset.pattern.permute.xlu0 0
      %1016 = vperm.xlu0 %1015, %v878
      %v1017 = vpop.permute.xlu0 %1016
      %1020 = vset.pattern.permute.xlu0 0
      %1021 = vperm.xlu0 %1020, %v880
      %v1022 = vpop.permute.xlu0 %1021
      %1025 = vset.pattern.permute.xlu0 0
      %1026 = vperm.xlu0 %1025, %v882
      %v1027 = vpop.permute.xlu0 %1026
      %1030 = vset.pattern.permute.xlu0 0
      %1031 = vperm.xlu0 %1030, %v884
      %v1032 = vpop.permute.xlu0 %1031
      %1035 = vset.pattern.permute.xlu0 0
      %1036 = vperm.xlu0 %1035, %v886
      %v1037 = vpop.permute.xlu0 %1036
      %1040 = vset.pattern.permute.xlu0 0
      %1041 = vperm.xlu0 %1040, %v888
      %v1042 = vpop.permute.xlu0 %1041
      %1045 = vset.pattern.permute.xlu0 0
      %1046 = vperm.xlu0 %1045, %v890
      %v1047 = vpop.permute.xlu0 %1046
      %1050 = vset.pattern.permute.xlu0 0
      %1051 = vperm.xlu0 %1050, %v892
      %v1052 = vpop.permute.xlu0 %1051
      %v1054 = vmul.f32 %v1017, %v1006
      %v1055 = vmul.f32 %v1022, %v1007
      %v1056 = vmul.f32 %v1027, %v1008
      %v1057 = vmul.f32 %v1032, %v1009
      %v1058 = vmul.f32 %v1037, %v1010
      %v1059 = vmul.f32 %v1042, %v1011
      %v1060 = vmul.f32 %v1047, %v1012
      %v1061 = vmul.f32 %v1052, %v1013
      %1062 = vmatpush.msra.mxu0 %v466
      %1063 = vmatpush.msra.mxu0 %v465
      %1064 = vmatpush.msra.mxu0 %v464
      %1065 = vmatpush.msra.mxu0 %v463
      %1066 = vmatpush.msra.mxu0 %v462
      %1067 = vmatpush.msra.mxu0 %v461
      %1068 = vmatpush.msra.mxu0 %v460
      %1069 = vmatpush.msra.mxu0 %v459
      %1070 = vmatpush.msra.mxu0 %v458
      %1071 = vmatpush.msra.mxu0 %v457
      %1072 = vmatpush.msra.mxu0 %v456
      %1073 = vmatpush.msra.mxu0 %v455
      %1074 = vmatpush.msra.mxu0 %v454
      %1075 = vmatpush.msra.mxu0 %v453
      %1076 = vmatpush.msra.mxu0 %v452
      %1077 = vmatpush.msra.mxu0 %v451
      %1078 = vmatmul.f32.gmra.mxu0 %v942
      %v1079 = vpop.f32.mrf.mxu0
      %v1080 = vadd.f32 0.0, %v1079
      %1081 = vmatmul.f32.gmra.mxu0 %v944
      %v1082 = vpop.f32.mrf.mxu0
      %v1083 = vadd.f32 0.0, %v1082
      %1084 = vdwg.mxu0
      %1085 = vmatpush.msra.mxu0 %v482
      %1086 = vmatpush.msra.mxu0 %v481
      %1087 = vmatpush.msra.mxu0 %v480
      %1088 = vmatpush.msra.mxu0 %v479
      %1089 = vmatpush.msra.mxu0 %v478
      %1090 = vmatpush.msra.mxu0 %v477
      %1091 = vmatpush.msra.mxu0 %v476
      %1092 = vmatpush.msra.mxu0 %v475
      %1093 = vmatpush.msra.mxu0 %v474
      %1094 = vmatpush.msra.mxu0 %v473
      %1095 = vmatpush.msra.mxu0 %v472
      %1096 = vmatpush.msra.mxu0 %v471
      %1097 = vmatpush.msra.mxu0 %v470
      %1098 = vmatpush.msra.mxu0 %v469
      %1099 = vmatpush.msra.mxu0 %v468
      %1100 = vmatpush.msra.mxu0 %v467
      %1101 = vmatmul.f32.gmra.mxu0 %v946
      %v1102 = vpop.f32.mrf.mxu0
      %v1103 = vadd.f32 0.0, %v1102
      %1104 = vmatmul.f32.gmra.mxu0 %v948
      %v1105 = vpop.f32.mrf.mxu0
      %v1106 = vadd.f32 0.0, %v1105
      %1107 = vdwg.mxu0
      %1108 = vmatpush.msra.mxu0 %v498
      %1109 = vmatpush.msra.mxu0 %v497
      %1110 = vmatpush.msra.mxu0 %v496
      %1111 = vmatpush.msra.mxu0 %v495
      %1112 = vmatpush.msra.mxu0 %v494
      %1113 = vmatpush.msra.mxu0 %v493
      %1114 = vmatpush.msra.mxu0 %v492
      %1115 = vmatpush.msra.mxu0 %v491
      %1116 = vmatpush.msra.mxu0 %v490
      %1117 = vmatpush.msra.mxu0 %v489
      %1118 = vmatpush.msra.mxu0 %v488
      %1119 = vmatpush.msra.mxu0 %v487
      %1120 = vmatpush.msra.mxu0 %v486
      %1121 = vmatpush.msra.mxu0 %v485
      %1122 = vmatpush.msra.mxu0 %v484
      %1123 = vmatpush.msra.mxu0 %v483
      %1124 = vmatmul.f32.gmra.mxu0 %v950
      %v1125 = vpop.f32.mrf.mxu0
      %v1126 = vadd.f32 0.0, %v1125
      %1127 = vmatmul.f32.gmra.mxu0 %v952
      %v1128 = vpop.f32.mrf.mxu0
      %v1129 = vadd.f32 0.0, %v1128
      %1130 = vdwg.mxu0
      %1131 = vmatpush.msra.mxu0 %v514
      %1132 = vmatpush.msra.mxu0 %v513
      %1133 = vmatpush.msra.mxu0 %v512
      %1134 = vmatpush.msra.mxu0 %v511
      %1135 = vmatpush.msra.mxu0 %v510
      %1136 = vmatpush.msra.mxu0 %v509
      %1137 = vmatpush.msra.mxu0 %v508
      %1138 = vmatpush.msra.mxu0 %v507
      %1139 = vmatpush.msra.mxu0 %v506
      %1140 = vmatpush.msra.mxu0 %v505
      %1141 = vmatpush.msra.mxu0 %v504
      %1142 = vmatpush.msra.mxu0 %v503
      %1143 = vmatpush.msra.mxu0 %v502
      %1144 = vmatpush.msra.mxu0 %v501
      %1145 = vmatpush.msra.mxu0 %v500
      %1146 = vmatpush.msra.mxu0 %v499
      %1147 = vmatmul.f32.gmra.mxu0 %v954
      %v1148 = vpop.f32.mrf.mxu0
      %v1149 = vadd.f32 0.0, %v1148
      %1150 = vmatmul.f32.gmra.mxu0 %v956
      %v1151 = vpop.f32.mrf.mxu0
      %v1152 = vadd.f32 0.0, %v1151
      %1153 = vdwg.mxu0
      %v1154 = vadd.f32 %v1054, %v1080
      %v1155 = vadd.f32 %v1055, %v1083
      %v1156 = vadd.f32 %v1056, %v1103
      %v1157 = vadd.f32 %v1057, %v1106
      %v1158 = vadd.f32 %v1058, %v1126
      %v1159 = vadd.f32 %v1059, %v1129
      %v1160 = vadd.f32 %v1060, %v1149
      %v1161 = vadd.f32 %v1061, %v1152
      %1162 = vst.msk [vmem:[#allocation4] sm:$0xff] %vm515, %v1154
      %1163 = vst.msk [vmem:[#allocation4 + $0x8] sm:$0xff] %vm515, %v1155
      %1164 = vst.msk [vmem:[#allocation4 + $0x10] sm:$0xff] %vm515, %v1156
      %1165 = vst.msk [vmem:[#allocation4 + $0x18] sm:$0xff] %vm515, %v1157
      %1166 = vst.msk [vmem:[#allocation4 + $0x20] sm:$0xff] %vm515, %v1158
      %1167 = vst.msk [vmem:[#allocation4 + $0x28] sm:$0xff] %vm515, %v1159
      %1168 = vst.msk [vmem:[#allocation4 + $0x30] sm:$0xff] %vm515, %v1160
      %1169 = vst.msk [vmem:[#allocation4 + $0x38] sm:$0xff] %vm515, %v1161
      %1170 = vst.msk [vmem:[#allocation2] sm:$0xff] %vm997, %v861
      %1171 = vst.msk [vmem:[#allocation2 + $0x8] sm:$0xff] %vm997, %v862
      %1172 = vst.msk [vmem:[#allocation2 + $0x10] sm:$0xff] %vm997, %v863
      %1173 = vst.msk [vmem:[#allocation2 + $0x18] sm:$0xff] %vm997, %v864
      %1174 = vst.msk [vmem:[#allocation2 + $0x20] sm:$0xff] %vm997, %v865
      %1175 = vst.msk [vmem:[#allocation2 + $0x28] sm:$0xff] %vm997, %v866
      %1176 = vst.msk [vmem:[#allocation2 + $0x30] sm:$0xff] %vm997, %v867
      %1177 = vst.msk [vmem:[#allocation2 + $0x38] sm:$0xff] %vm997, %v868
      // Predicated region
      $region41: #{transformer_forward.17} parent=35 // pred_check
        %p1178 = pneg %p341
      $region42: #{transformer_forward.17} parent=35 // pred_check_branch
        %1180 = sbr.rel (%p1178) target = $region44
      $region43: #{transformer_forward.17} parent=35 // pred_region
        %v1181 = vld [vmem:[#allocation3] sm:$0xff]
        %v1182 = vld [vmem:[#allocation3 + $0x8] sm:$0xff]
        %v1183 = vld [vmem:[#allocation3 + $0x10] sm:$0xff]
        %v1184 = vld [vmem:[#allocation3 + $0x18] sm:$0xff]
        %v1185 = vld [vmem:[#allocation3 + $0x20] sm:$0xff]
        %v1186 = vld [vmem:[#allocation3 + $0x28] sm:$0xff]
        %v1187 = vld [vmem:[#allocation3 + $0x30] sm:$0xff]
        %v1188 = vld [vmem:[#allocation3 + $0x38] sm:$0xff]
        %v1189 = vrcp.pop %v1181
        %v1190 = vrcp.pop %v1182
        %v1191 = vrcp.pop %v1183
        %v1192 = vrcp.pop %v1184
        %v1193 = vrcp.pop %v1185
        %v1194 = vrcp.pop %v1186
        %v1195 = vrcp.pop %v1187
        %v1196 = vrcp.pop %v1188
        %v1197 = vld [vmem:[#allocation4] sm:$0xff]
        %v1198 = vld [vmem:[#allocation4 + $0x8] sm:$0xff]
        %v1199 = vld [vmem:[#allocation4 + $0x10] sm:$0xff]
        %v1200 = vld [vmem:[#allocation4 + $0x18] sm:$0xff]
        %v1201 = vld [vmem:[#allocation4 + $0x20] sm:$0xff]
        %v1202 = vld [vmem:[#allocation4 + $0x28] sm:$0xff]
        %v1203 = vld [vmem:[#allocation4 + $0x30] sm:$0xff]
        %v1204 = vld [vmem:[#allocation4 + $0x38] sm:$0xff]
        %1206 = vset.pattern.permute.xlu0 0
        %1207 = vperm.xlu0 %1206, %v1189
        %v1208 = vpop.permute.xlu0 %1207
        %1211 = vset.pattern.permute.xlu0 0
        %1212 = vperm.xlu0 %1211, %v1190
        %v1213 = vpop.permute.xlu0 %1212
        %1216 = vset.pattern.permute.xlu0 0
        %1217 = vperm.xlu0 %1216, %v1191
        %v1218 = vpop.permute.xlu0 %1217
        %1221 = vset.pattern.permute.xlu0 0
        %1222 = vperm.xlu0 %1221, %v1192
        %v1223 = vpop.permute.xlu0 %1222
        %1226 = vset.pattern.permute.xlu0 0
        %1227 = vperm.xlu0 %1226, %v1193
        %v1228 = vpop.permute.xlu0 %1227
        %1231 = vset.pattern.permute.xlu0 0
        %1232 = vperm.xlu0 %1231, %v1194
        %v1233 = vpop.permute.xlu0 %1232
        %1236 = vset.pattern.permute.xlu0 0
        %1237 = vperm.xlu0 %1236, %v1195
        %v1238 = vpop.permute.xlu0 %1237
        %1241 = vset.pattern.permute.xlu0 0
        %1242 = vperm.xlu0 %1241, %v1196
        %v1243 = vpop.permute.xlu0 %1242
        %v1245 = vmul.f32 %v1197, %v1208
        %v1246 = vmul.f32 %v1198, %v1213
        %v1247 = vmul.f32 %v1199, %v1218
        %v1248 = vmul.f32 %v1200, %v1223
        %v1249 = vmul.f32 %v1201, %v1228
        %v1250 = vmul.f32 %v1202, %v1233
        %v1251 = vmul.f32 %v1203, %v1238
        %v1252 = vmul.f32 %v1204, %v1243
        %1253 = vst.msk [vmem:[%s339] sm:$0xff] %vm515, %v1245
        %1254 = vst.msk [vmem:[%s339 + $0x8] sm:$0xff] %vm515, %v1246
        %1255 = vst.msk [vmem:[%s339 + $0x10] sm:$0xff] %vm515, %v1247
        %1256 = vst.msk [vmem:[%s339 + $0x18] sm:$0xff] %vm515, %v1248
        %1257 = vst.msk [vmem:[%s339 + $0x20] sm:$0xff] %vm515, %v1249
        %1258 = vst.msk [vmem:[%s339 + $0x28] sm:$0xff] %vm515, %v1250
        %1259 = vst.msk [vmem:[%s339 + $0x30] sm:$0xff] %vm515, %v1251
        %1260 = vst.msk [vmem:[%s339 + $0x38] sm:$0xff] %vm515, %v1252
      $region44: #{transformer_forward.17} parent=35 // pred_fallthru
        _
      %s1261 = smul.u32 2, %s21
      %p1262 = scmp.lt.s32.totalorder %s20, 1
      %s1263 = scalar_select %p1262, %s20, 1
      %p1264 = scmp.lt.s32.totalorder %s1261, 1
      %s1265 = scalar_select %p1264, %s1261, 1
      %s1266 = smul.addr %s1263, 8
      %s1267 = sadd.s32 %s1265, %s1266
      %s1268 = smul.addr %s1267, 8
      %s1269 = scalar_lea.vmem %s4, %s1268
      // Predicated region
      $region45: #{transformer_forward.17} parent=35 // pred_check
        %p1270 = pneg %p166
      $region46: #{transformer_forward.17} parent=35 // pred_check_branch
        %1272 = sbr.rel (%p1270) target = $region48
      $region47: #{transformer_forward.17} parent=35 // pred_region
        %s1273 = smul.u32 2, %s21
      $region48: #{transformer_forward.17} parent=35 // pred_fallthru
        _
    $region36: #{transformer_forward.17} parent=5 // pred_fallthru
      _
    %p1274 = scmp.le.s32.totalorder 2, %s10
    // Predicated region
    $region49: #{transformer_forward.17} parent=5 // pred_check
      %p1275 = pneg %p1274
    $region50: #{transformer_forward.17} parent=5 // pred_check_branch
      %1277 = sbr.rel (%p1275) target = $region52
    $region51: #{transformer_forward.17} parent=5 // pred_region
      %s1278 = ssub.s32 %s10, 2
      // Predicated region
      $region53: #{transformer_forward.17} parent=51 // pred_check
        %p1279 = pneg %p172
      $region54: #{transformer_forward.17} parent=51 // pred_check_branch
        %1281 = sbr.rel (%p1279) target = $region56
      $region55: #{transformer_forward.17} parent=51 // pred_region
        %s1282 = smul.u32 2, %s24
        %p1283 = scmp.lt.s32.totalorder %s23, 1
        %s1284 = scalar_select %p1283, %s23, 1
        %p1285 = scmp.lt.s32.totalorder %s1282, 1
        %s1286 = scalar_select %p1285, %s1282, 1
        %s1287 = smul.addr %s1284, 8
        %s1288 = sadd.s32 %s1286, %s1287
        %s1289 = smul.addr %s1288, 8
        %s1290 = scalar_lea.vmem %s4, %s1289
      $region56: #{transformer_forward.17} parent=51 // pred_fallthru
        _
    $region52: #{transformer_forward.17} parent=5 // pred_fallthru
      _
  $region6: #{transformer_forward.17} parent=0 // loop_footer
    %s14 = sadd.s32 1, %s10
  $region7: #{transformer_forward.17} parent=0 // loop_footer_branch
    %9 = sbr.rel target = $region3
  $region8: #{transformer_forward.17} parent=0 // loop_exit
    _

// kernel: transformer_forward.29
$region0: #{transformer_forward.29}
  #allocation0 [shape = 'u32[]', space=smem, size = 0x4, offset = 0x4, fixed_abs, tag = 'smem constant byte address 0x4 - core index']
  #allocation1 [shape = 'u32[72,128]{1,0:T(1,128)}', space=vmem, size = 0x9000, scoped, tag = 'internal scratch']
  %s0 = inlined_call_operand.vmem [shape: f32[8,32], index: 0, kind: input, shape index: {}]
  %s1 = inlined_call_operand.vmem [shape: f32[1,32], index: 1, kind: input, shape index: {}]
  %s2 = inlined_call_operand.vmem [shape: f32[1,32], index: 2, kind: input, shape index: {}]
  %s3 = inlined_call_operand.vmem [shape: f32[8,32], index: 3, kind: output, shape index: {}]
  %s4 = sld [smem:[#allocation0]]
  $region22: #{transformer_forward.29} parent=0
    _
  %s6 = ssub.s32 1, %s4
  %s7 = scalar_select 0, %s6, %s4
  // Predicated region
  $region2: #{transformer_forward.29} parent=0 // pred_check
    _
  $region3: #{transformer_forward.29} parent=0 // pred_check_branch
    %9 = sbr.rel (0) target = $region5
  $region4: #{transformer_forward.29} parent=0 // pred_region
    _
  $region5: #{transformer_forward.29} parent=0 // pred_fallthru
    _
  // Predicated region
  $region6: #{transformer_forward.29} parent=0 // pred_check
    _
  $region7: #{transformer_forward.29} parent=0 // pred_check_branch
    %11 = sbr.rel (0) target = $region9
  $region8: #{transformer_forward.29} parent=0 // pred_region
    _
  $region9: #{transformer_forward.29} parent=0 // pred_fallthru
    _
  // Predicated region
  $region10: #{transformer_forward.29} parent=0 // pred_check
    _
  $region11: #{transformer_forward.29} parent=0 // pred_check_branch
    %13 = sbr.rel (0) target = $region13
  $region12: #{transformer_forward.29} parent=0 // pred_region
    _
  $region13: #{transformer_forward.29} parent=0 // pred_fallthru
    _
  %v14 = vld [vmem:[%s0] sm:$0xff]
  %vm15 = vcmask 261120
  %v16 = vsel %vm15, %v14, 0.0
  %17 = vadd.xlane.f32.xlu0 %v16
  %v18 = vpop.xlane.xlu0 %17
  %v19 = vrcp.pop 32.0
  %v20 = vmul.f32 32.0, %v19
  %v21 = vsub.f32 1.0, %v20
  %v22 = vmul.f32 %v19, %v21
  %v23 = vadd.f32 %v19, %v22
  %vm24 = vweird.f32 %v19
  %v25 = vsel %vm24, %v19, %v23
  %v26 = vmul.f32 %v18, %v25
  %v27 = vsub.f32 %v14, %v26
  %v28 = vmul.f32 %v27, %v27
  %v29 = vsel %vm15, %v28, 0.0
  %30 = vadd.xlane.f32.xlu0 %v29
  %v31 = vpop.xlane.xlu0 %30
  %v32 = vmul.f32 %v31, %v25
  %v33 = vadd.f32 %v32, 1e-05
  %v34 = vrsqrt.pop %v33
  %v35 = vmul.f32 %v34, %v33
  %v36 = vmul.f32 %v35, %v34
  %v37 = vmul.f32 0.5, %v36
  %v38 = vsub.f32 1.5, %v37
  %v39 = vmul.f32 %v34, %v38
  %vm40 = vweird.f32 %v33
  %vm41 = vweird.f32 %v34
  %vm42 = vmor %vm40, %vm41
  %v43 = vsel %vm42, %v34, %v39
  %v44 = vmul.f32 %v27, %v43
  %v45 = vld [vmem:[%s1] sm:$0x1]
  %v47 = vperm.slane %v45, 0
  %v49 = vmul.f32 %v44, %v47
  %v50 = vld [vmem:[%s2] sm:$0x1]
  %v52 = vperm.slane %v50, 0
  %v54 = vadd.f32 %v49, %v52
  %55 = vst.msk [vmem:[%s3] sm:$0xff] %vm15, %v54
  // Predicated region
  $region14: #{transformer_forward.29} parent=0 // pred_check
    _
  $region15: #{transformer_forward.29} parent=0 // pred_check_branch
    %57 = sbr.rel (0) target = $region17
  $region16: #{transformer_forward.29} parent=0 // pred_region
    _
  $region17: #{transformer_forward.29} parent=0 // pred_fallthru
    _
  // Predicated region
  $region18: #{transformer_forward.29} parent=0 // pred_check
    _
  $region19: #{transformer_forward.29} parent=0 // pred_check_branch
    %59 = sbr.rel (0) target = $region21
  $region20: #{transformer_forward.29} parent=0 // pred_region
    _
  $region21: #{transformer_forward.29} parent=0 // pred_fallthru
    _

// kernel: transformer_forward.24
$region0: #{transformer_forward.24}
  #allocation0 [shape = 'u32[]', space=smem, size = 0x4, offset = 0x4, fixed_abs, tag = 'smem constant byte address 0x4 - core index']
  #allocation1 [shape = 'u32[72,128]{1,0:T(1,128)}', space=vmem, size = 0x9000, scoped, tag = 'internal scratch']
  #allocation2 [shape = 'f32[4,16,1]{2,1,0:T(8,128)}', space=vmem, size = 0x8000, scoped, tag = 'scratch operand']
  #allocation3 [shape = 'f32[4,16,1]{2,1,0:T(8,128)}', space=vmem, size = 0x8000, scoped, tag = 'scratch operand']
  #allocation4 [shape = 'f32[4,16,8]{2,1,0:T(8,128)}', space=vmem, size = 0x8000, scoped, tag = 'scratch operand']
  %s0 = inlined_call_operand.vmem [shape: f32[2,1,128], index: 0, kind: input, shape index: {}]
  %s1 = inlined_call_operand.vmem [shape: f32[2,4,16,8], index: 1, kind: input, shape index: {}]
  %s2 = inlined_call_operand.vmem [shape: f32[2,4,128,8], index: 2, kind: input, shape index: {}]
  %s3 = inlined_call_operand.vmem [shape: f32[2,4,128,8], index: 3, kind: input, shape index: {}]
  %s4 = inlined_call_operand.vmem [shape: f32[2,4,16,8], index: 4, kind: output, shape index: {0}]
  %s5 = inlined_call_operand.vmem [shape: f32[2,4,16,128], index: 5, kind: output, shape index: {1}]
  %6 = xla_tuple %s4, %s5
  %s7 = sld [smem:[#allocation0]]
  $region65: #{transformer_forward.24} parent=0
    _
  %s9 = ssub.s32 1, %s7
  %s10 = scalar_select 0, %s9, %s7
  loop: start=0, step=1, limit=4
  $region2: #{transformer_forward.24} parent=0 // loop_pre_header
    _
  $region3: #{transformer_forward.24} parent=0 // loop_header
    %s12 = sphi 0, %s16
    %p13 = scmp.ge.s32.totalorder %s12, 4
    %s19 = sphi 0, %s38
    %s20 = sphi 0, %s34
    %s21 = sphi 0, %s30
    %s22 = sphi 0, %s19
    %s23 = sphi 0, %s20
    %s24 = sphi 0, %s21
    %s25 = sphi 0, %s22
    %s26 = sphi 0, %s23
    %s27 = sphi 0, %s24
    %s43 = sphi 0, %s45
    %s46 = sphi 0, %s43
    %s47 = sphi 0, %s46
    %s63 = sphi 0, %s47
    %s71 = sphi 0, %s73
    %s74 = sphi 0, %s71
    %s75 = sphi 0, %s74
    %s91 = sphi 0, %s75
    %s99 = sphi 0, %s101
    %s102 = sphi 0, %s99
    %s103 = sphi 0, %s102
    %s119 = sphi 0, %s103
    %s127 = sphi 0, %s129
    %s130 = sphi 0, %s127
    %s131 = sphi 0, %s130
    %s147 = sphi 0, %s131
    %s155 = sphi 0, %s157
    %s158 = sphi 0, %s155
    %s159 = sphi 0, %s158
    %s175 = sphi 0, %s159
    %s185 = sphi 0, %s187
    %s188 = sphi 0, %s185
    %s189 = sphi 0, %s188
    %s205 = sphi 0, %s189
  $region4: #{transformer_forward.24} parent=0 // loop_header_branch
    %15 = sbr.rel (%p13) target = $region8
  $region5: #{transformer_forward.24} parent=0 // loop_body
    %s17 = ssub.s32 %s12, 1
    %s18 = ssub.s32 %s12, 2
    %s28 = sadd.s32 1, %s21
    %p29 = scmp.ge.s32.totalorder %s28, 1
    %s30 = scalar_select %p29, 0, %s28
    %s31 = sadd.s32 1, %s20
    %s32 = scalar_select %p29, %s31, %s20
    %p33 = scmp.ge.s32.totalorder %s32, 1
    %s34 = scalar_select %p33, 0, %s32
    %s35 = sadd.s32 1, %s19
    %s36 = scalar_select %p33, %s35, %s19
    %p37 = scmp.ge.s32.totalorder %s36, 2
    %s38 = scalar_select %p37, 0, %s36
    %s39 = ssub.s32 %s19, %s38
    %s40 = ssub.s32 %s21, %s30
    %s41 = sor.u32 %s39, %s40
    %p42 = scmp.eq.s32.totalorder %s41, 0
    %s44 = sadd.s32 %s43, 1
    %s45 = scalar_select %p42, %s43, %s44
    %p48 = pneg %p42
    %p49 = scmp.eq.s32.totalorder %s12, 1
    %p50 = por %p48, %p49
    %p51 = scmp.ne.s32.totalorder %s43, %s46
    %p52 = scmp.eq.s32.totalorder %s12, 0
    %p53 = por %p51, %p52
    %p54 = scmp.ne.s32.totalorder %s43, %s46
    %p55 = scmp.eq.s32.totalorder %s17, 1
    %p56 = por %p54, %p55
    %p57 = scmp.ne.s32.totalorder %s46, %s47
    %p58 = scmp.eq.s32.totalorder %s17, 0
    %p59 = por %p57, %p58
    %p60 = scmp.ne.s32.totalorder %s46, %s47
    %p61 = scmp.eq.s32.totalorder %s18, 1
    %p62 = por %p60, %p61
    %p64 = scmp.ne.s32.totalorder %s47, %s63
    %p65 = scmp.eq.s32.totalorder %s18, 0
    %p66 = por %p64, %p65
    %s67 = ssub.s32 %s19, %s38
    %s68 = ssub.s32 %s20, %s34
    %s69 = sor.u32 %s67, %s68
    %p70 = scmp.eq.s32.totalorder %s69, 0
    %s72 = sadd.s32 %s71, 1
    %s73 = scalar_select %p70, %s71, %s72
    %p76 = pneg %p70
    %p77 = scmp.eq.s32.totalorder %s12, 1
    %p78 = por %p76, %p77
    %p79 = scmp.ne.s32.totalorder %s71, %s74
    %p80 = scmp.eq.s32.totalorder %s12, 0
    %p81 = por %p79, %p80
    %p82 = scmp.ne.s32.totalorder %s71, %s74
    %p83 = scmp.eq.s32.totalorder %s17, 1
    %p84 = por %p82, %p83
    %p85 = scmp.ne.s32.totalorder %s74, %s75
    %p86 = scmp.eq.s32.totalorder %s17, 0
    %p87 = por %p85, %p86
    %p88 = scmp.ne.s32.totalorder %s74, %s75
    %p89 = scmp.eq.s32.totalorder %s18, 1
    %p90 = por %p88, %p89
    %p92 = scmp.ne.s32.totalorder %s75, %s91
    %p93 = scmp.eq.s32.totalorder %s18, 0
    %p94 = por %p92, %p93
    %s95 = ssub.s32 %s19, %s38
    %s96 = ssub.s32 %s21, %s30
    %s97 = sor.u32 %s95, %s96
    %p98 = scmp.eq.s32.totalorder %s97, 0
    %s100 = sadd.s32 %s99, 1
    %s101 = scalar_select %p98, %s99, %s100
    %p104 = pneg %p98
    %p105 = scmp.eq.s32.totalorder %s12, 1
    %p106 = por %p104, %p105
    %p107 = scmp.ne.s32.totalorder %s99, %s102
    %p108 = scmp.eq.s32.totalorder %s12, 0
    %p109 = por %p107, %p108
    %p110 = scmp.ne.s32.totalorder %s99, %s102
    %p111 = scmp.eq.s32.totalorder %s17, 1
    %p112 = por %p110, %p111
    %p113 = scmp.ne.s32.totalorder %s102, %s103
    %p114 = scmp.eq.s32.totalorder %s17, 0
    %p115 = por %p113, %p114
    %p116 = scmp.ne.s32.totalorder %s102, %s103
    %p117 = scmp.eq.s32.totalorder %s18, 1
    %p118 = por %p116, %p117
    %p120 = scmp.ne.s32.totalorder %s103, %s119
    %p121 = scmp.eq.s32.totalorder %s18, 0
    %p122 = por %p120, %p121
    %s123 = ssub.s32 %s19, %s38
    %s124 = ssub.s32 %s21, %s30
    %s125 = sor.u32 %s123, %s124
    %p126 = scmp.eq.s32.totalorder %s125, 0
    %s128 = sadd.s32 %s127, 1
    %s129 = scalar_select %p126, %s127, %s128
    %p132 = pneg %p126
    %p133 = scmp.eq.s32.totalorder %s12, 1
    %p134 = por %p132, %p133
    %p135 = scmp.ne.s32.totalorder %s127, %s130
    %p136 = scmp.eq.s32.totalorder %s12, 0
    %p137 = por %p135, %p136
    %p138 = scmp.ne.s32.totalorder %s127, %s130
    %p139 = scmp.eq.s32.totalorder %s17, 1
    %p140 = por %p138, %p139
    %p141 = scmp.ne.s32.totalorder %s130, %s131
    %p142 = scmp.eq.s32.totalorder %s17, 0
    %p143 = por %p141, %p142
    %p144 = scmp.ne.s32.totalorder %s130, %s131
    %p145 = scmp.eq.s32.totalorder %s18, 1
    %p146 = por %p144, %p145
    %p148 = scmp.ne.s32.totalorder %s131, %s147
    %p149 = scmp.eq.s32.totalorder %s18, 0
    %p150 = por %p148, %p149
    %s151 = ssub.s32 %s19, %s38
    %s152 = ssub.s32 %s20, %s34
    %s153 = sor.u32 %s151, %s152
    %p154 = scmp.eq.s32.totalorder %s153, 0
    %s156 = sadd.s32 %s155, 1
    %s157 = scalar_select %p154, %s155, %s156
    %p160 = pneg %p154
    %p161 = scmp.eq.s32.totalorder %s12, 1
    %p162 = por %p160, %p161
    %p163 = scmp.ne.s32.totalorder %s155, %s158
    %p164 = scmp.eq.s32.totalorder %s12, 0
    %p165 = por %p163, %p164
    %p166 = scmp.ne.s32.totalorder %s155, %s158
    %p167 = scmp.eq.s32.totalorder %s17, 1
    %p168 = por %p166, %p167
    %p169 = scmp.ne.s32.totalorder %s158, %s159
    %p170 = scmp.eq.s32.totalorder %s17, 0
    %p171 = por %p169, %p170
    %p172 = scmp.ne.s32.totalorder %s158, %s159
    %p173 = scmp.eq.s32.totalorder %s18, 1
    %p174 = por %p172, %p173
    %p176 = scmp.ne.s32.totalorder %s159, %s175
    %p177 = scmp.eq.s32.totalorder %s18, 0
    %p178 = por %p176, %p177
    %s179 = ssub.s32 %s19, %s38
    %s180 = ssub.s32 %s20, %s34
    %s181 = sor.u32 %s179, %s180
    %s182 = ssub.s32 %s21, %s30
    %s183 = sor.u32 %s181, %s182
    %p184 = scmp.eq.s32.totalorder %s183, 0
    %s186 = sadd.s32 %s185, 1
    %s187 = scalar_select %p184, %s185, %s186
    %p190 = pneg %p184
    %p191 = scmp.eq.s32.totalorder %s12, 1
    %p192 = por %p190, %p191
    %p193 = scmp.ne.s32.totalorder %s185, %s188
    %p194 = scmp.eq.s32.totalorder %s12, 0
    %p195 = por %p193, %p194
    %p196 = scmp.ne.s32.totalorder %s185, %s188
    %p197 = scmp.eq.s32.totalorder %s17, 1
    %p198 = por %p196, %p197
    %p199 = scmp.ne.s32.totalorder %s188, %s189
    %p200 = scmp.eq.s32.totalorder %s17, 0
    %p201 = por %p199, %p200
    %p202 = scmp.ne.s32.totalorder %s188, %s189
    %p203 = scmp.eq.s32.totalorder %s18, 1
    %p204 = por %p202, %p203
    %p206 = scmp.ne.s32.totalorder %s189, %s205
    %p207 = scmp.eq.s32.totalorder %s18, 0
    %p208 = por %p206, %p207
    %p209 = scmp.le.s32.totalorder 1, %s12
    %p210 = scmp.lt.s32.totalorder %s12, 3
    %p211 = pnand %p209, %p210
    %p212 = pneg %p211
    // Predicated region
    $region9: #{transformer_forward.24} parent=5 // pred_check
      _
    $region10: #{transformer_forward.24} parent=5 // pred_check_branch
      %214 = sbr.rel (%p211) target = $region12
    $region11: #{transformer_forward.24} parent=5 // pred_region
      %s215 = ssub.s32 %s12, 1
    $region12: #{transformer_forward.24} parent=5 // pred_fallthru
      _
    %p216 = scmp.lt.s32.totalorder %s12, 2
    // Predicated region
    $region13: #{transformer_forward.24} parent=5 // pred_check
      %p217 = pneg %p216
    $region14: #{transformer_forward.24} parent=5 // pred_check_branch
      %219 = sbr.rel (%p217) target = $region16
    $region15: #{transformer_forward.24} parent=5 // pred_region
      // Predicated region
      $region17: #{transformer_forward.24} parent=15 // pred_check
        %p220 = pneg %p53
      $region18: #{transformer_forward.24} parent=15 // pred_check_branch
        %222 = sbr.rel (%p220) target = $region20
      $region19: #{transformer_forward.24} parent=15 // pred_region
        %p223 = scmp.lt.s32.totalorder %s19, 1
        %s224 = scalar_select %p223, %s19, 1
        %p225 = scmp.lt.s32.totalorder %s21, 0
        %s226 = scalar_select %p225, %s21, 0
        %s227 = sadd.s32 %s226, %s224
        %s228 = scalar_lea.vmem %s0, %s227
      $region20: #{transformer_forward.24} parent=15 // pred_fallthru
        _
      // Predicated region
      $region21: #{transformer_forward.24} parent=15 // pred_check
        %p229 = pneg %p81
      $region22: #{transformer_forward.24} parent=15 // pred_check_branch
        %231 = sbr.rel (%p229) target = $region24
      $region23: #{transformer_forward.24} parent=15 // pred_region
        %s232 = smul.u32 2, %s20
        %p233 = scmp.lt.s32.totalorder %s19, 1
        %s234 = scalar_select %p233, %s19, 1
        %p235 = scmp.lt.s32.totalorder %s232, 1
        %s236 = scalar_select %p235, %s232, 1
        %s237 = smul.addr %s234, 8
        %s238 = sadd.s32 %s236, %s237
        %s239 = smul.addr %s238, 8
        %s240 = scalar_lea.vmem %s1, %s239
        %s241 = smul.u32 2, %s20
      $region24: #{transformer_forward.24} parent=15 // pred_fallthru
        _
      // Predicated region
      $region25: #{transformer_forward.24} parent=15 // pred_check
        %p242 = pneg %p109
      $region26: #{transformer_forward.24} parent=15 // pred_check_branch
        %244 = sbr.rel (%p242) target = $region28
      $region27: #{transformer_forward.24} parent=15 // pred_region
        %s245 = smul.u32 16, %s21
        %p246 = scmp.lt.s32.totalorder %s19, 1
        %s247 = scalar_select %p246, %s19, 1
        %p248 = scmp.lt.s32.totalorder %s245, 15
        %s249 = scalar_select %p248, %s245, 15
        %s250 = smul.addr %s247, 64
        %s251 = sadd.s32 %s249, %s250
        %s252 = smul.addr %s251, 8
        %s253 = scalar_lea.vmem %s2, %s252
        %s254 = smul.u32 16, %s21
      $region28: #{transformer_forward.24} parent=15 // pred_fallthru
        _
      // Predicated region
      $region29: #{transformer_forward.24} parent=15 // pred_check
        %p255 = pneg %p137
      $region30: #{transformer_forward.24} parent=15 // pred_check_branch
        %257 = sbr.rel (%p255) target = $region32
      $region31: #{transformer_forward.24} parent=15 // pred_region
        %s258 = smul.u32 16, %s21
        %p259 = scmp.lt.s32.totalorder %s19, 1
        %s260 = scalar_select %p259, %s19, 1
        %p261 = scmp.lt.s32.totalorder %s258, 15
        %s262 = scalar_select %p261, %s258, 15
        %s263 = smul.addr %s260, 64
        %s264 = sadd.s32 %s262, %s263
        %s265 = smul.addr %s264, 8
        %s266 = scalar_lea.vmem %s3, %s265
        %s267 = smul.u32 16, %s21
      $region32: #{transformer_forward.24} parent=15 // pred_fallthru
        _
    $region16: #{transformer_forward.24} parent=5 // pred_fallthru
      _
    %p268 = scmp.le.s32.totalorder 1, %s12
    %p269 = scmp.lt.s32.totalorder %s12, 3
    %p270 = pnand %p268, %p269
    %p271 = pneg %p270
    // Predicated region
    $region33: #{transformer_forward.24} parent=5 // pred_check
      _
    $region34: #{transformer_forward.24} parent=5 // pred_check_branch
      %273 = sbr.rel (%p270) target = $region36
    $region35: #{transformer_forward.24} parent=5 // pred_region
      %s274 = ssub.s32 %s12, 1
      %p275 = scmp.lt.s32.totalorder %s22, 1
      %s276 = scalar_select %p275, %s22, 1
      %p277 = scmp.lt.s32.totalorder %s24, 0
      %s278 = scalar_select %p277, %s24, 0
      %s279 = sadd.s32 %s278, %s276
      %s280 = scalar_lea.vmem %s0, %s279
      %p281 = pneg %p59
      %p282 = pneg %p56
      %s283 = smul.u32 2, %s23
      %p284 = scmp.lt.s32.totalorder %s22, 1
      %s285 = scalar_select %p284, %s22, 1
      %p286 = scmp.lt.s32.totalorder %s283, 1
      %s287 = scalar_select %p286, %s283, 1
      %s288 = smul.addr %s285, 8
      %s289 = sadd.s32 %s287, %s288
      %s290 = smul.addr %s289, 8
      %s291 = scalar_lea.vmem %s1, %s290
      %p292 = pneg %p87
      %p293 = pneg %p84
      %s294 = smul.u32 16, %s24
      %p295 = scmp.lt.s32.totalorder %s22, 1
      %s296 = scalar_select %p295, %s22, 1
      %p297 = scmp.lt.s32.totalorder %s294, 15
      %s298 = scalar_select %p297, %s294, 15
      %s299 = smul.addr %s296, 64
      %s300 = sadd.s32 %s298, %s299
      %s301 = smul.addr %s300, 8
      %s302 = scalar_lea.vmem %s2, %s301
      %p303 = pneg %p115
      %p304 = pneg %p112
      %s305 = smul.u32 16, %s24
      %p306 = scmp.lt.s32.totalorder %s22, 1
      %s307 = scalar_select %p306, %s22, 1
      %p308 = scmp.lt.s32.totalorder %s305, 15
      %s309 = scalar_select %p308, %s305, 15
      %s310 = smul.addr %s307, 64
      %s311 = sadd.s32 %s309, %s310
      %s312 = smul.addr %s311, 8
      %s313 = scalar_lea.vmem %s3, %s312
      %p314 = pneg %p143
      %p315 = pneg %p140
      %p316 = pneg %p171
      %p317 = pneg %p168
      %s318 = smul.u32 2, %s23
      %p319 = scmp.lt.s32.totalorder %s22, 1
      %s320 = scalar_select %p319, %s22, 1
      %p321 = scmp.lt.s32.totalorder %s318, 1
      %s322 = scalar_select %p321, %s318, 1
      %s323 = smul.addr %s320, 8
      %s324 = sadd.s32 %s322, %s323
      %s325 = smul.addr %s324, 8
      %s326 = scalar_lea.vmem %s4, %s325
      %p327 = pneg %p201
      %p328 = pneg %p198
      %s329 = smul.u32 2, %s23
      %p330 = scmp.lt.s32.totalorder %s22, 1
      %s331 = scalar_select %p330, %s22, 1
      %p332 = scmp.lt.s32.totalorder %s329, 1
      %s333 = scalar_select %p332, %s329, 1
      %p334 = scmp.lt.s32.totalorder %s24, 0
      %s335 = scalar_select %p334, %s24, 0
      %s336 = sadd.s32 %s335, %s333
      %s337 = smul.addr %s331, 8
      %s338 = sadd.s32 %s336, %s337
      %s339 = smul.addr %s338, 8
      %s340 = scalar_lea.vmem %s5, %s339
      %p341 = scmp.lt.s32.totalorder %s22, 1
      %s342 = scalar_select %p341, %s22, 1
      %p343 = scmp.lt.s32.totalorder %s24, 0
      %s344 = scalar_select %p343, %s24, 0
      %s345 = sadd.s32 %s344, %s342
      %s346 = scalar_lea.vmem %s0, %s345
      %s347 = smul.u32 2, %s23
      %p348 = scmp.lt.s32.totalorder %s22, 1
      %s349 = scalar_select %p348, %s22, 1
      %p350 = scmp.lt.s32.totalorder %s347, 1
      %s351 = scalar_select %p350, %s347, 1
      %s352 = smul.addr %s349, 8
      %s353 = sadd.s32 %s351, %s352
      %s354 = smul.addr %s353, 8
      %s355 = scalar_lea.vmem %s1, %s354
      %s356 = smul.u32 2, %s23
      %s357 = smul.u32 16, %s24
      %p358 = scmp.lt.s32.totalorder %s22, 1
      %s359 = scalar_select %p358, %s22, 1
      %p360 = scmp.lt.s32.totalorder %s357, 15
      %s361 = scalar_select %p360, %s357, 15
      %s362 = smul.addr %s359, 64
      %s363 = sadd.s32 %s361, %s362
      %s364 = smul.addr %s363, 8
      %s365 = scalar_lea.vmem %s2, %s364
      %s366 = smul.u32 16, %s24
      %s367 = smul.u32 16, %s24
      %p368 = scmp.lt.s32.totalorder %s22, 1
      %s369 = scalar_select %p368, %s22, 1
      %p370 = scmp.lt.s32.totalorder %s367, 15
      %s371 = scalar_select %p370, %s367, 15
      %s372 = smul.addr %s369, 64
      %s373 = sadd.s32 %s371, %s372
      %s374 = smul.addr %s373, 8
      %s375 = scalar_lea.vmem %s3, %s374
      %s376 = smul.u32 16, %s24
      %s377 = smul.u32 2, %s23
      %p378 = scmp.lt.s32.totalorder %s22, 1
      %s379 = scalar_select %p378, %s22, 1
      %p380 = scmp.lt.s32.totalorder %s377, 1
      %s381 = scalar_select %p380, %s377, 1
      %s382 = smul.addr %s379, 8
      %s383 = sadd.s32 %s381, %s382
      %s384 = smul.addr %s383, 8
      %s385 = scalar_lea.vmem %s4, %s384
      %s386 = smul.u32 2, %s23
      %s387 = smul.u32 2, %s23
      %p388 = scmp.lt.s32.totalorder %s22, 1
      %s389 = scalar_select %p388, %s22, 1
      %p390 = scmp.lt.s32.totalorder %s387, 1
      %s391 = scalar_select %p390, %s387, 1
      %p392 = scmp.lt.s32.totalorder %s24, 0
      %s393 = scalar_select %p392, %s24, 0
      %s394 = sadd.s32 %s393, %s391
      %s395 = smul.addr %s389, 8
      %s396 = sadd.s32 %s394, %s395
      %s397 = smul.addr %s396, 8
      %s398 = scalar_lea.vmem %s5, %s397
      %s399 = smul.u32 2, %s23
      %p400 = scmp.eq.s32.totalorder %s24, 0
      // Predicated region
      $region37: #{transformer_forward.24} parent=35 // pred_check
        %p401 = pneg %p400
      $region38: #{transformer_forward.24} parent=35 // pred_check_branch
        %403 = sbr.rel (%p401) target = $region40
      $region39: #{transformer_forward.24} parent=35 // pred_region
        %vm404 = vcmask 7168
        %405 = vst.msk [vmem:[#allocation2] sm:$0xff] %vm404, -inf
        %406 = vst.msk [vmem:[#allocation2 + $0x8] sm:$0xff] %vm404, -inf
        %407 = vst.msk [vmem:[#allocation2 + $0x10] sm:$0xff] %vm404, -inf
        %408 = vst.msk [vmem:[#allocation2 + $0x18] sm:$0xff] %vm404, -inf
        %409 = vst.msk [vmem:[#allocation2 + $0x20] sm:$0xff] %vm404, -inf
        %410 = vst.msk [vmem:[#allocation2 + $0x28] sm:$0xff] %vm404, -inf
        %411 = vst.msk [vmem:[#allocation2 + $0x30] sm:$0xff] %vm404, -inf
        %412 = vst.msk [vmem:[#allocation2 + $0x38] sm:$0xff] %vm404, -inf
        %413 = vst.msk [vmem:[#allocation3] sm:$0xff] %vm404, 0.0
        %414 = vst.msk [vmem:[#allocation3 + $0x8] sm:$0xff] %vm404, 0.0
        %415 = vst.msk [vmem:[#allocation3 + $0x10] sm:$0xff] %vm404, 0.0
        %416 = vst.msk [vmem:[#allocation3 + $0x18] sm:$0xff] %vm404, 0.0
        %417 = vst.msk [vmem:[#allocation3 + $0x20] sm:$0xff] %vm404, 0.0
        %418 = vst.msk [vmem:[#allocation3 + $0x28] sm:$0xff] %vm404, 0.0
        %419 = vst.msk [vmem:[#allocation3 + $0x30] sm:$0xff] %vm404, 0.0
        %420 = vst.msk [vmem:[#allocation3 + $0x38] sm:$0xff] %vm404, 0.0
        %vm421 = vcmask 64512
        %422 = vst.msk [vmem:[#allocation4] sm:$0xff] %vm421, 0.0
        %423 = vst.msk [vmem:[#allocation4 + $0x8] sm:$0xff] %vm421, 0.0
        %424 = vst.msk [vmem:[#allocation4 + $0x10] sm:$0xff] %vm421, 0.0
        %425 = vst.msk [vmem:[#allocation4 + $0x18] sm:$0xff] %vm421, 0.0
        %426 = vst.msk [vmem:[#allocation4 + $0x20] sm:$0xff] %vm421, 0.0
        %427 = vst.msk [vmem:[#allocation4 + $0x28] sm:$0xff] %vm421, 0.0
        %428 = vst.msk [vmem:[#allocation4 + $0x30] sm:$0xff] %vm421, 0.0
        %429 = vst.msk [vmem:[#allocation4 + $0x38] sm:$0xff] %vm421, 0.0
      $region40: #{transformer_forward.24} parent=35 // pred_fallthru
        _
      %v430 = vld [vmem:[%s355] sm:$0xff]
      %v431 = vld [vmem:[%s355 + $0x8] sm:$0xff]
      %v432 = vld [vmem:[%s355 + $0x10] sm:$0xff]
      %v433 = vld [vmem:[%s355 + $0x18] sm:$0xff]
      %v434 = vld [vmem:[%s355 + $0x20] sm:$0xff]
      %v435 = vld [vmem:[%s355 + $0x28] sm:$0xff]
      %v436 = vld [vmem:[%s355 + $0x30] sm:$0xff]
      %v437 = vld [vmem:[%s355 + $0x38] sm:$0xff]
      %v438 = vmul.f32 %v430, 0.35355338
      %v439 = vmul.f32 %v431, 0.35355338
      %v440 = vmul.f32 %v432, 0.35355338
      %v441 = vmul.f32 %v433, 0.35355338
      %v442 = vmul.f32 %v434, 0.35355338
      %v443 = vmul.f32 %v435, 0.35355338
      %v444 = vmul.f32 %v436, 0.35355338
      %v445 = vmul.f32 %v437, 0.35355338
      %v446 = vld [vmem:[%s365] sm:$0xff]
      %v447 = vld [vmem:[%s365 + $0x8] sm:$0xff]
      %v448 = vld [vmem:[%s365 + $0x10] sm:$0xff]
      %v449 = vld [vmem:[%s365 + $0x18] sm:$0xff]
      %v450 = vld [vmem:[%s365 + $0x20] sm:$0xff]
      %v451 = vld [vmem:[%s365 + $0x28] sm:$0xff]
      %v452 = vld [vmem:[%s365 + $0x30] sm:$0xff]
      %v453 = vld [vmem:[%s365 + $0x38] sm:$0xff]
      %v454 = vld [vmem:[%s365 + $0x40] sm:$0xff]
      %v455 = vld [vmem:[%s365 + $0x48] sm:$0xff]
      %v456 = vld [vmem:[%s365 + $0x50] sm:$0xff]
      %v457 = vld [vmem:[%s365 + $0x58] sm:$0xff]
      %v458 = vld [vmem:[%s365 + $0x60] sm:$0xff]
      %v459 = vld [vmem:[%s365 + $0x68] sm:$0xff]
      %v460 = vld [vmem:[%s365 + $0x70] sm:$0xff]
      %v461 = vld [vmem:[%s365 + $0x78] sm:$0xff]
      %v462 = vld [vmem:[%s365 + $0x80] sm:$0xff]
      %v463 = vld [vmem:[%s365 + $0x88] sm:$0xff]
      %v464 = vld [vmem:[%s365 + $0x90] sm:$0xff]
      %v465 = vld [vmem:[%s365 + $0x98] sm:$0xff]
      %v466 = vld [vmem:[%s365 + $0xa0] sm:$0xff]
      %v467 = vld [vmem:[%s365 + $0xa8] sm:$0xff]
      %v468 = vld [vmem:[%s365 + $0xb0] sm:$0xff]
      %v469 = vld [vmem:[%s365 + $0xb8] sm:$0xff]
      %v470 = vld [vmem:[%s365 + $0xc0] sm:$0xff]
      %v471 = vld [vmem:[%s365 + $0xc8] sm:$0xff]
      %v472 = vld [vmem:[%s365 + $0xd0] sm:$0xff]
      %v473 = vld [vmem:[%s365 + $0xd8] sm:$0xff]
      %v474 = vld [vmem:[%s365 + $0xe0] sm:$0xff]
      %v475 = vld [vmem:[%s365 + $0xe8] sm:$0xff]
      %v476 = vld [vmem:[%s365 + $0xf0] sm:$0xff]
      %v477 = vld [vmem:[%s365 + $0xf8] sm:$0xff]
      %v478 = vld [vmem:[%s365 + $0x100] sm:$0xff]
      %v479 = vld [vmem:[%s365 + $0x108] sm:$0xff]
      %v480 = vld [vmem:[%s365 + $0x110] sm:$0xff]
      %v481 = vld [vmem:[%s365 + $0x118] sm:$0xff]
      %v482 = vld [vmem:[%s365 + $0x120] sm:$0xff]
      %v483 = vld [vmem:[%s365 + $0x128] sm:$0xff]
      %v484 = vld [vmem:[%s365 + $0x130] sm:$0xff]
      %v485 = vld [vmem:[%s365 + $0x138] sm:$0xff]
      %v486 = vld [vmem:[%s365 + $0x140] sm:$0xff]
      %v487 = vld [vmem:[%s365 + $0x148] sm:$0xff]
      %v488 = vld [vmem:[%s365 + $0x150] sm:$0xff]
      %v489 = vld [vmem:[%s365 + $0x158] sm:$0xff]
      %v490 = vld [vmem:[%s365 + $0x160] sm:$0xff]
      %v491 = vld [vmem:[%s365 + $0x168] sm:$0xff]
      %v492 = vld [vmem:[%s365 + $0x170] sm:$0xff]
      %v493 = vld [vmem:[%s365 + $0x178] sm:$0xff]
      %v494 = vld [vmem:[%s365 + $0x180] sm:$0xff]
      %v495 = vld [vmem:[%s365 + $0x188] sm:$0xff]
      %v496 = vld [vmem:[%s365 + $0x190] sm:$0xff]
      %v497 = vld [vmem:[%s365 + $0x198] sm:$0xff]
      %v498 = vld [vmem:[%s365 + $0x1a0] sm:$0xff]
      %v499 = vld [vmem:[%s365 + $0x1a8] sm:$0xff]
      %v500 = vld [vmem:[%s365 + $0x1b0] sm:$0xff]
      %v501 = vld [vmem:[%s365 + $0x1b8] sm:$0xff]
      %v502 = vld [vmem:[%s365 + $0x1c0] sm:$0xff]
      %v503 = vld [vmem:[%s365 + $0x1c8] sm:$0xff]
      %v504 = vld [vmem:[%s365 + $0x1d0] sm:$0xff]
      %v505 = vld [vmem:[%s365 + $0x1d8] sm:$0xff]
      %v506 = vld [vmem:[%s365 + $0x1e0] sm:$0xff]
      %v507 = vld [vmem:[%s365 + $0x1e8] sm:$0xff]
      %v508 = vld [vmem:[%s365 + $0x1f0] sm:$0xff]
      %v509 = vld [vmem:[%s365 + $0x1f8] sm:$0xff]
      %v510 = vld [vmem:[%s375] sm:$0xff]
      %v511 = vld [vmem:[%s375 + $0x8] sm:$0xff]
      %v512 = vld [vmem:[%s375 + $0x10] sm:$0xff]
      %v513 = vld [vmem:[%s375 + $0x18] sm:$0xff]
      %v514 = vld [vmem:[%s375 + $0x20] sm:$0xff]
      %v515 = vld [vmem:[%s375 + $0x28] sm:$0xff]
      %v516 = vld [vmem:[%s375 + $0x30] sm:$0xff]
      %v517 = vld [vmem:[%s375 + $0x38] sm:$0xff]
      %v518 = vld [vmem:[%s375 + $0x40] sm:$0xff]
      %v519 = vld [vmem:[%s375 + $0x48] sm:$0xff]
      %v520 = vld [vmem:[%s375 + $0x50] sm:$0xff]
      %v521 = vld [vmem:[%s375 + $0x58] sm:$0xff]
      %v522 = vld [vmem:[%s375 + $0x60] sm:$0xff]
      %v523 = vld [vmem:[%s375 + $0x68] sm:$0xff]
      %v524 = vld [vmem:[%s375 + $0x70] sm:$0xff]
      %v525 = vld [vmem:[%s375 + $0x78] sm:$0xff]
      %v526 = vld [vmem:[%s375 + $0x80] sm:$0xff]
      %v527 = vld [vmem:[%s375 + $0x88] sm:$0xff]
      %v528 = vld [vmem:[%s375 + $0x90] sm:$0xff]
      %v529 = vld [vmem:[%s375 + $0x98] sm:$0xff]
      %v530 = vld [vmem:[%s375 + $0xa0] sm:$0xff]
      %v531 = vld [vmem:[%s375 + $0xa8] sm:$0xff]
      %v532 = vld [vmem:[%s375 + $0xb0] sm:$0xff]
      %v533 = vld [vmem:[%s375 + $0xb8] sm:$0xff]
      %v534 = vld [vmem:[%s375 + $0xc0] sm:$0xff]
      %v535 = vld [vmem:[%s375 + $0xc8] sm:$0xff]
      %v536 = vld [vmem:[%s375 + $0xd0] sm:$0xff]
      %v537 = vld [vmem:[%s375 + $0xd8] sm:$0xff]
      %v538 = vld [vmem:[%s375 + $0xe0] sm:$0xff]
      %v539 = vld [vmem:[%s375 + $0xe8] sm:$0xff]
      %v540 = vld [vmem:[%s375 + $0xf0] sm:$0xff]
      %v541 = vld [vmem:[%s375 + $0xf8] sm:$0xff]
      %v542 = vld [vmem:[%s375 + $0x100] sm:$0xff]
      %v543 = vld [vmem:[%s375 + $0x108] sm:$0xff]
      %v544 = vld [vmem:[%s375 + $0x110] sm:$0xff]
      %v545 = vld [vmem:[%s375 + $0x118] sm:$0xff]
      %v546 = vld [vmem:[%s375 + $0x120] sm:$0xff]
      %v547 = vld [vmem:[%s375 + $0x128] sm:$0xff]
      %v548 = vld [vmem:[%s375 + $0x130] sm:$0xff]
      %v549 = vld [vmem:[%s375 + $0x138] sm:$0xff]
      %v550 = vld [vmem:[%s375 + $0x140] sm:$0xff]
      %v551 = vld [vmem:[%s375 + $0x148] sm:$0xff]
      %v552 = vld [vmem:[%s375 + $0x150] sm:$0xff]
      %v553 = vld [vmem:[%s375 + $0x158] sm:$0xff]
      %v554 = vld [vmem:[%s375 + $0x160] sm:$0xff]
      %v555 = vld [vmem:[%s375 + $0x168] sm:$0xff]
      %v556 = vld [vmem:[%s375 + $0x170] sm:$0xff]
      %v557 = vld [vmem:[%s375 + $0x178] sm:$0xff]
      %v558 = vld [vmem:[%s375 + $0x180] sm:$0xff]
      %v559 = vld [vmem:[%s375 + $0x188] sm:$0xff]
      %v560 = vld [vmem:[%s375 + $0x190] sm:$0xff]
      %v561 = vld [vmem:[%s375 + $0x198] sm:$0xff]
      %v562 = vld [vmem:[%s375 + $0x1a0] sm:$0xff]
      %v563 = vld [vmem:[%s375 + $0x1a8] sm:$0xff]
      %v564 = vld [vmem:[%s375 + $0x1b0] sm:$0xff]
      %v565 = vld [vmem:[%s375 + $0x1b8] sm:$0xff]
      %v566 = vld [vmem:[%s375 + $0x1c0] sm:$0xff]
      %v567 = vld [vmem:[%s375 + $0x1c8] sm:$0xff]
      %v568 = vld [vmem:[%s375 + $0x1d0] sm:$0xff]
      %v569 = vld [vmem:[%s375 + $0x1d8] sm:$0xff]
      %v570 = vld [vmem:[%s375 + $0x1e0] sm:$0xff]
      %v571 = vld [vmem:[%s375 + $0x1e8] sm:$0xff]
      %v572 = vld [vmem:[%s375 + $0x1f0] sm:$0xff]
      %v573 = vld [vmem:[%s375 + $0x1f8] sm:$0xff]
      %vm574 = vcmask 64512
      %v576 = vsel %vm574, %v438, 0
      %v579 = vsel %vm574, %v439, 0
      %v582 = vsel %vm574, %v446, 0
      %v585 = vsel %vm574, %v447, 0
      %v588 = vsel %vm574, %v448, 0
      %v591 = vsel %vm574, %v449, 0
      %v594 = vsel %vm574, %v450, 0
      %v597 = vsel %vm574, %v451, 0
      %v600 = vsel %vm574, %v452, 0
      %v603 = vsel %vm574, %v453, 0
      %v606 = vsel %vm574, %v454, 0
      %v609 = vsel %vm574, %v455, 0
      %v612 = vsel %vm574, %v456, 0
      %v615 = vsel %vm574, %v457, 0
      %v618 = vsel %vm574, %v458, 0
      %v621 = vsel %vm574, %v459, 0
      %v624 = vsel %vm574, %v460, 0
      %v627 = vsel %vm574, %v461, 0
      %629 = vmatpush.xpose.msra.mxu0 %v627
      %630 = vmatpush.xpose.msra.mxu0 %v624
      %631 = vmatpush.xpose.msra.mxu0 %v621
      %632 = vmatpush.xpose.msra.mxu0 %v618
      %633 = vmatpush.xpose.msra.mxu0 %v615
      %634 = vmatpush.xpose.msra.mxu0 %v612
      %635 = vmatpush.xpose.msra.mxu0 %v609
      %636 = vmatpush.xpose.msra.mxu0 %v606
      %637 = vmatpush.xpose.msra.mxu0 %v603
      %638 = vmatpush.xpose.msra.mxu0 %v600
      %639 = vmatpush.xpose.msra.mxu0 %v597
      %640 = vmatpush.xpose.msra.mxu0 %v594
      %641 = vmatpush.xpose.msra.mxu0 %v591
      %642 = vmatpush.xpose.msra.mxu0 %v588
      %643 = vmatpush.xpose.msra.mxu0 %v585
      %644 = vmatpush.xpose.msra.mxu0 %v582
      %645 = vmatmul.f32.gmra.mxu0 %v576
      %v646 = vpop.f32.mrf.mxu0
      %v647 = vadd.f32 0.0, %v646
      %648 = vmatmul.f32.gmra.mxu0 %v579
      %v649 = vpop.f32.mrf.mxu0
      %v650 = vadd.f32 0.0, %v649
      %651 = vdwg.mxu0
      %v653 = vsel %vm574, %v440, 0
      %v656 = vsel %vm574, %v441, 0
      %v659 = vsel %vm574, %v462, 0
      %v662 = vsel %vm574, %v463, 0
      %v665 = vsel %vm574, %v464, 0
      %v668 = vsel %vm574, %v465, 0
      %v671 = vsel %vm574, %v466, 0
      %v674 = vsel %vm574, %v467, 0
      %v677 = vsel %vm574, %v468, 0
      %v680 = vsel %vm574, %v469, 0
      %v683 = vsel %vm574, %v470, 0
      %v686 = vsel %vm574, %v471, 0
      %v689 = vsel %vm574, %v472, 0
      %v692 = vsel %vm574, %v473, 0
      %v695 = vsel %vm574, %v474, 0
      %v698 = vsel %vm574, %v475, 0
      %v701 = vsel %vm574, %v476, 0
      %v704 = vsel %vm574, %v477, 0
      %706 = vmatpush.xpose.msra.mxu0 %v704
      %707 = vmatpush.xpose.msra.mxu0 %v701
      %708 = vmatpush.xpose.msra.mxu0 %v698
      %709 = vmatpush.xpose.msra.mxu0 %v695
      %710 = vmatpush.xpose.msra.mxu0 %v692
      %711 = vmatpush.xpose.msra.mxu0 %v689
      %712 = vmatpush.xpose.msra.mxu0 %v686
      %713 = vmatpush.xpose.msra.mxu0 %v683
      %714 = vmatpush.xpose.msra.mxu0 %v680
      %715 = vmatpush.xpose.msra.mxu0 %v677
      %716 = vmatpush.xpose.msra.mxu0 %v674
      %717 = vmatpush.xpose.msra.mxu0 %v671
      %718 = vmatpush.xpose.msra.mxu0 %v668
      %719 = vmatpush.xpose.msra.mxu0 %v665
      %720 = vmatpush.xpose.msra.mxu0 %v662
      %721 = vmatpush.xpose.msra.mxu0 %v659
      %722 = vmatmul.f32.gmra.mxu0 %v653
      %v723 = vpop.f32.mrf.mxu0
      %v724 = vadd.f32 0.0, %v723
      %725 = vmatmul.f32.gmra.mxu0 %v656
      %v726 = vpop.f32.mrf.mxu0
      %v727 = vadd.f32 0.0, %v726
      %728 = vdwg.mxu0
      %v730 = vsel %vm574, %v442, 0
      %v733 = vsel %vm574, %v443, 0
      %v736 = vsel %vm574, %v478, 0
      %v739 = vsel %vm574, %v479, 0
      %v742 = vsel %vm574, %v480, 0
      %v745 = vsel %vm574, %v481, 0
      %v748 = vsel %vm574, %v482, 0
      %v751 = vsel %vm574, %v483, 0
      %v754 = vsel %vm574, %v484, 0
      %v757 = vsel %vm574, %v485, 0
      %v760 = vsel %vm574, %v486, 0
      %v763 = vsel %vm574, %v487, 0
      %v766 = vsel %vm574, %v488, 0
      %v769 = vsel %vm574, %v489, 0
      %v772 = vsel %vm574, %v490, 0
      %v775 = vsel %vm574, %v491, 0
      %v778 = vsel %vm574, %v492, 0
      %v781 = vsel %vm574, %v493, 0
      %783 = vmatpush.xpose.msra.mxu0 %v781
      %784 = vmatpush.xpose.msra.mxu0 %v778
      %785 = vmatpush.xpose.msra.mxu0 %v775
      %786 = vmatpush.xpose.msra.mxu0 %v772
      %787 = vmatpush.xpose.msra.mxu0 %v769
      %788 = vmatpush.xpose.msra.mxu0 %v766
      %789 = vmatpush.xpose.msra.mxu0 %v763
      %790 = vmatpush.xpose.msra.mxu0 %v760
      %791 = vmatpush.xpose.msra.mxu0 %v757
      %792 = vmatpush.xpose.msra.mxu0 %v754
      %793 = vmatpush.xpose.msra.mxu0 %v751
      %794 = vmatpush.xpose.msra.mxu0 %v748
      %795 = vmatpush.xpose.msra.mxu0 %v745
      %796 = vmatpush.xpose.msra.mxu0 %v742
      %797 = vmatpush.xpose.msra.mxu0 %v739
      %798 = vmatpush.xpose.msra.mxu0 %v736
      %799 = vmatmul.f32.gmra.mxu0 %v730
      %v800 = vpop.f32.mrf.mxu0
      %v801 = vadd.f32 0.0, %v800
      %802 = vmatmul.f32.gmra.mxu0 %v733
      %v803 = vpop.f32.mrf.mxu0
      %v804 = vadd.f32 0.0, %v803
      %805 = vdwg.mxu0
      %v807 = vsel %vm574, %v444, 0
      %v810 = vsel %vm574, %v445, 0
      %v813 = vsel %vm574, %v494, 0
      %v816 = vsel %vm574, %v495, 0
      %v819 = vsel %vm574, %v496, 0
      %v822 = vsel %vm574, %v497, 0
      %v825 = vsel %vm574, %v498, 0
      %v828 = vsel %vm574, %v499, 0
      %v831 = vsel %vm574, %v500, 0
      %v834 = vsel %vm574, %v501, 0
      %v837 = vsel %vm574, %v502, 0
      %v840 = vsel %vm574, %v503, 0
      %v843 = vsel %vm574, %v504, 0
      %v846 = vsel %vm574, %v505, 0
      %v849 = vsel %vm574, %v506, 0
      %v852 = vsel %vm574, %v507, 0
      %v855 = vsel %vm574, %v508, 0
      %v858 = vsel %vm574, %v509, 0
      %860 = vmatpush.xpose.msra.mxu0 %v858
      %861 = vmatpush.xpose.msra.mxu0 %v855
      %862 = vmatpush.xpose.msra.mxu0 %v852
      %863 = vmatpush.xpose.msra.mxu0 %v849
      %864 = vmatpush.xpose.msra.mxu0 %v846
      %865 = vmatpush.xpose.msra.mxu0 %v843
      %866 = vmatpush.xpose.msra.mxu0 %v840
      %867 = vmatpush.xpose.msra.mxu0 %v837
      %868 = vmatpush.xpose.msra.mxu0 %v834
      %869 = vmatpush.xpose.msra.mxu0 %v831
      %870 = vmatpush.xpose.msra.mxu0 %v828
      %871 = vmatpush.xpose.msra.mxu0 %v825
      %872 = vmatpush.xpose.msra.mxu0 %v822
      %873 = vmatpush.xpose.msra.mxu0 %v819
      %874 = vmatpush.xpose.msra.mxu0 %v816
      %875 = vmatpush.xpose.msra.mxu0 %v813
      %876 = vmatmul.f32.gmra.mxu0 %v807
      %v877 = vpop.f32.mrf.mxu0
      %v878 = vadd.f32 0.0, %v877
      %879 = vmatmul.f32.gmra.mxu0 %v810
      %v880 = vpop.f32.mrf.mxu0
      %v881 = vadd.f32 0.0, %v880
      %882 = vdwg.mxu0
      %v883 = vld [vmem:[%s346] sm:$0x1]
      %vm884 = vcmp.gt.f32.partialorder %v883, 0.0
      %v885 = vsel %vm884, 1, 0
      %v886 = vperm.slane %v885, 0
      %vm887 = vcmp.eq.s32.totalorder %v886, 1
      %v888 = vsel %vm887, %v647, -3.4028235e+38
      %v889 = vsel %vm887, %v650, -3.4028235e+38
      %v890 = vsel %vm887, %v724, -3.4028235e+38
      %v891 = vsel %vm887, %v727, -3.4028235e+38
      %v892 = vsel %vm887, %v801, -3.4028235e+38
      %v893 = vsel %vm887, %v804, -3.4028235e+38
      %v894 = vsel %vm887, %v878, -3.4028235e+38
      %v895 = vsel %vm887, %v881, -3.4028235e+38
      %v896 = vld [vmem:[#allocation2] sm:$0xff]
      %v897 = vld [vmem:[#allocation2 + $0x8] sm:$0xff]
      %v898 = vld [vmem:[#allocation2 + $0x10] sm:$0xff]
      %v899 = vld [vmem:[#allocation2 + $0x18] sm:$0xff]
      %v900 = vld [vmem:[#allocation2 + $0x20] sm:$0xff]
      %v901 = vld [vmem:[#allocation2 + $0x28] sm:$0xff]
      %v902 = vld [vmem:[#allocation2 + $0x30] sm:$0xff]
      %v903 = vld [vmem:[#allocation2 + $0x38] sm:$0xff]
      %904 = vmax.xlane.f32.xlu0 %v888
      %v905 = vpop.xlane.xlu0 %904
      %906 = vmax.xlane.f32.xlu0 %v889
      %v907 = vpop.xlane.xlu0 %906
      %908 = vmax.xlane.f32.xlu0 %v890
      %v909 = vpop.xlane.xlu0 %908
      %910 = vmax.xlane.f32.xlu0 %v891
      %v911 = vpop.xlane.xlu0 %910
      %912 = vmax.xlane.f32.xlu0 %v892
      %v913 = vpop.xlane.xlu0 %912
      %914 = vmax.xlane.f32.xlu0 %v893
      %v915 = vpop.xlane.xlu0 %914
      %916 = vmax.xlane.f32.xlu0 %v894
      %v917 = vpop.xlane.xlu0 %916
      %918 = vmax.xlane.f32.xlu0 %v895
      %v919 = vpop.xlane.xlu0 %918
      %v920 = vmax.f32 %v896, %v905
      %v921 = vmax.f32 %v897, %v907
      %v922 = vmax.f32 %v898, %v909
      %v923 = vmax.f32 %v899, %v911
      %v924 = vmax.f32 %v900, %v913
      %v925 = vmax.f32 %v901, %v915
      %v926 = vmax.f32 %v902, %v917
      %v927 = vmax.f32 %v903, %v919
      %v928 = vsub.f32 %v896, %v920
      %v929 = vsub.f32 %v897, %v921
      %v930 = vsub.f32 %v898, %v922
      %v931 = vsub.f32 %v899, %v923
      %v932 = vsub.f32 %v900, %v924
      %v933 = vsub.f32 %v901, %v925
      %v934 = vsub.f32 %v902, %v926
      %v935 = vsub.f32 %v903, %v927
      %v936 = vmul.f32 %v928, 1.442695
      %v937 = vpow.pop %v936
      %v938 = vmul.f32 %v929, 1.442695
      %v939 = vpow.pop %v938
      %v940 = vmul.f32 %v930, 1.442695
      %v941 = vpow.pop %v940
      %v942 = vmul.f32 %v931, 1.442695
      %v943 = vpow.pop %v942
      %v944 = vmul.f32 %v932, 1.442695
      %v945 = vpow.pop %v944
      %v946 = vmul.f32 %v933, 1.442695
      %v947 = vpow.pop %v946
      %v948 = vmul.f32 %v934, 1.442695
      %v949 = vpow.pop %v948
      %v950 = vmul.f32 %v935, 1.442695
      %v951 = vpow.pop %v950
      %953 = vset.pattern.permute.xlu0 0
      %954 = vperm.xlu0 %953, %v920
      %v955 = vpop.permute.xlu0 %954
      %958 = vset.pattern.permute.xlu0 0
      %959 = vperm.xlu0 %958, %v921
      %v960 = vpop.permute.xlu0 %959
      %963 = vset.pattern.permute.xlu0 0
      %964 = vperm.xlu0 %963, %v922
      %v965 = vpop.permute.xlu0 %964
      %968 = vset.pattern.permute.xlu0 0
      %969 = vperm.xlu0 %968, %v923
      %v970 = vpop.permute.xlu0 %969
      %973 = vset.pattern.permute.xlu0 0
      %974 = vperm.xlu0 %973, %v924
      %v975 = vpop.permute.xlu0 %974
      %978 = vset.pattern.permute.xlu0 0
      %979 = vperm.xlu0 %978, %v925
      %v980 = vpop.permute.xlu0 %979
      %983 = vset.pattern.permute.xlu0 0
      %984 = vperm.xlu0 %983, %v926
      %v985 = vpop.permute.xlu0 %984
      %988 = vset.pattern.permute.xlu0 0
      %989 = vperm.xlu0 %988, %v927
      %v990 = vpop.permute.xlu0 %989
      %v992 = vsub.f32 %v888, %v955
      %v993 = vsub.f32 %v889, %v960
      %v994 = vsub.f32 %v890, %v965
      %v995 = vsub.f32 %v891, %v970
      %v996 = vsub.f32 %v892, %v975
      %v997 = vsub.f32 %v893, %v980
      %v998 = vsub.f32 %v894, %v985
      %v999 = vsub.f32 %v895, %v990
      %v1000 = vmul.f32 %v992, 1.442695
      %v1001 = vpow.pop %v1000
      %v1002 = vmul.f32 %v993, 1.442695
      %v1003 = vpow.pop %v1002
      %v1004 = vmul.f32 %v994, 1.442695
      %v1005 = vpow.pop %v1004
      %v1006 = vmul.f32 %v995, 1.442695
      %v1007 = vpow.pop %v1006
      %v1008 = vmul.f32 %v996, 1.442695
      %v1009 = vpow.pop %v1008
      %v1010 = vmul.f32 %v997, 1.442695
      %v1011 = vpow.pop %v1010
      %v1012 = vmul.f32 %v998, 1.442695
      %v1013 = vpow.pop %v1012
      %v1014 = vmul.f32 %v999, 1.442695
      %v1015 = vpow.pop %v1014
      %v1016 = vld [vmem:[#allocation3] sm:$0xff]
      %v1017 = vld [vmem:[#allocation3 + $0x8] sm:$0xff]
      %v1018 = vld [vmem:[#allocation3 + $0x10] sm:$0xff]
      %v1019 = vld [vmem:[#allocation3 + $0x18] sm:$0xff]
      %v1020 = vld [vmem:[#allocation3 + $0x20] sm:$0xff]
      %v1021 = vld [vmem:[#allocation3 + $0x28] sm:$0xff]
      %v1022 = vld [vmem:[#allocation3 + $0x30] sm:$0xff]
      %v1023 = vld [vmem:[#allocation3 + $0x38] sm:$0xff]
      %v1024 = vmul.f32 %v937, %v1016
      %v1025 = vmul.f32 %v939, %v1017
      %v1026 = vmul.f32 %v941, %v1018
      %v1027 = vmul.f32 %v943, %v1019
      %v1028 = vmul.f32 %v945, %v1020
      %v1029 = vmul.f32 %v947, %v1021
      %v1030 = vmul.f32 %v949, %v1022
      %v1031 = vmul.f32 %v951, %v1023
      %1032 = vadd.xlane.f32.xlu0 %v1001
      %v1033 = vpop.xlane.xlu0 %1032
      %1034 = vadd.xlane.f32.xlu0 %v1003
      %v1035 = vpop.xlane.xlu0 %1034
      %1036 = vadd.xlane.f32.xlu0 %v1005
      %v1037 = vpop.xlane.xlu0 %1036
      %1038 = vadd.xlane.f32.xlu0 %v1007
      %v1039 = vpop.xlane.xlu0 %1038
      %1040 = vadd.xlane.f32.xlu0 %v1009
      %v1041 = vpop.xlane.xlu0 %1040
      %1042 = vadd.xlane.f32.xlu0 %v1011
      %v1043 = vpop.xlane.xlu0 %1042
      %1044 = vadd.xlane.f32.xlu0 %v1013
      %v1045 = vpop.xlane.xlu0 %1044
      %1046 = vadd.xlane.f32.xlu0 %v1015
      %v1047 = vpop.xlane.xlu0 %1046
      %v1048 = vadd.f32 %v1024, %v1033
      %v1049 = vadd.f32 %v1025, %v1035
      %v1050 = vadd.f32 %v1026, %v1037
      %v1051 = vadd.f32 %v1027, %v1039
      %v1052 = vadd.f32 %v1028, %v1041
      %v1053 = vadd.f32 %v1029, %v1043
      %v1054 = vadd.f32 %v1030, %v1045
      %v1055 = vadd.f32 %v1031, %v1047
      %vm1056 = vcmask 7168
      %1057 = vst.msk [vmem:[#allocation3] sm:$0xff] %vm1056, %v1048
      %1058 = vst.msk [vmem:[#allocation3 + $0x8] sm:$0xff] %vm1056, %v1049
      %1059 = vst.msk [vmem:[#allocation3 + $0x10] sm:$0xff] %vm1056, %v1050
      %1060 = vst.msk [vmem:[#allocation3 + $0x18] sm:$0xff] %vm1056, %v1051
      %1061 = vst.msk [vmem:[#allocation3 + $0x20] sm:$0xff] %vm1056, %v1052
      %1062 = vst.msk [vmem:[#allocation3 + $0x28] sm:$0xff] %vm1056, %v1053
      %1063 = vst.msk [vmem:[#allocation3 + $0x30] sm:$0xff] %vm1056, %v1054
      %1064 = vst.msk [vmem:[#allocation3 + $0x38] sm:$0xff] %vm1056, %v1055
      %v1065 = vld [vmem:[#allocation4] sm:$0xff]
      %v1066 = vld [vmem:[#allocation4 + $0x8] sm:$0xff]
      %v1067 = vld [vmem:[#allocation4 + $0x10] sm:$0xff]
      %v1068 = vld [vmem:[#allocation4 + $0x18] sm:$0xff]
      %v1069 = vld [vmem:[#allocation4 + $0x20] sm:$0xff]
      %v1070 = vld [vmem:[#allocation4 + $0x28] sm:$0xff]
      %v1071 = vld [vmem:[#allocation4 + $0x30] sm:$0xff]
      %v1072 = vld [vmem:[#allocation4 + $0x38] sm:$0xff]
      %1074 = vset.pattern.permute.xlu0 0
      %1075 = vperm.xlu0 %1074, %v937
      %v1076 = vpop.permute.xlu0 %1075
      %1079 = vset.pattern.permute.xlu0 0
      %1080 = vperm.xlu0 %1079, %v939
      %v1081 = vpop.permute.xlu0 %1080
      %1084 = vset.pattern.permute.xlu0 0
      %1085 = vperm.xlu0 %1084, %v941
      %v1086 = vpop.permute.xlu0 %1085
      %1089 = vset.pattern.permute.xlu0 0
      %1090 = vperm.xlu0 %1089, %v943
      %v1091 = vpop.permute.xlu0 %1090
      %1094 = vset.pattern.permute.xlu0 0
      %1095 = vperm.xlu0 %1094, %v945
      %v1096 = vpop.permute.xlu0 %1095
      %1099 = vset.pattern.permute.xlu0 0
      %1100 = vperm.xlu0 %1099, %v947
      %v1101 = vpop.permute.xlu0 %1100
      %1104 = vset.pattern.permute.xlu0 0
      %1105 = vperm.xlu0 %1104, %v949
      %v1106 = vpop.permute.xlu0 %1105
      %1109 = vset.pattern.permute.xlu0 0
      %1110 = vperm.xlu0 %1109, %v951
      %v1111 = vpop.permute.xlu0 %1110
      %v1113 = vmul.f32 %v1076, %v1065
      %v1114 = vmul.f32 %v1081, %v1066
      %v1115 = vmul.f32 %v1086, %v1067
      %v1116 = vmul.f32 %v1091, %v1068
      %v1117 = vmul.f32 %v1096, %v1069
      %v1118 = vmul.f32 %v1101, %v1070
      %v1119 = vmul.f32 %v1106, %v1071
      %v1120 = vmul.f32 %v1111, %v1072
      %1121 = vmatpush.msra.mxu0 %v525
      %1122 = vmatpush.msra.mxu0 %v524
      %1123 = vmatpush.msra.mxu0 %v523
      %1124 = vmatpush.msra.mxu0 %v522
      %1125 = vmatpush.msra.mxu0 %v521
      %1126 = vmatpush.msra.mxu0 %v520
      %1127 = vmatpush.msra.mxu0 %v519
      %1128 = vmatpush.msra.mxu0 %v518
      %1129 = vmatpush.msra.mxu0 %v517
      %1130 = vmatpush.msra.mxu0 %v516
      %1131 = vmatpush.msra.mxu0 %v515
      %1132 = vmatpush.msra.mxu0 %v514
      %1133 = vmatpush.msra.mxu0 %v513
      %1134 = vmatpush.msra.mxu0 %v512
      %1135 = vmatpush.msra.mxu0 %v511
      %1136 = vmatpush.msra.mxu0 %v510
      %1137 = vmatmul.f32.gmra.mxu0 %v1001
      %v1138 = vpop.f32.mrf.mxu0
      %v1139 = vadd.f32 0.0, %v1138
      %1140 = vmatmul.f32.gmra.mxu0 %v1003
      %v1141 = vpop.f32.mrf.mxu0
      %v1142 = vadd.f32 0.0, %v1141
      %1143 = vdwg.mxu0
      %1144 = vmatpush.msra.mxu0 %v541
      %1145 = vmatpush.msra.mxu0 %v540
      %1146 = vmatpush.msra.mxu0 %v539
      %1147 = vmatpush.msra.mxu0 %v538
      %1148 = vmatpush.msra.mxu0 %v537
      %1149 = vmatpush.msra.mxu0 %v536
      %1150 = vmatpush.msra.mxu0 %v535
      %1151 = vmatpush.msra.mxu0 %v534
      %1152 = vmatpush.msra.mxu0 %v533
      %1153 = vmatpush.msra.mxu0 %v532
      %1154 = vmatpush.msra.mxu0 %v531
      %1155 = vmatpush.msra.mxu0 %v530
      %1156 = vmatpush.msra.mxu0 %v529
      %1157 = vmatpush.msra.mxu0 %v528
      %1158 = vmatpush.msra.mxu0 %v527
      %1159 = vmatpush.msra.mxu0 %v526
      %1160 = vmatmul.f32.gmra.mxu0 %v1005
      %v1161 = vpop.f32.mrf.mxu0
      %v1162 = vadd.f32 0.0, %v1161
      %1163 = vmatmul.f32.gmra.mxu0 %v1007
      %v1164 = vpop.f32.mrf.mxu0
      %v1165 = vadd.f32 0.0, %v1164
      %1166 = vdwg.mxu0
      %1167 = vmatpush.msra.mxu0 %v557
      %1168 = vmatpush.msra.mxu0 %v556
      %1169 = vmatpush.msra.mxu0 %v555
      %1170 = vmatpush.msra.mxu0 %v554
      %1171 = vmatpush.msra.mxu0 %v553
      %1172 = vmatpush.msra.mxu0 %v552
      %1173 = vmatpush.msra.mxu0 %v551
      %1174 = vmatpush.msra.mxu0 %v550
      %1175 = vmatpush.msra.mxu0 %v549
      %1176 = vmatpush.msra.mxu0 %v548
      %1177 = vmatpush.msra.mxu0 %v547
      %1178 = vmatpush.msra.mxu0 %v546
      %1179 = vmatpush.msra.mxu0 %v545
      %1180 = vmatpush.msra.mxu0 %v544
      %1181 = vmatpush.msra.mxu0 %v543
      %1182 = vmatpush.msra.mxu0 %v542
      %1183 = vmatmul.f32.gmra.mxu0 %v1009
      %v1184 = vpop.f32.mrf.mxu0
      %v1185 = vadd.f32 0.0, %v1184
      %1186 = vmatmul.f32.gmra.mxu0 %v1011
      %v1187 = vpop.f32.mrf.mxu0
      %v1188 = vadd.f32 0.0, %v1187
      %1189 = vdwg.mxu0
      %1190 = vmatpush.msra.mxu0 %v573
      %1191 = vmatpush.msra.mxu0 %v572
      %1192 = vmatpush.msra.mxu0 %v571
      %1193 = vmatpush.msra.mxu0 %v570
      %1194 = vmatpush.msra.mxu0 %v569
      %1195 = vmatpush.msra.mxu0 %v568
      %1196 = vmatpush.msra.mxu0 %v567
      %1197 = vmatpush.msra.mxu0 %v566
      %1198 = vmatpush.msra.mxu0 %v565
      %1199 = vmatpush.msra.mxu0 %v564
      %1200 = vmatpush.msra.mxu0 %v563
      %1201 = vmatpush.msra.mxu0 %v562
      %1202 = vmatpush.msra.mxu0 %v561
      %1203 = vmatpush.msra.mxu0 %v560
      %1204 = vmatpush.msra.mxu0 %v559
      %1205 = vmatpush.msra.mxu0 %v558
      %1206 = vmatmul.f32.gmra.mxu0 %v1013
      %v1207 = vpop.f32.mrf.mxu0
      %v1208 = vadd.f32 0.0, %v1207
      %1209 = vmatmul.f32.gmra.mxu0 %v1015
      %v1210 = vpop.f32.mrf.mxu0
      %v1211 = vadd.f32 0.0, %v1210
      %1212 = vdwg.mxu0
      %v1213 = vadd.f32 %v1113, %v1139
      %v1214 = vadd.f32 %v1114, %v1142
      %v1215 = vadd.f32 %v1115, %v1162
      %v1216 = vadd.f32 %v1116, %v1165
      %v1217 = vadd.f32 %v1117, %v1185
      %v1218 = vadd.f32 %v1118, %v1188
      %v1219 = vadd.f32 %v1119, %v1208
      %v1220 = vadd.f32 %v1120, %v1211
      %1221 = vst.msk [vmem:[#allocation4] sm:$0xff] %vm574, %v1213
      %1222 = vst.msk [vmem:[#allocation4 + $0x8] sm:$0xff] %vm574, %v1214
      %1223 = vst.msk [vmem:[#allocation4 + $0x10] sm:$0xff] %vm574, %v1215
      %1224 = vst.msk [vmem:[#allocation4 + $0x18] sm:$0xff] %vm574, %v1216
      %1225 = vst.msk [vmem:[#allocation4 + $0x20] sm:$0xff] %vm574, %v1217
      %1226 = vst.msk [vmem:[#allocation4 + $0x28] sm:$0xff] %vm574, %v1218
      %1227 = vst.msk [vmem:[#allocation4 + $0x30] sm:$0xff] %vm574, %v1219
      %1228 = vst.msk [vmem:[#allocation4 + $0x38] sm:$0xff] %vm574, %v1220
      %1229 = vst.msk [vmem:[#allocation2] sm:$0xff] %vm1056, %v920
      %1230 = vst.msk [vmem:[#allocation2 + $0x8] sm:$0xff] %vm1056, %v921
      %1231 = vst.msk [vmem:[#allocation2 + $0x10] sm:$0xff] %vm1056, %v922
      %1232 = vst.msk [vmem:[#allocation2 + $0x18] sm:$0xff] %vm1056, %v923
      %1233 = vst.msk [vmem:[#allocation2 + $0x20] sm:$0xff] %vm1056, %v924
      %1234 = vst.msk [vmem:[#allocation2 + $0x28] sm:$0xff] %vm1056, %v925
      %1235 = vst.msk [vmem:[#allocation2 + $0x30] sm:$0xff] %vm1056, %v926
      %1236 = vst.msk [vmem:[#allocation2 + $0x38] sm:$0xff] %vm1056, %v927
      // Predicated region
      $region41: #{transformer_forward.24} parent=35 // pred_check
        %p1237 = pneg %p400
      $region42: #{transformer_forward.24} parent=35 // pred_check_branch
        %1239 = sbr.rel (%p1237) target = $region44
      $region43: #{transformer_forward.24} parent=35 // pred_region
        %v1240 = vld [vmem:[#allocation3] sm:$0xff]
        %v1241 = vld [vmem:[#allocation3 + $0x8] sm:$0xff]
        %v1242 = vld [vmem:[#allocation3 + $0x10] sm:$0xff]
        %v1243 = vld [vmem:[#allocation3 + $0x18] sm:$0xff]
        %v1244 = vld [vmem:[#allocation3 + $0x20] sm:$0xff]
        %v1245 = vld [vmem:[#allocation3 + $0x28] sm:$0xff]
        %v1246 = vld [vmem:[#allocation3 + $0x30] sm:$0xff]
        %v1247 = vld [vmem:[#allocation3 + $0x38] sm:$0xff]
        %v1248 = vrcp.pop %v1240
        %v1249 = vrcp.pop %v1241
        %v1250 = vrcp.pop %v1242
        %v1251 = vrcp.pop %v1243
        %v1252 = vrcp.pop %v1244
        %v1253 = vrcp.pop %v1245
        %v1254 = vrcp.pop %v1246
        %v1255 = vrcp.pop %v1247
        %v1256 = vld [vmem:[#allocation4] sm:$0xff]
        %v1257 = vld [vmem:[#allocation4 + $0x8] sm:$0xff]
        %v1258 = vld [vmem:[#allocation4 + $0x10] sm:$0xff]
        %v1259 = vld [vmem:[#allocation4 + $0x18] sm:$0xff]
        %v1260 = vld [vmem:[#allocation4 + $0x20] sm:$0xff]
        %v1261 = vld [vmem:[#allocation4 + $0x28] sm:$0xff]
        %v1262 = vld [vmem:[#allocation4 + $0x30] sm:$0xff]
        %v1263 = vld [vmem:[#allocation4 + $0x38] sm:$0xff]
        %1265 = vset.pattern.permute.xlu0 0
        %1266 = vperm.xlu0 %1265, %v1248
        %v1267 = vpop.permute.xlu0 %1266
        %1270 = vset.pattern.permute.xlu0 0
        %1271 = vperm.xlu0 %1270, %v1249
        %v1272 = vpop.permute.xlu0 %1271
        %1275 = vset.pattern.permute.xlu0 0
        %1276 = vperm.xlu0 %1275, %v1250
        %v1277 = vpop.permute.xlu0 %1276
        %1280 = vset.pattern.permute.xlu0 0
        %1281 = vperm.xlu0 %1280, %v1251
        %v1282 = vpop.permute.xlu0 %1281
        %1285 = vset.pattern.permute.xlu0 0
        %1286 = vperm.xlu0 %1285, %v1252
        %v1287 = vpop.permute.xlu0 %1286
        %1290 = vset.pattern.permute.xlu0 0
        %1291 = vperm.xlu0 %1290, %v1253
        %v1292 = vpop.permute.xlu0 %1291
        %1295 = vset.pattern.permute.xlu0 0
        %1296 = vperm.xlu0 %1295, %v1254
        %v1297 = vpop.permute.xlu0 %1296
        %1300 = vset.pattern.permute.xlu0 0
        %1301 = vperm.xlu0 %1300, %v1255
        %v1302 = vpop.permute.xlu0 %1301
        %v1304 = vmul.f32 %v1256, %v1267
        %v1305 = vmul.f32 %v1257, %v1272
        %v1306 = vmul.f32 %v1258, %v1277
        %v1307 = vmul.f32 %v1259, %v1282
        %v1308 = vmul.f32 %v1260, %v1287
        %v1309 = vmul.f32 %v1261, %v1292
        %v1310 = vmul.f32 %v1262, %v1297
        %v1311 = vmul.f32 %v1263, %v1302
        %1312 = vst.msk [vmem:[%s385] sm:$0xff] %vm574, %v1304
        %1313 = vst.msk [vmem:[%s385 + $0x8] sm:$0xff] %vm574, %v1305
        %1314 = vst.msk [vmem:[%s385 + $0x10] sm:$0xff] %vm574, %v1306
        %1315 = vst.msk [vmem:[%s385 + $0x18] sm:$0xff] %vm574, %v1307
        %1316 = vst.msk [vmem:[%s385 + $0x20] sm:$0xff] %vm574, %v1308
        %1317 = vst.msk [vmem:[%s385 + $0x28] sm:$0xff] %vm574, %v1309
        %1318 = vst.msk [vmem:[%s385 + $0x30] sm:$0xff] %vm574, %v1310
        %1319 = vst.msk [vmem:[%s385 + $0x38] sm:$0xff] %vm574, %v1311
        %v1320 = vmul.f32 %v1001, %v1267
        %v1321 = vmul.f32 %v1003, %v1272
        %v1322 = vmul.f32 %v1005, %v1277
        %v1323 = vmul.f32 %v1007, %v1282
        %v1324 = vmul.f32 %v1009, %v1287
        %v1325 = vmul.f32 %v1011, %v1292
        %v1326 = vmul.f32 %v1013, %v1297
        %v1327 = vmul.f32 %v1015, %v1302
        %1328 = vst [vmem:[%s398] sm:$0xff] %v1320
        %1329 = vst [vmem:[%s398 + $0x8] sm:$0xff] %v1321
        %1330 = vst [vmem:[%s398 + $0x10] sm:$0xff] %v1322
        %1331 = vst [vmem:[%s398 + $0x18] sm:$0xff] %v1323
        %1332 = vst [vmem:[%s398 + $0x20] sm:$0xff] %v1324
        %1333 = vst [vmem:[%s398 + $0x28] sm:$0xff] %v1325
        %1334 = vst [vmem:[%s398 + $0x30] sm:$0xff] %v1326
        %1335 = vst [vmem:[%s398 + $0x38] sm:$0xff] %v1327
      $region44: #{transformer_forward.24} parent=35 // pred_fallthru
        _
      %s1336 = smul.u32 2, %s23
      %p1337 = scmp.lt.s32.totalorder %s22, 1
      %s1338 = scalar_select %p1337, %s22, 1
      %p1339 = scmp.lt.s32.totalorder %s1336, 1
      %s1340 = scalar_select %p1339, %s1336, 1
      %s1341 = smul.addr %s1338, 8
      %s1342 = sadd.s32 %s1340, %s1341
      %s1343 = smul.addr %s1342, 8
      %s1344 = scalar_lea.vmem %s4, %s1343
      %s1345 = smul.u32 2, %s23
      %p1346 = scmp.lt.s32.totalorder %s22, 1
      %s1347 = scalar_select %p1346, %s22, 1
      %p1348 = scmp.lt.s32.totalorder %s1345, 1
      %s1349 = scalar_select %p1348, %s1345, 1
      %p1350 = scmp.lt.s32.totalorder %s24, 0
      %s1351 = scalar_select %p1350, %s24, 0
      %s1352 = sadd.s32 %s1351, %s1349
      %s1353 = smul.addr %s1347, 8
      %s1354 = sadd.s32 %s1352, %s1353
      %s1355 = smul.addr %s1354, 8
      %s1356 = scalar_lea.vmem %s5, %s1355
      // Predicated region
      $region45: #{transformer_forward.24} parent=35 // pred_check
        %p1357 = pneg %p168
      $region46: #{transformer_forward.24} parent=35 // pred_check_branch
        %1359 = sbr.rel (%p1357) target = $region48
      $region47: #{transformer_forward.24} parent=35 // pred_region
        %s1360 = smul.u32 2, %s23
      $region48: #{transformer_forward.24} parent=35 // pred_fallthru
        _
      // Predicated region
      $region49: #{transformer_forward.24} parent=35 // pred_check
        %p1361 = pneg %p198
      $region50: #{transformer_forward.24} parent=35 // pred_check_branch
        %1363 = sbr.rel (%p1361) target = $region52
      $region51: #{transformer_forward.24} parent=35 // pred_region
        %s1364 = smul.u32 2, %s23
      $region52: #{transformer_forward.24} parent=35 // pred_fallthru
        _
    $region36: #{transformer_forward.24} parent=5 // pred_fallthru
      _
    %p1365 = scmp.le.s32.totalorder 2, %s12
    // Predicated region
    $region53: #{transformer_forward.24} parent=5 // pred_check
      %p1366 = pneg %p1365
    $region54: #{transformer_forward.24} parent=5 // pred_check_branch
      %1368 = sbr.rel (%p1366) target = $region56
    $region55: #{transformer_forward.24} parent=5 // pred_region
      %s1369 = ssub.s32 %s12, 2
      // Predicated region
      $region57: #{transformer_forward.24} parent=55 // pred_check
        %p1370 = pneg %p174
      $region58: #{transformer_forward.24} parent=55 // pred_check_branch
        %1372 = sbr.rel (%p1370) target = $region60
      $region59: #{transformer_forward.24} parent=55 // pred_region
        %s1373 = smul.u32 2, %s26
        %p1374 = scmp.lt.s32.totalorder %s25, 1
        %s1375 = scalar_select %p1374, %s25, 1
        %p1376 = scmp.lt.s32.totalorder %s1373, 1
        %s1377 = scalar_select %p1376, %s1373, 1
        %s1378 = smul.addr %s1375, 8
        %s1379 = sadd.s32 %s1377, %s1378
        %s1380 = smul.addr %s1379, 8
        %s1381 = scalar_lea.vmem %s4, %s1380
      $region60: #{transformer_forward.24} parent=55 // pred_fallthru
        _
      // Predicated region
      $region61: #{transformer_forward.24} parent=55 // pred_check
        %p1382 = pneg %p204
      $region62: #{transformer_forward.24} parent=55 // pred_check_branch
        %1384 = sbr.rel (%p1382) target = $region64
      $region63: #{transformer_forward.24} parent=55 // pred_region
        %s1385 = smul.u32 2, %s26
        %p1386 = scmp.lt.s32.totalorder %s25, 1
        %s1387 = scalar_select %p1386, %s25, 1
        %p1388 = scmp.lt.s32.totalorder %s1385, 1
        %s1389 = scalar_select %p1388, %s1385, 1
        %p1390 = scmp.lt.s32.totalorder %s27, 0
        %s1391 = scalar_select %p1390, %s27, 0
        %s1392 = sadd.s32 %s1391, %s1389
        %s1393 = smul.addr %s1387, 8
        %s1394 = sadd.s32 %s1392, %s1393
        %s1395 = smul.addr %s1394, 8
        %s1396 = scalar_lea.vmem %s5, %s1395
      $region64: #{transformer_forward.24} parent=55 // pred_fallthru
        _
    $region56: #{transformer_forward.24} parent=5 // pred_fallthru
      _
  $region6: #{transformer_forward.24} parent=0 // loop_footer
    %s16 = sadd.s32 1, %s12
  $region7: #{transformer_forward.24} parent=0 // loop_footer_branch
    %11 = sbr.rel target = $region3
  $region8: #{transformer_forward.24} parent=0 // loop_exit
    _

</llo_original>
